<compile_context>
chip_gen: v6e
topology: v6e:2x2x1
jax: 0.10.0
libtpu: 0.0.40
codegen_flags: <defaults>
</compile_context>

<pallas_src>
import functools

import jax
import jax.numpy as jnp
from jax.experimental import pallas as pl
from jax.experimental.pallas import tpu as pltpu

ROW_TILE = 256  # row-strip size for the streamed graph propagations


def _round_up(x, m):
    return ((x + m - 1) // m) * m


def _full_spec(shape):
    shape = tuple(int(s) for s in shape)
    nd = len(shape)
    return pl.BlockSpec(shape, lambda i, _nd=nd: (0,) * _nd)


_SMEM_SPEC = pl.BlockSpec(memory_space=pltpu.MemorySpace.SMEM)


def _vmem_limit_bytes(estimate):
    """Scoped-VMEM request: keep the 32 MiB default when it fits; otherwise
    derive the ceiling from the chip (128 MiB v5e/v6e, 64 MiB v7x) minus
    compiler headroom instead of a hard 64 MiB clamp."""
    needed = int(estimate) + (2 << 20)
    if needed <= (30 << 20):
        return None
    try:
        cap = int(pltpu.get_tpu_info().vmem_capacity_bytes)
    except Exception:  # conservative fallback
        cap = 64 << 20
    return int(min(needed, cap - (8 << 20)))


# ---------------------------------------------------------------------------
# Pallas kernels
# ---------------------------------------------------------------------------

def _graph_prop_kernel(g_ref, e_ref, acc_ref, next_ref, acc_out_ref):
    """One propagation layer on a (TM, N) row strip: next = G_strip @ E,
    acc_out = acc_in + next.  The embedding block is grid-invariant (constant
    index_map -> DMA'd once); the graph strips stream through the pipeline."""
    nxt = jnp.dot(g_ref[...], e_ref[...], preferred_element_type=jnp.float32)
    next_ref[...] = nxt.astype(next_ref.dtype)
    acc_out_ref[...] = acc_ref[...] + nxt


def _graph_prop_last_kernel(g_ref, e_ref, acc_ref, out_ref, *, scale):
    """Final layer: residual sum is scaled and stored directly; the grid only
    covers the row strips that survive the output truncation."""
    nxt = jnp.dot(g_ref[...], e_ref[...], preferred_element_type=jnp.float32)
    out_ref[...] = (acc_ref[...] + nxt) * scale


def _hyper_gate_kernel(uh_ref, ih_ref, fh_ref, ue_ref, ie_ref, ge_ref, lg_ref,
                       w_ref, b_ref, gw_ref, gb_ref, ui_ref, fused_ref,
                       *, layers, u_pad):
    """All HyperGraphBasicConvolution layers + the 3-gate adaptive fusion in
    one kernel.  Hyper graphs are DMA'd once and reused every layer; the node
    residual sum accumulates directly in the output ref (f32)."""
    uh = uh_ref[...]                       # (Gp, Up)      bf16
    ih = ih_ref[...]                       # (Gp, Ip)      bf16
    fh = fh_ref[...]                       # (Up+Ip, Gp)   bf16
    ue = ue_ref[...]                       # (Up, Dp)      bf16
    ie = ie_ref[...]                       # (Ip, Dp)      bf16
    ge = ge_ref[...]                       # (Gp, Dp)      f32 (overlap output)
    gw = gw_ref[...]                       # (3, Dp)       f32 gate weights

    ui_ref[:u_pad, :] = ue.astype(jnp.float32)
    ui_ref[u_pad:, :] = ie.astype(jnp.float32)
    he = ge                                # hyper-edge residual sum (f32)

    for l in range(layers):
        um = jnp.dot(uh, ue, preferred_element_type=jnp.float32)    # (Gp, Dp)
        im = jnp.dot(ih, ie, preferred_element_type=jnp.float32)    # (Gp, Dp)
        ige = im * ge
        # aggregation(cat([um, im, ige])) == three K=Dp dots against static
        # slices of the packed weight -- no (G, 3*Dp) lane-concat copy.
        msg = (jnp.dot(um.astype(jnp.bfloat16), w_ref[l, 0],
                       preferred_element_type=jnp.float32)
               + jnp.dot(im.astype(jnp.bfloat16), w_ref[l, 1],
                         preferred_element_type=jnp.float32)
               + jnp.dot(ige.astype(jnp.bfloat16), w_ref[l, 2],
                         preferred_element_type=jnp.float32)
               + b_ref[l])
        norm = jnp.dot(fh, msg.astype(jnp.bfloat16),
                       preferred_element_type=jnp.float32)            # (U+I, Dp)
        he = he + msg
        ui_ref[...] += norm
        # u_pad is a multiple of 16 -> splits are (16,128)-tile aligned.
        ue = norm[:u_pad, :].astype(jnp.bfloat16)
        ie = norm[u_pad:, :].astype(jnp.bfloat16)

    # Adaptive fusion tail: VPU multiply + lane reduce (no MXU); operands are
    # already resident so no extra pallas_call / HBM round trip.
    lg = lg_ref[...]

    def gate(x, k):
        s = jnp.sum(x * gw[k:k + 1, :], axis=-1, keepdims=True) + gb_ref[k]
        return jax.nn.sigmoid(s)

    fused_ref[...] = gate(ge, 0) * ge + gate(he, 1) * he + gate(lg, 2) * lg


def _predict_kernel(gt_ref, it_ref, w1_ref, b1_ref, w2_ref, b2_ref, out_ref):
    """sigmoid(PredictLayer(g*i)) in transposed layout (batch on the lane axis).
    Dropout ratio is 0.0 -> identity; the output store is a lane-dense row."""
    x = gt_ref[...] * it_ref[...]                                     # (Dp, Bp)
    h = jnp.dot(w1_ref[...], x, preferred_element_type=jnp.float32) + b1_ref[...]
    h = jnp.maximum(h, 0.0)                                           # (8, Bp)
    o = jnp.sum(w2_ref[...] * h, axis=0, keepdims=True) + b2_ref[0]   # (1, Bp)
    out_ref[...] = jax.nn.sigmoid(o)


# ---------------------------------------------------------------------------
# Row-tiled graph convolution (OverlapGraphConvolution / LightGCN)
# ---------------------------------------------------------------------------

def _graph_conv_sum(graph, emb0, *, layers, scale, out_rows, row_tile=ROW_TILE):
    """scale * sum_{l=0..layers} G^l @ E0, rows [:out_rows].

    graph: (Np, Np) bf16, rows/cols zero-padded to a multiple of the row tile.
    emb0:  (Np, Dp) bf16.
    """
    n_pad = graph.shape[0]
    dp = emb0.shape[1]
    tm = min(row_tile, n_pad)
    assert n_pad % tm == 0
    n_tiles = n_pad // tm
    out_tiles = min(n_tiles, max(1, pl.cdiv(out_rows, tm)))

    g_spec = pl.BlockSpec((tm, n_pad), lambda i: (i, 0))       # streamed strips
    e_spec = pl.BlockSpec((n_pad, dp), lambda i: (0, 0))       # resident block
    row_spec = pl.BlockSpec((tm, dp), lambda i: (i, 0))

    vmem_est = (2 * tm * n_pad * 2            # double-buffered graph strips
                + n_pad * dp * 2              # resident embedding block
                + 2 * tm * dp * (4 + 2 + 4))  # acc in / next / acc out
    cparams = pltpu.CompilerParams(
        dimension_semantics=("parallel",),
        vmem_limit_bytes=_vmem_limit_bytes(vmem_est))

    acc = emb0.astype(jnp.float32)
    cur = emb0
    for _ in range(layers - 1):
        cur, acc = pl.pallas_call(
            _graph_prop_kernel,
            grid=(n_tiles,),
            in_specs=[g_spec, e_spec, row_spec],
            out_specs=(row_spec, row_spec),
            out_shape=(jax.ShapeDtypeStruct((n_pad, dp), jnp.bfloat16),
                       jax.ShapeDtypeStruct((n_pad, dp), jnp.float32)),
            compiler_params=cparams,
        )(graph, cur, acc)

    out = pl.pallas_call(
        functools.partial(_graph_prop_last_kernel, scale=scale),
        grid=(out_tiles,),
        in_specs=[g_spec, e_spec, row_spec],
        out_specs=row_spec,
        out_shape=jax.ShapeDtypeStruct((out_tiles * tm, dp), jnp.float32),
        compiler_params=cparams,
    )(graph, cur, acc)
    return out[:out_rows]


# ---------------------------------------------------------------------------
# One-time packing: lane-pad to 128, sublane-align row counts, cast to bf16
# ---------------------------------------------------------------------------

def prepare_model(params, graphs, *, num_users, num_items, num_groups,
                  num_lgcn_item, emb_dim, layers, row_tile=ROW_TILE):
    dp = _round_up(emb_dim, 128)
    u_pad = _round_up(num_users, 16)
    i_pad = _round_up(num_items, 16)
    g_pad = _round_up(num_groups, 16)

    def pad2(x, rows, cols):
        return jnp.pad(x, ((0, rows - x.shape[0]), (0, cols - x.shape[1])))

    user_emb = pad2(params["user_emb"], u_pad, dp).astype(jnp.bfloat16)
    item_emb = pad2(params["item_emb"], i_pad, dp).astype(jnp.bfloat16)

    # hyper graphs: zero rows/cols for the padding, so padded nodes/groups
    # contribute nothing to real rows.
    user_hyper = pad2(graphs["user_hyper"], g_pad, u_pad).astype(jnp.bfloat16)
    item_hyper = pad2(graphs["item_hyper"], g_pad, i_pad).astype(jnp.bfloat16)
    full_hyper = jnp.zeros((u_pad + i_pad, g_pad), jnp.float32)
    full_hyper = full_hyper.at[:num_users, :num_groups].set(
        graphs["full_hyper"][:num_users])
    full_hyper = full_hyper.at[u_pad:u_pad + num_items, :num_groups].set(
        graphs["full_hyper"][num_users:])
    full_hyper = full_hyper.astype(jnp.bfloat16)

    # overlap graph (group-group), padded to a multiple of its row tile.
    og_tile = min(row_tile, _round_up(num_groups, 16))
    og_pad = _round_up(num_groups, og_tile)
    overlap = pad2(graphs["overlap"], og_pad, og_pad).astype(jnp.bfloat16)
    overlap_emb0 = pad2(params["group_emb"], og_pad, dp).astype(jnp.bfloat16)

    # LightGCN graph: nodes = groups ++ first num_lgcn_item items.
    n_lgcn = num_groups + num_lgcn_item
    lg_tile = min(row_tile, _round_up(n_lgcn, 16))
    lg_pad_n = _round_up(n_lgcn, lg_tile)
    lightgcn = pad2(graphs["lightgcn"], lg_pad_n, lg_pad_n).astype(jnp.bfloat16)
    lightgcn_emb0 = pad2(
        jnp.concatenate([params["group_emb"],
                         params["item_emb"][:num_lgcn_item]], axis=0),
        lg_pad_n, dp).astype(jnp.bfloat16)

    # aggregation Linear(3D -> D) per layer packed as (L, 3, Dp, Dp) so the
    # kernel uses three static-slice dots instead of a lane concat.
    agg_w = jnp.zeros((layers, 3, dp, dp), jnp.float32)
    agg_b = jnp.zeros((layers, 1, dp), jnp.float32)
    for l in range(layers):
        wl = params["agg_w"][l]                              # (3D, D)
        for k in range(3):
            agg_w = agg_w.at[l, k, :emb_dim, :emb_dim].set(
                wl[k * emb_dim:(k + 1) * emb_dim])
        agg_b = agg_b.at[l, :, :emb_dim].set(params["agg_b"][l])
    agg_w = agg_w.astype(jnp.bfloat16)

    gate_w = jnp.zeros((3, dp), jnp.float32)
    gate_w = gate_w.at[0, :emb_dim].set(params["gate_o_w"][:, 0])
    gate_w = gate_w.at[1, :emb_dim].set(params["gate_h_w"][:, 0])
    gate_w = gate_w.at[2, :emb_dim].set(params["gate_l_w"][:, 0])
    gate_b = jnp.array([params["gate_o_b"][0, 0], params["gate_h_b"][0, 0],
                        params["gate_l_b"][0, 0]], jnp.float32)

    pred_w1t = jnp.zeros((8, dp), jnp.float32).at[:, :emb_dim].set(
        params["pred_w1"].T)

    prep = dict(user_emb=user_emb, item_emb=item_emb,
                user_hyper=user_hyper, item_hyper=item_hyper,
                full_hyper=full_hyper,
                overlap=overlap, overlap_emb0=overlap_emb0,
                lightgcn=lightgcn, lightgcn_emb0=lightgcn_emb0,
                agg_w=agg_w, agg_b=agg_b, gate_w=gate_w, gate_b=gate_b,
                pred_w1t=pred_w1t,
                pred_b1=params["pred_b1"].reshape(8, 1),
                pred_w2=params["pred_w2"].reshape(8, 1),
                pred_b2=params["pred_b2"].reshape((1,)))
    dims = dict(dp=dp, u_pad=u_pad, i_pad=i_pad, g_pad=g_pad)
    return prep, dims


# ---------------------------------------------------------------------------
# ConsRec forward (group recommendation branch, predictor='MLP')
# ---------------------------------------------------------------------------

def consrec_group_forward(prep, group_inputs, item_inputs, *,
                          num_users, num_items, num_groups, num_lgcn_item,
                          layers, dims, predictor="MLP"):
    dp = dims["dp"]
    u_pad, i_pad, g_pad = dims["u_pad"], dims["i_pad"], dims["g_pad"]

    # 1) group-level view: overlap graph convolution (residual layer sum)
    ge_pad = _graph_conv_sum(prep["overlap"], prep["overlap_emb0"],
                             layers=layers, scale=1.0, out_rows=g_pad)

    # 2) item-level view: LightGCN on the group-item bipartite graph
    lg_pad = _graph_conv_sum(prep["lightgcn"], prep["lightgcn_emb0"],
                             layers=layers, scale=1.0 / (layers + 1),
                             out_rows=g_pad)

    # 3) member-level view (all hyper-conv layers) + adaptive gate fusion,
    #    fused in one kernel so the residual sums never leave VMEM.
    n_nodes = u_pad + i_pad
    inputs = [prep["user_hyper"], prep["item_hyper"], prep["full_hyper"],
              prep["user_emb"], prep["item_emb"], ge_pad, lg_pad,
              prep["agg_w"], prep["agg_b"], prep["gate_w"], prep["gate_b"]]
    in_specs = [_full_spec(x.shape) for x in inputs[:-1]] + [_SMEM_SPEC]
    vmem_est = 2 * (sum(int(x.size) * x.dtype.itemsize for x in inputs[:-1])
                    + (n_nodes + g_pad) * dp * 4)
    ui_sum, fused = pl.pallas_call(
        functools.partial(_hyper_gate_kernel, layers=layers, u_pad=u_pad),
        grid=(1,),
        in_specs=in_specs,
        out_specs=(_full_spec((n_nodes, dp)), _full_spec((g_pad, dp))),
        out_shape=(jax.ShapeDtypeStruct((n_nodes, dp), jnp.float32),
                   jax.ShapeDtypeStruct((g_pad, dp), jnp.float32)),
        compiler_params=pltpu.CompilerParams(
            dimension_semantics=("arbitrary",),
            vmem_limit_bytes=_vmem_limit_bytes(vmem_est)),
    )(*inputs)
    # TODO(synk): for very large U+I the hyper conv needs its own row tiling
    # (two-stage node->edge / edge->node pipeline); kept fused-resident here.

    i_emb_all = ui_sum[u_pad:u_pad + num_items]
    group_ui_emb = fused[:num_groups]

    # 4) gather + prediction
    g_emb = group_ui_emb[group_inputs]       # (B, Dp) f32
    i_emb = i_emb_all[item_inputs]           # (B, Dp) f32
    if predictor != "MLP":
        return jnp.sum(g_emb * i_emb, axis=-1)

    # TODO(synk): fuse the gather/transpose/pad into the predict kernel via
    # PrefetchScalarGridSpec + pl.Element row gathers once batch is large.
    batch = g_emb.shape[0]
    bp = _round_up(batch, 128)
    gt = jnp.pad(g_emb.T, ((0, 0), (0, bp - batch)))
    it = jnp.pad(i_emb.T, ((0, 0), (0, bp - batch)))
    p_inputs = [gt, it, prep["pred_w1t"], prep["pred_b1"],
                prep["pred_w2"], prep["pred_b2"]]
    p_specs = [_full_spec(x.shape) for x in p_inputs[:-1]] + [_SMEM_SPEC]
    out = pl.pallas_call(
        _predict_kernel,
        grid=(1,),
        in_specs=p_specs,
        out_specs=_full_spec((1, bp)),
        out_shape=jax.ShapeDtypeStruct((1, bp), jnp.float32),
        compiler_params=pltpu.CompilerParams(
            dimension_semantics=("arbitrary",)),
    )(*p_inputs)
    return out[0, :batch][:, None]


# ---------------------------------------------------------------------------
# Pure-f32 JAX reference (mirrors the PyTorch module) for validation
# ---------------------------------------------------------------------------

def consrec_reference(params, graphs, group_inputs, item_inputs, *,
                      num_users, num_items, num_groups, num_lgcn_item, layers):
    # overlap graph convolution
    cur = params["group_emb"]
    group_emb = cur
    for _ in range(layers):
        cur = graphs["overlap"] @ cur
        group_emb = group_emb + cur
    # hypergraph convolution
    ue, ie = params["user_emb"], params["item_emb"]
    ui_sum = jnp.concatenate([ue, ie], axis=0)
    he_sum = group_emb
    for l in range(layers):
        um = graphs["user_hyper"] @ ue
        im = graphs["item_hyper"] @ ie
        ige = im * group_emb
        msg = jnp.concatenate([um, im, ige], axis=1) @ params["agg_w"][l] \
            + params["agg_b"][l]
        norm = graphs["full_hyper"] @ msg
        ui_sum = ui_sum + norm
        he_sum = he_sum + msg
        ue, ie = norm[:num_users], norm[num_users:]
    i_emb_all = ui_sum[num_users:]
    # LightGCN
    all_emb = jnp.concatenate(
        [params["group_emb"], params["item_emb"][:num_lgcn_item]], axis=0)
    embs = [all_emb]
    for _ in range(layers):
        all_emb = graphs["lightgcn"] @ all_emb
        embs.append(all_emb)
    lg = jnp.mean(jnp.stack(embs, axis=0), axis=0)[:num_groups]
    # gates + fusion
    sig = jax.nn.sigmoid
    oc = sig(group_emb @ params["gate_o_w"] + params["gate_o_b"])
    hc = sig(he_sum @ params["gate_h_w"] + params["gate_h_b"])
    lc = sig(lg @ params["gate_l_w"] + params["gate_l_b"])
    group_ui = oc * group_emb + hc * he_sum + lc * lg
    # prediction
    g_emb = group_ui[group_inputs]
    i_emb = i_emb_all[item_inputs]
    x = g_emb * i_emb
    h = jnp.maximum(x @ params["pred_w1"] + params["pred_b1"], 0.0)
    return jax.nn.sigmoid(h @ params["pred_w2"] + params["pred_b2"])


# ---------------------------------------------------------------------------
# Deterministic parameter / graph construction (original f32 layout)
# ---------------------------------------------------------------------------

def _xavier(key, shape):
    fan_in, fan_out = shape[1], shape[0]
    bound = (6.0 / (fan_in + fan_out)) ** 0.5
    return jax.random.uniform(key, shape, jnp.float32, -bound, bound)


def _row_norm_graph(key, shape):
    g = jax.random.uniform(key, shape, jnp.float32, 0.0, 1.0)
    return g / jnp.sum(g, axis=1, keepdims=True)


def make_params_and_graphs(key, num_users, num_items, num_groups,
                           num_lgcn_item, emb_dim, layers):
    ks = jax.random.split(key, 32)
    params = {
        "user_emb": _xavier(ks[0], (num_users, emb_dim)),
        "item_emb": _xavier(ks[1], (num_items, emb_dim)),
        "group_emb": _xavier(ks[2], (num_groups, emb_dim)),
        "agg_w": [_xavier(ks[3 + l], (3 * emb_dim, emb_dim)) for l in range(layers)],
        "agg_b": [jnp.zeros((1, emb_dim), jnp.float32) for _ in range(layers)],
        "gate_o_w": _xavier(ks[10], (emb_dim, 1)),
        "gate_o_b": jnp.zeros((1, 1), jnp.float32),
        "gate_h_w": _xavier(ks[11], (emb_dim, 1)),
        "gate_h_b": jnp.zeros((1, 1), jnp.float32),
        "gate_l_w": _xavier(ks[12], (emb_dim, 1)),
        "gate_l_b": jnp.zeros((1, 1), jnp.float32),
        "pred_w1": _xavier(ks[13], (emb_dim, 8)),
        "pred_b1": jnp.zeros((1, 8), jnp.float32),
        "pred_w2": _xavier(ks[14], (8, 1)),
        "pred_b2": jnp.zeros((1, 1), jnp.float32),
    }
    graphs = {
        "overlap": _row_norm_graph(ks[20], (num_groups, num_groups)),
        "user_hyper": _row_norm_graph(ks[21], (num_groups, num_users)),
        "item_hyper": _row_norm_graph(ks[22], (num_groups, num_items)),
        "full_hyper": _row_norm_graph(ks[23], (num_users + num_items, num_groups)),
        "lightgcn": _row_norm_graph(
            ks[24], (num_groups + num_lgcn_item, num_groups + num_lgcn_item)),
    }
    return params, graphs


# ---------------------------------------------------------------------------
# main
# ---------------------------------------------------------------------------

if __name__ == "__main__":
    NUM_USERS, NUM_ITEMS, NUM_GROUPS = 16, 24, 8
    NUM_LGCN_ITEM = 16
    EMB_DIM = 32
    LAYERS = 2
    BATCH = 8

    key = jax.random.PRNGKey(0)
    k_params, k_g, k_i = jax.random.split(key, 3)

    params, graphs = make_params_and_graphs(
        k_params, NUM_USERS, NUM_ITEMS, NUM_GROUPS, NUM_LGCN_ITEM, EMB_DIM, LAYERS)
    prep, dims = prepare_model(
        params, graphs, num_users=NUM_USERS, num_items=NUM_ITEMS,
        num_groups=NUM_GROUPS, num_lgcn_item=NUM_LGCN_ITEM,
        emb_dim=EMB_DIM, layers=LAYERS)

    group_inputs = jax.random.randint(k_g, (BATCH,), 0, NUM_GROUPS, jnp.int32)
    item_inputs = jax.random.randint(k_i, (BATCH,), 0, NUM_ITEMS, jnp.int32)

    fwd = jax.jit(functools.partial(
        consrec_group_forward,
        num_users=NUM_USERS, num_items=NUM_ITEMS, num_groups=NUM_GROUPS,
        num_lgcn_item=NUM_LGCN_ITEM, layers=LAYERS, dims=dims,
        predictor="MLP"))

    scores = fwd(prep, group_inputs, item_inputs)
    jax.block_until_ready(scores)

    ref = consrec_reference(
        params, graphs, group_inputs, item_inputs,
        num_users=NUM_USERS, num_items=NUM_ITEMS, num_groups=NUM_GROUPS,
        num_lgcn_item=NUM_LGCN_ITEM, layers=LAYERS)

    assert scores.shape == (BATCH, 1)
    assert bool(jnp.all(jnp.isfinite(scores)))
    max_err = float(jnp.max(jnp.abs(scores - ref)))
    assert max_err < 5e-2, f"max abs error vs f32 reference: {max_err}"
    print("KERNEL_OK")
</pallas_src>

<mosaic_0001>
module attributes {stable_mosaic.version = 11 : i64} {
  func.func @_graph_prop_kernel(%arg0: i32, %arg1: memref<32x32xbf16, #tpu.memory_space<vmem>>, %arg2: memref<32x128xbf16, #tpu.memory_space<vmem>>, %arg3: memref<32x128xf32, #tpu.memory_space<vmem>>, %arg4: memref<32x128xbf16, #tpu.memory_space<vmem>>, %arg5: memref<32x128xf32, #tpu.memory_space<vmem>>) attributes {dimension_semantics = [#tpu.dimension_semantics<parallel>], iteration_bounds = array<i64: 1>, scalar_prefetch = 0 : i64, scratch_operands = 0 : i64, tpu.core_type = #tpu.core_type<tc>, window_params = [{transform_indices = @transform_0, window_bounds = array<i64: 32, 32>}, {pipeline_mode = #tpu.pipeline_mode<synchronous>, transform_indices = @transform_1, window_bounds = array<i64: 32, 128>}, {transform_indices = @transform_2, window_bounds = array<i64: 32, 128>}, {transform_indices = @transform_3, window_bounds = array<i64: 32, 128>}, {transform_indices = @transform_4, window_bounds = array<i64: 32, 128>}]} {
    %c0 = arith.constant 0 : index
    %c0_0 = arith.constant 0 : index
    %0 = vector.load %arg1[%c0, %c0_0] : memref<32x32xbf16, #tpu.memory_space<vmem>>, vector<32x32xbf16>
    %c0_1 = arith.constant 0 : index
    %c0_2 = arith.constant 0 : index
    %1 = vector.load %arg2[%c0_1, %c0_2] : memref<32x128xbf16, #tpu.memory_space<vmem>>, vector<32x128xbf16>
    %cst = arith.constant dense<0.000000e+00> : vector<32x128xf32>
    %2 = tpu.matmul %0, %1, %cst {dimension_numbers = #tpu.dot_dimension_numbers<[1], [0], [0], [1], [0, 0, 1, 1], [], []>} : vector<32x32xbf16>, vector<32x128xbf16>, vector<32x128xf32> -> vector<32x128xf32>
    %3 = arith.truncf %2 : vector<32x128xf32> to vector<32x128xbf16>
    %c0_3 = arith.constant 0 : index
    %c0_4 = arith.constant 0 : index
    %4 = vector.load %arg4[%c0_3, %c0_4] : memref<32x128xbf16, #tpu.memory_space<vmem>>, vector<32x128xbf16>
    tpu.vector_store %arg4[%c0_3, %c0_4], %3 {strides = array<i32>} : memref<32x128xbf16, #tpu.memory_space<vmem>>, vector<32x128xbf16>,
    %c0_5 = arith.constant 0 : index
    %c0_6 = arith.constant 0 : index
    %5 = vector.load %arg3[%c0_5, %c0_6] : memref<32x128xf32, #tpu.memory_space<vmem>>, vector<32x128xf32>
    %6 = arith.addf %5, %2 : vector<32x128xf32>
    %c0_7 = arith.constant 0 : index
    %c0_8 = arith.constant 0 : index
    %7 = vector.load %arg5[%c0_7, %c0_8] : memref<32x128xf32, #tpu.memory_space<vmem>>, vector<32x128xf32>
    tpu.vector_store %arg5[%c0_7, %c0_8], %6 {strides = array<i32>} : memref<32x128xf32, #tpu.memory_space<vmem>>, vector<32x128xf32>,
    return
  }
  func.func @transform_0(%arg0: i32) -> (i32, i32) {
    %c0_i32 = arith.constant 0 : i32
    %c0_i32_0 = arith.constant 0 : i32
    return %arg0, %c0_i32 : i32, i32
  }
  func.func @transform_1(%arg0: i32) -> (i32, i32) {
    %c0_i32 = arith.constant 0 : i32
    %c0_i32_0 = arith.constant 0 : i32
    %c0_i32_1 = arith.constant 0 : i32
    return %c0_i32, %c0_i32_0 : i32, i32
  }
  func.func @transform_2(%arg0: i32) -> (i32, i32) {
    %c0_i32 = arith.constant 0 : i32
    %c0_i32_0 = arith.constant 0 : i32
    return %arg0, %c0_i32 : i32, i32
  }
  func.func @transform_3(%arg0: i32) -> (i32, i32) {
    %c0_i32 = arith.constant 0 : i32
    %c0_i32_0 = arith.constant 0 : i32
    return %arg0, %c0_i32 : i32, i32
  }
  func.func @transform_4(%arg0: i32) -> (i32, i32) {
    %c0_i32 = arith.constant 0 : i32
    %c0_i32_0 = arith.constant 0 : i32
    return %arg0, %c0_i32 : i32, i32
  }
}

module attributes {stable_mosaic.version = 11 : i64} {
  func.func @_graph_prop_last_kernel(%arg0: i32, %arg1: memref<32x32xbf16, #tpu.memory_space<vmem>>, %arg2: memref<32x128xbf16, #tpu.memory_space<vmem>>, %arg3: memref<32x128xf32, #tpu.memory_space<vmem>>, %arg4: memref<32x128xf32, #tpu.memory_space<vmem>>) attributes {dimension_semantics = [#tpu.dimension_semantics<parallel>], iteration_bounds = array<i64: 1>, scalar_prefetch = 0 : i64, scratch_operands = 0 : i64, tpu.core_type = #tpu.core_type<tc>, window_params = [{transform_indices = @transform_0, window_bounds = array<i64: 32, 32>}, {pipeline_mode = #tpu.pipeline_mode<synchronous>, transform_indices = @transform_1, window_bounds = array<i64: 32, 128>}, {transform_indices = @transform_2, window_bounds = array<i64: 32, 128>}, {transform_indices = @transform_3, window_bounds = array<i64: 32, 128>}]} {
    %c0 = arith.constant 0 : index
    %c0_0 = arith.constant 0 : index
    %0 = vector.load %arg1[%c0, %c0_0] : memref<32x32xbf16, #tpu.memory_space<vmem>>, vector<32x32xbf16>
    %c0_1 = arith.constant 0 : index
    %c0_2 = arith.constant 0 : index
    %1 = vector.load %arg2[%c0_1, %c0_2] : memref<32x128xbf16, #tpu.memory_space<vmem>>, vector<32x128xbf16>
    %cst = arith.constant dense<0.000000e+00> : vector<32x128xf32>
    %2 = tpu.matmul %0, %1, %cst {dimension_numbers = #tpu.dot_dimension_numbers<[1], [0], [0], [1], [0, 0, 1, 1], [], []>} : vector<32x32xbf16>, vector<32x128xbf16>, vector<32x128xf32> -> vector<32x128xf32>
    %c0_3 = arith.constant 0 : index
    %c0_4 = arith.constant 0 : index
    %3 = vector.load %arg3[%c0_3, %c0_4] : memref<32x128xf32, #tpu.memory_space<vmem>>, vector<32x128xf32>
    %4 = arith.addf %3, %2 : vector<32x128xf32>
    %cst_5 = arith.constant 0.333333343 : f32
    %5 = vector.broadcast %cst_5 : f32 to vector<32x128xf32>
    %6 = arith.mulf %4, %5 : vector<32x128xf32>
    %c0_6 = arith.constant 0 : index
    %c0_7 = arith.constant 0 : index
    %7 = vector.load %arg4[%c0_6, %c0_7] : memref<32x128xf32, #tpu.memory_space<vmem>>, vector<32x128xf32>
    tpu.vector_store %arg4[%c0_6, %c0_7], %6 {strides = array<i32>} : memref<32x128xf32, #tpu.memory_space<vmem>>, vector<32x128xf32>,
    return
  }
  func.func @transform_0(%arg0: i32) -> (i32, i32) {
    %c0_i32 = arith.constant 0 : i32
    %c0_i32_0 = arith.constant 0 : i32
    return %arg0, %c0_i32 : i32, i32
  }
  func.func @transform_1(%arg0: i32) -> (i32, i32) {
    %c0_i32 = arith.constant 0 : i32
    %c0_i32_0 = arith.constant 0 : i32
    %c0_i32_1 = arith.constant 0 : i32
    return %c0_i32, %c0_i32_0 : i32, i32
  }
  func.func @transform_2(%arg0: i32) -> (i32, i32) {
    %c0_i32 = arith.constant 0 : i32
    %c0_i32_0 = arith.constant 0 : i32
    return %arg0, %c0_i32 : i32, i32
  }
  func.func @transform_3(%arg0: i32) -> (i32, i32) {
    %c0_i32 = arith.constant 0 : i32
    %c0_i32_0 = arith.constant 0 : i32
    return %arg0, %c0_i32 : i32, i32
  }
}

module attributes {stable_mosaic.version = 11 : i64} {
  func.func @_graph_prop_kernel(%arg0: i32, %arg1: memref<16x16xbf16, #tpu.memory_space<vmem>>, %arg2: memref<16x128xbf16, #tpu.memory_space<vmem>>, %arg3: memref<16x128xf32, #tpu.memory_space<vmem>>, %arg4: memref<16x128xbf16, #tpu.memory_space<vmem>>, %arg5: memref<16x128xf32, #tpu.memory_space<vmem>>) attributes {dimension_semantics = [#tpu.dimension_semantics<parallel>], iteration_bounds = array<i64: 1>, scalar_prefetch = 0 : i64, scratch_operands = 0 : i64, tpu.core_type = #tpu.core_type<tc>, window_params = [{transform_indices = @transform_0, window_bounds = array<i64: 16, 16>}, {pipeline_mode = #tpu.pipeline_mode<synchronous>, transform_indices = @transform_1, window_bounds = array<i64: 16, 128>}, {transform_indices = @transform_2, window_bounds = array<i64: 16, 128>}, {transform_indices = @transform_3, window_bounds = array<i64: 16, 128>}, {transform_indices = @transform_4, window_bounds = array<i64: 16, 128>}]} {
    %c0 = arith.constant 0 : index
    %c0_0 = arith.constant 0 : index
    %0 = vector.load %arg1[%c0, %c0_0] : memref<16x16xbf16, #tpu.memory_space<vmem>>, vector<16x16xbf16>
    %c0_1 = arith.constant 0 : index
    %c0_2 = arith.constant 0 : index
    %1 = vector.load %arg2[%c0_1, %c0_2] : memref<16x128xbf16, #tpu.memory_space<vmem>>, vector<16x128xbf16>
    %cst = arith.constant dense<0.000000e+00> : vector<16x128xf32>
    %2 = tpu.matmul %0, %1, %cst {dimension_numbers = #tpu.dot_dimension_numbers<[1], [0], [0], [1], [0, 0, 1, 1], [], []>} : vector<16x16xbf16>, vector<16x128xbf16>, vector<16x128xf32> -> vector<16x128xf32>
    %3 = arith.truncf %2 : vector<16x128xf32> to vector<16x128xbf16>
    %c0_3 = arith.constant 0 : index
    %c0_4 = arith.constant 0 : index
    %4 = vector.load %arg4[%c0_3, %c0_4] : memref<16x128xbf16, #tpu.memory_space<vmem>>, vector<16x128xbf16>
    tpu.vector_store %arg4[%c0_3, %c0_4], %3 {strides = array<i32>} : memref<16x128xbf16, #tpu.memory_space<vmem>>, vector<16x128xbf16>,
    %c0_5 = arith.constant 0 : index
    %c0_6 = arith.constant 0 : index
    %5 = vector.load %arg3[%c0_5, %c0_6] : memref<16x128xf32, #tpu.memory_space<vmem>>, vector<16x128xf32>
    %6 = arith.addf %5, %2 : vector<16x128xf32>
    %c0_7 = arith.constant 0 : index
    %c0_8 = arith.constant 0 : index
    %7 = vector.load %arg5[%c0_7, %c0_8] : memref<16x128xf32, #tpu.memory_space<vmem>>, vector<16x128xf32>
    tpu.vector_store %arg5[%c0_7, %c0_8], %6 {strides = array<i32>} : memref<16x128xf32, #tpu.memory_space<vmem>>, vector<16x128xf32>,
    return
  }
  func.func @transform_0(%arg0: i32) -> (i32, i32) {
    %c0_i32 = arith.constant 0 : i32
    %c0_i32_0 = arith.constant 0 : i32
    return %arg0, %c0_i32 : i32, i32
  }
  func.func @transform_1(%arg0: i32) -> (i32, i32) {
    %c0_i32 = arith.constant 0 : i32
    %c0_i32_0 = arith.constant 0 : i32
    %c0_i32_1 = arith.constant 0 : i32
    return %c0_i32, %c0_i32_0 : i32, i32
  }
  func.func @transform_2(%arg0: i32) -> (i32, i32) {
    %c0_i32 = arith.constant 0 : i32
    %c0_i32_0 = arith.constant 0 : i32
    return %arg0, %c0_i32 : i32, i32
  }
  func.func @transform_3(%arg0: i32) -> (i32, i32) {
    %c0_i32 = arith.constant 0 : i32
    %c0_i32_0 = arith.constant 0 : i32
    return %arg0, %c0_i32 : i32, i32
  }
  func.func @transform_4(%arg0: i32) -> (i32, i32) {
    %c0_i32 = arith.constant 0 : i32
    %c0_i32_0 = arith.constant 0 : i32
    return %arg0, %c0_i32 : i32, i32
  }
}

module attributes {stable_mosaic.version = 11 : i64} {
  func.func @_graph_prop_last_kernel(%arg0: i32, %arg1: memref<16x16xbf16, #tpu.memory_space<vmem>>, %arg2: memref<16x128xbf16, #tpu.memory_space<vmem>>, %arg3: memref<16x128xf32, #tpu.memory_space<vmem>>, %arg4: memref<16x128xf32, #tpu.memory_space<vmem>>) attributes {dimension_semantics = [#tpu.dimension_semantics<parallel>], iteration_bounds = array<i64: 1>, scalar_prefetch = 0 : i64, scratch_operands = 0 : i64, tpu.core_type = #tpu.core_type<tc>, window_params = [{transform_indices = @transform_0, window_bounds = array<i64: 16, 16>}, {pipeline_mode = #tpu.pipeline_mode<synchronous>, transform_indices = @transform_1, window_bounds = array<i64: 16, 128>}, {transform_indices = @transform_2, window_bounds = array<i64: 16, 128>}, {transform_indices = @transform_3, window_bounds = array<i64: 16, 128>}]} {
    %c0 = arith.constant 0 : index
    %c0_0 = arith.constant 0 : index
    %0 = vector.load %arg1[%c0, %c0_0] : memref<16x16xbf16, #tpu.memory_space<vmem>>, vector<16x16xbf16>
    %c0_1 = arith.constant 0 : index
    %c0_2 = arith.constant 0 : index
    %1 = vector.load %arg2[%c0_1, %c0_2] : memref<16x128xbf16, #tpu.memory_space<vmem>>, vector<16x128xbf16>
    %cst = arith.constant dense<0.000000e+00> : vector<16x128xf32>
    %2 = tpu.matmul %0, %1, %cst {dimension_numbers = #tpu.dot_dimension_numbers<[1], [0], [0], [1], [0, 0, 1, 1], [], []>} : vector<16x16xbf16>, vector<16x128xbf16>, vector<16x128xf32> -> vector<16x128xf32>
    %c0_3 = arith.constant 0 : index
    %c0_4 = arith.constant 0 : index
    %3 = vector.load %arg3[%c0_3, %c0_4] : memref<16x128xf32, #tpu.memory_space<vmem>>, vector<16x128xf32>
    %4 = arith.addf %3, %2 : vector<16x128xf32>
    %cst_5 = arith.constant 1.000000e+00 : f32
    %5 = vector.broadcast %cst_5 : f32 to vector<16x128xf32>
    %6 = arith.mulf %4, %5 : vector<16x128xf32>
    %c0_6 = arith.constant 0 : index
    %c0_7 = arith.constant 0 : index
    %7 = vector.load %arg4[%c0_6, %c0_7] : memref<16x128xf32, #tpu.memory_space<vmem>>, vector<16x128xf32>
    tpu.vector_store %arg4[%c0_6, %c0_7], %6 {strides = array<i32>} : memref<16x128xf32, #tpu.memory_space<vmem>>, vector<16x128xf32>,
    return
  }
  func.func @transform_0(%arg0: i32) -> (i32, i32) {
    %c0_i32 = arith.constant 0 : i32
    %c0_i32_0 = arith.constant 0 : i32
    return %arg0, %c0_i32 : i32, i32
  }
  func.func @transform_1(%arg0: i32) -> (i32, i32) {
    %c0_i32 = arith.constant 0 : i32
    %c0_i32_0 = arith.constant 0 : i32
    %c0_i32_1 = arith.constant 0 : i32
    return %c0_i32, %c0_i32_0 : i32, i32
  }
  func.func @transform_2(%arg0: i32) -> (i32, i32) {
    %c0_i32 = arith.constant 0 : i32
    %c0_i32_0 = arith.constant 0 : i32
    return %arg0, %c0_i32 : i32, i32
  }
  func.func @transform_3(%arg0: i32) -> (i32, i32) {
    %c0_i32 = arith.constant 0 : i32
    %c0_i32_0 = arith.constant 0 : i32
    return %arg0, %c0_i32 : i32, i32
  }
}

module attributes {stable_mosaic.version = 11 : i64} {
  func.func @_hyper_gate_kernel(%arg0: i32, %arg1: memref<16x16xbf16, #tpu.memory_space<vmem>>, %arg2: memref<16x32xbf16, #tpu.memory_space<vmem>>, %arg3: memref<48x16xbf16, #tpu.memory_space<vmem>>, %arg4: memref<16x128xbf16, #tpu.memory_space<vmem>>, %arg5: memref<32x128xbf16, #tpu.memory_space<vmem>>, %arg6: memref<16x128xf32, #tpu.memory_space<vmem>>, %arg7: memref<16x128xf32, #tpu.memory_space<vmem>>, %arg8: memref<2x3x128x128xbf16, #tpu.memory_space<vmem>>, %arg9: memref<2x1x128xf32, #tpu.memory_space<vmem>>, %arg10: memref<3x128xf32, #tpu.memory_space<vmem>>, %arg11: memref<3xf32, #tpu.memory_space<smem>>, %arg12: memref<48x128xf32, #tpu.memory_space<vmem>>, %arg13: memref<16x128xf32, #tpu.memory_space<vmem>>) attributes {dimension_semantics = [#tpu.dimension_semantics<arbitrary>], iteration_bounds = array<i64: 1>, scalar_prefetch = 0 : i64, scratch_operands = 0 : i64, tpu.core_type = #tpu.core_type<tc>, window_params = [{pipeline_mode = #tpu.pipeline_mode<synchronous>, transform_indices = @transform_0, window_bounds = array<i64: 16, 16>}, {pipeline_mode = #tpu.pipeline_mode<synchronous>, transform_indices = @transform_1, window_bounds = array<i64: 16, 32>}, {pipeline_mode = #tpu.pipeline_mode<synchronous>, transform_indices = @transform_2, window_bounds = array<i64: 48, 16>}, {pipeline_mode = #tpu.pipeline_mode<synchronous>, transform_indices = @transform_3, window_bounds = array<i64: 16, 128>}, {pipeline_mode = #tpu.pipeline_mode<synchronous>, transform_indices = @transform_4, window_bounds = array<i64: 32, 128>}, {pipeline_mode = #tpu.pipeline_mode<synchronous>, transform_indices = @transform_5, window_bounds = array<i64: 16, 128>}, {pipeline_mode = #tpu.pipeline_mode<synchronous>, transform_indices = @transform_6, window_bounds = array<i64: 16, 128>}, {pipeline_mode = #tpu.pipeline_mode<synchronous>, transform_indices = @transform_7, window_bounds = array<i64: 2, 3, 128, 128>}, {pipeline_mode = #tpu.pipeline_mode<synchronous>, transform_indices = @transform_8, window_bounds = array<i64: 2, 1, 128>}, {pipeline_mode = #tpu.pipeline_mode<synchronous>, transform_indices = @transform_9, window_bounds = array<i64: 3, 128>}, {transform_indices = @transform_10, window_bounds = array<i64: 3>}, {pipeline_mode = #tpu.pipeline_mode<synchronous>, transform_indices = @transform_11, window_bounds = array<i64: 48, 128>}, {pipeline_mode = #tpu.pipeline_mode<synchronous>, transform_indices = @transform_12, window_bounds = array<i64: 16, 128>}]} {
    %c0 = arith.constant 0 : index
    %c0_0 = arith.constant 0 : index
    %0 = vector.load %arg1[%c0, %c0_0] : memref<16x16xbf16, #tpu.memory_space<vmem>>, vector<16x16xbf16>
    %c0_1 = arith.constant 0 : index
    %c0_2 = arith.constant 0 : index
    %1 = vector.load %arg2[%c0_1, %c0_2] : memref<16x32xbf16, #tpu.memory_space<vmem>>, vector<16x32xbf16>
    %c0_3 = arith.constant 0 : index
    %c0_4 = arith.constant 0 : index
    %2 = vector.load %arg3[%c0_3, %c0_4] : memref<48x16xbf16, #tpu.memory_space<vmem>>, vector<48x16xbf16>
    %c0_5 = arith.constant 0 : index
    %c0_6 = arith.constant 0 : index
    %3 = vector.load %arg4[%c0_5, %c0_6] : memref<16x128xbf16, #tpu.memory_space<vmem>>, vector<16x128xbf16>
    %c0_7 = arith.constant 0 : index
    %c0_8 = arith.constant 0 : index
    %4 = vector.load %arg5[%c0_7, %c0_8] : memref<32x128xbf16, #tpu.memory_space<vmem>>, vector<32x128xbf16>
    %c0_9 = arith.constant 0 : index
    %c0_10 = arith.constant 0 : index
    %5 = vector.load %arg6[%c0_9, %c0_10] : memref<16x128xf32, #tpu.memory_space<vmem>>, vector<16x128xf32>
    %c0_11 = arith.constant 0 : index
    %c0_12 = arith.constant 0 : index
    %6 = vector.load %arg10[%c0_11, %c0_12] : memref<3x128xf32, #tpu.memory_space<vmem>>, vector<3x128xf32>
    %7 = arith.extf %3 : vector<16x128xbf16> to vector<16x128xf32>
    %c0_13 = arith.constant 0 : index
    %c0_14 = arith.constant 0 : index
    %8 = vector.load %arg12[%c0_13, %c0_14] : memref<48x128xf32, #tpu.memory_space<vmem>>, vector<16x128xf32>
    tpu.vector_store %arg12[%c0_13, %c0_14], %7 {strides = array<i32>} : memref<48x128xf32, #tpu.memory_space<vmem>>, vector<16x128xf32>,
    %9 = arith.extf %4 : vector<32x128xbf16> to vector<32x128xf32>
    %c16 = arith.constant 16 : index
    %c0_15 = arith.constant 0 : index
    %10 = vector.load %arg12[%c16, %c0_15] : memref<48x128xf32, #tpu.memory_space<vmem>>, vector<32x128xf32>
    tpu.vector_store %arg12[%c16, %c0_15], %9 {strides = array<i32>} : memref<48x128xf32, #tpu.memory_space<vmem>>, vector<32x128xf32>,
    %cst = arith.constant dense<0.000000e+00> : vector<16x128xf32>
    %11 = tpu.matmul %0, %3, %cst {dimension_numbers = #tpu.dot_dimension_numbers<[1], [0], [0], [1], [0, 0, 1, 1], [], []>} : vector<16x16xbf16>, vector<16x128xbf16>, vector<16x128xf32> -> vector<16x128xf32>
    %cst_16 = arith.constant dense<0.000000e+00> : vector<16x128xf32>
    %12 = tpu.matmul %1, %4, %cst_16 {dimension_numbers = #tpu.dot_dimension_numbers<[1], [0], [0], [1], [0, 0, 1, 1], [], []>} : vector<16x32xbf16>, vector<32x128xbf16>, vector<16x128xf32> -> vector<16x128xf32>
    %13 = arith.mulf %12, %5 : vector<16x128xf32>
    %14 = arith.truncf %11 : vector<16x128xf32> to vector<16x128xbf16>
    %c0_17 = arith.constant 0 : index
    %c0_18 = arith.constant 0 : index
    %c0_19 = arith.constant 0 : index
    %c0_20 = arith.constant 0 : index
    %15 = vector.load %arg8[%c0_17, %c0_18, %c0_19, %c0_20] : memref<2x3x128x128xbf16, #tpu.memory_space<vmem>>, vector<1x1x128x128xbf16>
    %16 = vector.shape_cast %15 : vector<1x1x128x128xbf16> to vector<128x128xbf16>
    %cst_21 = arith.constant dense<0.000000e+00> : vector<16x128xf32>
    %17 = tpu.matmul %14, %16, %cst_21 {dimension_numbers = #tpu.dot_dimension_numbers<[1], [0], [0], [1], [0, 0, 1, 1], [], []>} : vector<16x128xbf16>, vector<128x128xbf16>, vector<16x128xf32> -> vector<16x128xf32>
    %18 = arith.truncf %12 : vector<16x128xf32> to vector<16x128xbf16>
    %c0_22 = arith.constant 0 : index
    %c1 = arith.constant 1 : index
    %c0_23 = arith.constant 0 : index
    %c0_24 = arith.constant 0 : index
    %19 = vector.load %arg8[%c0_22, %c1, %c0_23, %c0_24] : memref<2x3x128x128xbf16, #tpu.memory_space<vmem>>, vector<1x1x128x128xbf16>
    %20 = vector.shape_cast %19 : vector<1x1x128x128xbf16> to vector<128x128xbf16>
    %cst_25 = arith.constant dense<0.000000e+00> : vector<16x128xf32>
    %21 = tpu.matmul %18, %20, %cst_25 {dimension_numbers = #tpu.dot_dimension_numbers<[1], [0], [0], [1], [0, 0, 1, 1], [], []>} : vector<16x128xbf16>, vector<128x128xbf16>, vector<16x128xf32> -> vector<16x128xf32>
    %22 = arith.addf %17, %21 : vector<16x128xf32>
    %23 = arith.truncf %13 : vector<16x128xf32> to vector<16x128xbf16>
    %c0_26 = arith.constant 0 : index
    %c2 = arith.constant 2 : index
    %c0_27 = arith.constant 0 : index
    %c0_28 = arith.constant 0 : index
    %24 = vector.load %arg8[%c0_26, %c2, %c0_27, %c0_28] : memref<2x3x128x128xbf16, #tpu.memory_space<vmem>>, vector<1x1x128x128xbf16>
    %25 = vector.shape_cast %24 : vector<1x1x128x128xbf16> to vector<128x128xbf16>
    %cst_29 = arith.constant dense<0.000000e+00> : vector<16x128xf32>
    %26 = tpu.matmul %23, %25, %cst_29 {dimension_numbers = #tpu.dot_dimension_numbers<[1], [0], [0], [1], [0, 0, 1, 1], [], []>} : vector<16x128xbf16>, vector<128x128xbf16>, vector<16x128xf32> -> vector<16x128xf32>
    %27 = arith.addf %22, %26 : vector<16x128xf32>
    %c0_30 = arith.constant 0 : index
    %c0_31 = arith.constant 0 : index
    %c0_32 = arith.constant 0 : index
    %28 = vector.load %arg9[%c0_30, %c0_31, %c0_32] : memref<2x1x128xf32, #tpu.memory_space<vmem>>, vector<1x1x128xf32>
    %29 = vector.shape_cast %28 : vector<1x1x128xf32> to vector<1x128xf32>
    %30 = vector.broadcast %29 : vector<1x128xf32> to vector<16x128xf32>
    %31 = arith.addf %27, %30 : vector<16x128xf32>
    %32 = arith.truncf %31 : vector<16x128xf32> to vector<16x128xbf16>
    %cst_33 = arith.constant dense<0.000000e+00> : vector<48x128xf32>
    %33 = tpu.matmul %2, %32, %cst_33 {dimension_numbers = #tpu.dot_dimension_numbers<[1], [0], [0], [1], [0, 0, 1, 1], [], []>} : vector<48x16xbf16>, vector<16x128xbf16>, vector<48x128xf32> -> vector<48x128xf32>
    %34 = arith.addf %5, %31 : vector<16x128xf32>
    %c0_34 = arith.constant 0 : index
    %c0_35 = arith.constant 0 : index
    %35 = vector.load %arg12[%c0_34, %c0_35] : memref<48x128xf32, #tpu.memory_space<vmem>>, vector<48x128xf32>
    %36 = arith.addf %35, %33 : vector<48x128xf32>
    %c0_36 = arith.constant 0 : index
    %c0_37 = arith.constant 0 : index
    %37 = vector.load %arg12[%c0_36, %c0_37] : memref<48x128xf32, #tpu.memory_space<vmem>>, vector<48x128xf32>
    tpu.vector_store %arg12[%c0_36, %c0_37], %36 {strides = array<i32>} : memref<48x128xf32, #tpu.memory_space<vmem>>, vector<48x128xf32>,
    %38 = vector.extract_strided_slice %33 {offsets = [0, 0], sizes = [16, 128], strides = [1, 1]} : vector<48x128xf32> to vector<16x128xf32>
    %39 = arith.truncf %38 : vector<16x128xf32> to vector<16x128xbf16>
    %40 = vector.extract_strided_slice %33 {offsets = [16, 0], sizes = [32, 128], strides = [1, 1]} : vector<48x128xf32> to vector<32x128xf32>
    %41 = arith.truncf %40 : vector<32x128xf32> to vector<32x128xbf16>
    %cst_38 = arith.constant dense<0.000000e+00> : vector<16x128xf32>
    %42 = tpu.matmul %0, %39, %cst_38 {dimension_numbers = #tpu.dot_dimension_numbers<[1], [0], [0], [1], [0, 0, 1, 1], [], []>} : vector<16x16xbf16>, vector<16x128xbf16>, vector<16x128xf32> -> vector<16x128xf32>
    %cst_39 = arith.constant dense<0.000000e+00> : vector<16x128xf32>
    %43 = tpu.matmul %1, %41, %cst_39 {dimension_numbers = #tpu.dot_dimension_numbers<[1], [0], [0], [1], [0, 0, 1, 1], [], []>} : vector<16x32xbf16>, vector<32x128xbf16>, vector<16x128xf32> -> vector<16x128xf32>
    %44 = arith.mulf %43, %5 : vector<16x128xf32>
    %45 = arith.truncf %42 : vector<16x128xf32> to vector<16x128xbf16>
    %c1_40 = arith.constant 1 : index
    %c0_41 = arith.constant 0 : index
    %c0_42 = arith.constant 0 : index
    %c0_43 = arith.constant 0 : index
    %46 = vector.load %arg8[%c1_40, %c0_41, %c0_42, %c0_43] : memref<2x3x128x128xbf16, #tpu.memory_space<vmem>>, vector<1x1x128x128xbf16>
    %47 = vector.shape_cast %46 : vector<1x1x128x128xbf16> to vector<128x128xbf16>
    %cst_44 = arith.constant dense<0.000000e+00> : vector<16x128xf32>
    %48 = tpu.matmul %45, %47, %cst_44 {dimension_numbers = #tpu.dot_dimension_numbers<[1], [0], [0], [1], [0, 0, 1, 1], [], []>} : vector<16x128xbf16>, vector<128x128xbf16>, vector<16x128xf32> -> vector<16x128xf32>
    %49 = arith.truncf %43 : vector<16x128xf32> to vector<16x128xbf16>
    %c1_45 = arith.constant 1 : index
    %c1_46 = arith.constant 1 : index
    %c0_47 = arith.constant 0 : index
    %c0_48 = arith.constant 0 : index
    %50 = vector.load %arg8[%c1_45, %c1_46, %c0_47, %c0_48] : memref<2x3x128x128xbf16, #tpu.memory_space<vmem>>, vector<1x1x128x128xbf16>
    %51 = vector.shape_cast %50 : vector<1x1x128x128xbf16> to vector<128x128xbf16>
    %cst_49 = arith.constant dense<0.000000e+00> : vector<16x128xf32>
    %52 = tpu.matmul %49, %51, %cst_49 {dimension_numbers = #tpu.dot_dimension_numbers<[1], [0], [0], [1], [0, 0, 1, 1], [], []>} : vector<16x128xbf16>, vector<128x128xbf16>, vector<16x128xf32> -> vector<16x128xf32>
    %53 = arith.addf %48, %52 : vector<16x128xf32>
    %54 = arith.truncf %44 : vector<16x128xf32> to vector<16x128xbf16>
    %c1_50 = arith.constant 1 : index
    %c2_51 = arith.constant 2 : index
    %c0_52 = arith.constant 0 : index
    %c0_53 = arith.constant 0 : index
    %55 = vector.load %arg8[%c1_50, %c2_51, %c0_52, %c0_53] : memref<2x3x128x128xbf16, #tpu.memory_space<vmem>>, vector<1x1x128x128xbf16>
    %56 = vector.shape_cast %55 : vector<1x1x128x128xbf16> to vector<128x128xbf16>
    %cst_54 = arith.constant dense<0.000000e+00> : vector<16x128xf32>
    %57 = tpu.matmul %54, %56, %cst_54 {dimension_numbers = #tpu.dot_dimension_numbers<[1], [0], [0], [1], [0, 0, 1, 1], [], []>} : vector<16x128xbf16>, vector<128x128xbf16>, vector<16x128xf32> -> vector<16x128xf32>
    %58 = arith.addf %53, %57 : vector<16x128xf32>
    %c1_55 = arith.constant 1 : index
    %c0_56 = arith.constant 0 : index
    %c0_57 = arith.constant 0 : index
    %59 = vector.load %arg9[%c1_55, %c0_56, %c0_57] : memref<2x1x128xf32, #tpu.memory_space<vmem>>, vector<1x1x128xf32>
    %60 = vector.shape_cast %59 : vector<1x1x128xf32> to vector<1x128xf32>
    %61 = vector.broadcast %60 : vector<1x128xf32> to vector<16x128xf32>
    %62 = arith.addf %58, %61 : vector<16x128xf32>
    %63 = arith.truncf %62 : vector<16x128xf32> to vector<16x128xbf16>
    %cst_58 = arith.constant dense<0.000000e+00> : vector<48x128xf32>
    %64 = tpu.matmul %2, %63, %cst_58 {dimension_numbers = #tpu.dot_dimension_numbers<[1], [0], [0], [1], [0, 0, 1, 1], [], []>} : vector<48x16xbf16>, vector<16x128xbf16>, vector<48x128xf32> -> vector<48x128xf32>
    %65 = arith.addf %34, %62 : vector<16x128xf32>
    %c0_59 = arith.constant 0 : index
    %c0_60 = arith.constant 0 : index
    %66 = vector.load %arg12[%c0_59, %c0_60] : memref<48x128xf32, #tpu.memory_space<vmem>>, vector<48x128xf32>
    %67 = arith.addf %66, %64 : vector<48x128xf32>
    %c0_61 = arith.constant 0 : index
    %c0_62 = arith.constant 0 : index
    %68 = vector.load %arg12[%c0_61, %c0_62] : memref<48x128xf32, #tpu.memory_space<vmem>>, vector<48x128xf32>
    tpu.vector_store %arg12[%c0_61, %c0_62], %67 {strides = array<i32>} : memref<48x128xf32, #tpu.memory_space<vmem>>, vector<48x128xf32>,
    %c0_63 = arith.constant 0 : index
    %c0_64 = arith.constant 0 : index
    %69 = vector.load %arg7[%c0_63, %c0_64] : memref<16x128xf32, #tpu.memory_space<vmem>>, vector<16x128xf32>
    %70 = vector.extract_strided_slice %6 {offsets = [0, 0], sizes = [1, 128], strides = [1, 1]} : vector<3x128xf32> to vector<1x128xf32>
    %71 = vector.broadcast %70 : vector<1x128xf32> to vector<16x128xf32>
    %72 = arith.mulf %5, %71 : vector<16x128xf32>
    %cst_65 = arith.constant dense<0.000000e+00> : vector<16xf32>
    %73 = vector.multi_reduction <add>, %72, %cst_65 [1] : vector<16x128xf32> to vector<16xf32>
    %74 = vector.shape_cast %73 : vector<16xf32> to vector<16x1xf32>
    %c0_66 = arith.constant 0 : index
    %75 = memref.load %arg11[%c0_66] : memref<3xf32, #tpu.memory_space<smem>>
    %76 = vector.broadcast %75 : f32 to vector<16x1xf32>
    %77 = arith.addf %74, %76 : vector<16x1xf32>
    %78 = arith.negf %77 : vector<16x1xf32>
    %79 = math.exp %78 : vector<16x1xf32>
    %cst_67 = arith.constant 1.000000e+00 : f32
    %80 = vector.broadcast %cst_67 : f32 to vector<16x1xf32>
    %81 = arith.addf %80, %79 : vector<16x1xf32>
    %82 = arith.divf %80, %81 : vector<16x1xf32>
    %83 = vector.broadcast %82 : vector<16x1xf32> to vector<16x128xf32>
    %84 = arith.mulf %83, %5 : vector<16x128xf32>
    %85 = vector.extract_strided_slice %6 {offsets = [1, 0], sizes = [1, 128], strides = [1, 1]} : vector<3x128xf32> to vector<1x128xf32>
    %86 = vector.broadcast %85 : vector<1x128xf32> to vector<16x128xf32>
    %87 = arith.mulf %65, %86 : vector<16x128xf32>
    %cst_68 = arith.constant dense<0.000000e+00> : vector<16xf32>
    %88 = vector.multi_reduction <add>, %87, %cst_68 [1] : vector<16x128xf32> to vector<16xf32>
    %89 = vector.shape_cast %88 : vector<16xf32> to vector<16x1xf32>
    %c1_69 = arith.constant 1 : index
    %90 = memref.load %arg11[%c1_69] : memref<3xf32, #tpu.memory_space<smem>>
    %91 = vector.broadcast %90 : f32 to vector<16x1xf32>
    %92 = arith.addf %89, %91 : vector<16x1xf32>
    %93 = arith.negf %92 : vector<16x1xf32>
    %94 = math.exp %93 : vector<16x1xf32>
    %cst_70 = arith.constant 1.000000e+00 : f32
    %95 = vector.broadcast %cst_70 : f32 to vector<16x1xf32>
    %96 = arith.addf %95, %94 : vector<16x1xf32>
    %97 = arith.divf %95, %96 : vector<16x1xf32>
    %98 = vector.broadcast %97 : vector<16x1xf32> to vector<16x128xf32>
    %99 = arith.mulf %98, %65 : vector<16x128xf32>
    %100 = arith.addf %84, %99 : vector<16x128xf32>
    %101 = vector.extract_strided_slice %6 {offsets = [2, 0], sizes = [1, 128], strides = [1, 1]} : vector<3x128xf32> to vector<1x128xf32>
    %102 = vector.broadcast %101 : vector<1x128xf32> to vector<16x128xf32>
    %103 = arith.mulf %69, %102 : vector<16x128xf32>
    %cst_71 = arith.constant dense<0.000000e+00> : vector<16xf32>
    %104 = vector.multi_reduction <add>, %103, %cst_71 [1] : vector<16x128xf32> to vector<16xf32>
    %105 = vector.shape_cast %104 : vector<16xf32> to vector<16x1xf32>
    %c2_72 = arith.constant 2 : index
    %106 = memref.load %arg11[%c2_72] : memref<3xf32, #tpu.memory_space<smem>>
    %107 = vector.broadcast %106 : f32 to vector<16x1xf32>
    %108 = arith.addf %105, %107 : vector<16x1xf32>
    %109 = arith.negf %108 : vector<16x1xf32>
    %110 = math.exp %109 : vector<16x1xf32>
    %cst_73 = arith.constant 1.000000e+00 : f32
    %111 = vector.broadcast %cst_73 : f32 to vector<16x1xf32>
    %112 = arith.addf %111, %110 : vector<16x1xf32>
    %113 = arith.divf %111, %112 : vector<16x1xf32>
    %114 = vector.broadcast %113 : vector<16x1xf32> to vector<16x128xf32>
    %115 = arith.mulf %114, %69 : vector<16x128xf32>
    %116 = arith.addf %100, %115 : vector<16x128xf32>
    %c0_74 = arith.constant 0 : index
    %c0_75 = arith.constant 0 : index
    %117 = vector.load %arg13[%c0_74, %c0_75] : memref<16x128xf32, #tpu.memory_space<vmem>>, vector<16x128xf32>
    tpu.vector_store %arg13[%c0_74, %c0_75], %116 {strides = array<i32>} : memref<16x128xf32, #tpu.memory_space<vmem>>, vector<16x128xf32>,
    return
  }
  func.func @transform_0(%arg0: i32) -> (i32, i32) {
    %c0_i32 = arith.constant 0 : i32
    %c0_i32_0 = arith.constant 0 : i32
    %c0_i32_1 = arith.constant 0 : i32
    return %c0_i32, %c0_i32_0 : i32, i32
  }
  func.func @transform_1(%arg0: i32) -> (i32, i32) {
    %c0_i32 = arith.constant 0 : i32
    %c0_i32_0 = arith.constant 0 : i32
    %c0_i32_1 = arith.constant 0 : i32
    return %c0_i32, %c0_i32_0 : i32, i32
  }
  func.func @transform_2(%arg0: i32) -> (i32, i32) {
    %c0_i32 = arith.constant 0 : i32
    %c0_i32_0 = arith.constant 0 : i32
    %c0_i32_1 = arith.constant 0 : i32
    return %c0_i32, %c0_i32_0 : i32, i32
  }
  func.func @transform_3(%arg0: i32) -> (i32, i32) {
    %c0_i32 = arith.constant 0 : i32
    %c0_i32_0 = arith.constant 0 : i32
    %c0_i32_1 = arith.constant 0 : i32
    return %c0_i32, %c0_i32_0 : i32, i32
  }
  func.func @transform_4(%arg0: i32) -> (i32, i32) {
    %c0_i32 = arith.constant 0 : i32
    %c0_i32_0 = arith.constant 0 : i32
    %c0_i32_1 = arith.constant 0 : i32
    return %c0_i32, %c0_i32_0 : i32, i32
  }
  func.func @transform_5(%arg0: i32) -> (i32, i32) {
    %c0_i32 = arith.constant 0 : i32
    %c0_i32_0 = arith.constant 0 : i32
    %c0_i32_1 = arith.constant 0 : i32
    return %c0_i32, %c0_i32_0 : i32, i32
  }
  func.func @transform_6(%arg0: i32) -> (i32, i32) {
    %c0_i32 = arith.constant 0 : i32
    %c0_i32_0 = arith.constant 0 : i32
    %c0_i32_1 = arith.constant 0 : i32
    return %c0_i32, %c0_i32_0 : i32, i32
  }
  func.func @transform_7(%arg0: i32) -> (i32, i32, i32, i32) {
    %c0_i32 = arith.constant 0 : i32
    %c0_i32_0 = arith.constant 0 : i32
    %c0_i32_1 = arith.constant 0 : i32
    %c0_i32_2 = arith.constant 0 : i32
    %c0_i32_3 = arith.constant 0 : i32
    return %c0_i32, %c0_i32_0, %c0_i32_1, %c0_i32_2 : i32, i32, i32, i32
  }
  func.func @transform_8(%arg0: i32) -> (i32, i32, i32) {
    %c0_i32 = arith.constant 0 : i32
    %c0_i32_0 = arith.constant 0 : i32
    %c0_i32_1 = arith.constant 0 : i32
    %c0_i32_2 = arith.constant 0 : i32
    return %c0_i32, %c0_i32_0, %c0_i32_1 : i32, i32, i32
  }
  func.func @transform_9(%arg0: i32) -> (i32, i32) {
    %c0_i32 = arith.constant 0 : i32
    %c0_i32_0 = arith.constant 0 : i32
    %c0_i32_1 = arith.constant 0 : i32
    return %c0_i32, %c0_i32_0 : i32, i32
  }
  func.func @transform_10(%arg0: i32) -> i32 {
    %c0_i32 = arith.constant 0 : i32
    %c0_i32_0 = arith.constant 0 : i32
    return %c0_i32 : i32
  }
  func.func @transform_11(%arg0: i32) -> (i32, i32) {
    %c0_i32 = arith.constant 0 : i32
    %c0_i32_0 = arith.constant 0 : i32
    %c0_i32_1 = arith.constant 0 : i32
    return %c0_i32, %c0_i32_0 : i32, i32
  }
  func.func @transform_12(%arg0: i32) -> (i32, i32) {
    %c0_i32 = arith.constant 0 : i32
    %c0_i32_0 = arith.constant 0 : i32
    %c0_i32_1 = arith.constant 0 : i32
    return %c0_i32, %c0_i32_0 : i32, i32
  }
}

module attributes {stable_mosaic.version = 11 : i64} {
  func.func @_predict_kernel(%arg0: i32, %arg1: memref<128x128xf32, #tpu.memory_space<vmem>>, %arg2: memref<128x128xf32, #tpu.memory_space<vmem>>, %arg3: memref<8x128xf32, #tpu.memory_space<vmem>>, %arg4: memref<8x1xf32, #tpu.memory_space<vmem>>, %arg5: memref<8x1xf32, #tpu.memory_space<vmem>>, %arg6: memref<1xf32, #tpu.memory_space<smem>>, %arg7: memref<1x128xf32, #tpu.memory_space<vmem>>) attributes {dimension_semantics = [#tpu.dimension_semantics<arbitrary>], iteration_bounds = array<i64: 1>, scalar_prefetch = 0 : i64, scratch_operands = 0 : i64, tpu.core_type = #tpu.core_type<tc>, window_params = [{pipeline_mode = #tpu.pipeline_mode<synchronous>, transform_indices = @transform_0, window_bounds = array<i64: 128, 128>}, {pipeline_mode = #tpu.pipeline_mode<synchronous>, transform_indices = @transform_1, window_bounds = array<i64: 128, 128>}, {pipeline_mode = #tpu.pipeline_mode<synchronous>, transform_indices = @transform_2, window_bounds = array<i64: 8, 128>}, {pipeline_mode = #tpu.pipeline_mode<synchronous>, transform_indices = @transform_3, window_bounds = array<i64: 8, 1>}, {pipeline_mode = #tpu.pipeline_mode<synchronous>, transform_indices = @transform_4, window_bounds = array<i64: 8, 1>}, {transform_indices = @transform_5, window_bounds = array<i64: 1>}, {pipeline_mode = #tpu.pipeline_mode<synchronous>, transform_indices = @transform_6, window_bounds = array<i64: 1, 128>}]} {
    %c0 = arith.constant 0 : index
    %c0_0 = arith.constant 0 : index
    %0 = vector.load %arg1[%c0, %c0_0] : memref<128x128xf32, #tpu.memory_space<vmem>>, vector<128x128xf32>
    %c0_1 = arith.constant 0 : index
    %c0_2 = arith.constant 0 : index
    %1 = vector.load %arg2[%c0_1, %c0_2] : memref<128x128xf32, #tpu.memory_space<vmem>>, vector<128x128xf32>
    %2 = arith.mulf %0, %1 : vector<128x128xf32>
    %c0_3 = arith.constant 0 : index
    %c0_4 = arith.constant 0 : index
    %3 = vector.load %arg3[%c0_3, %c0_4] : memref<8x128xf32, #tpu.memory_space<vmem>>, vector<8x128xf32>
    %cst = arith.constant dense<0.000000e+00> : vector<8x128xf32>
    %4 = tpu.matmul %3, %2, %cst {dimension_numbers = #tpu.dot_dimension_numbers<[1], [0], [0], [1], [0, 0, 1, 1], [], []>} : vector<8x128xf32>, vector<128x128xf32>, vector<8x128xf32> -> vector<8x128xf32>
    %c0_5 = arith.constant 0 : index
    %c0_6 = arith.constant 0 : index
    %5 = vector.load %arg4[%c0_5, %c0_6] : memref<8x1xf32, #tpu.memory_space<vmem>>, vector<8x1xf32>
    %6 = vector.broadcast %5 : vector<8x1xf32> to vector<8x128xf32>
    %7 = arith.addf %4, %6 : vector<8x128xf32>
    %cst_7 = arith.constant 0.000000e+00 : f32
    %8 = vector.broadcast %cst_7 : f32 to vector<8x128xf32>
    %9 = arith.maximumf %7, %8 : vector<8x128xf32>
    %c0_8 = arith.constant 0 : index
    %c0_9 = arith.constant 0 : index
    %10 = vector.load %arg5[%c0_8, %c0_9] : memref<8x1xf32, #tpu.memory_space<vmem>>, vector<8x1xf32>
    %11 = vector.broadcast %10 : vector<8x1xf32> to vector<8x128xf32>
    %12 = arith.mulf %11, %9 : vector<8x128xf32>
    %cst_10 = arith.constant dense<0.000000e+00> : vector<128xf32>
    %13 = vector.multi_reduction <add>, %12, %cst_10 [0] : vector<8x128xf32> to vector<128xf32>
    %14 = vector.shape_cast %13 : vector<128xf32> to vector<1x128xf32>
    %c0_11 = arith.constant 0 : index
    %15 = memref.load %arg6[%c0_11] : memref<1xf32, #tpu.memory_space<smem>>
    %16 = vector.broadcast %15 : f32 to vector<1x128xf32>
    %17 = arith.addf %14, %16 : vector<1x128xf32>
    %18 = arith.negf %17 : vector<1x128xf32>
    %19 = math.exp %18 : vector<1x128xf32>
    %cst_12 = arith.constant 1.000000e+00 : f32
    %20 = vector.broadcast %cst_12 : f32 to vector<1x128xf32>
    %21 = arith.addf %20, %19 : vector<1x128xf32>
    %22 = arith.divf %20, %21 : vector<1x128xf32>
    %c0_13 = arith.constant 0 : index
    %c0_14 = arith.constant 0 : index
    %23 = vector.load %arg7[%c0_13, %c0_14] : memref<1x128xf32, #tpu.memory_space<vmem>>, vector<1x128xf32>
    tpu.vector_store %arg7[%c0_13, %c0_14], %22 {strides = array<i32>} : memref<1x128xf32, #tpu.memory_space<vmem>>, vector<1x128xf32>,
    return
  }
  func.func @transform_0(%arg0: i32) -> (i32, i32) {
    %c0_i32 = arith.constant 0 : i32
    %c0_i32_0 = arith.constant 0 : i32
    %c0_i32_1 = arith.constant 0 : i32
    return %c0_i32, %c0_i32_0 : i32, i32
  }
  func.func @transform_1(%arg0: i32) -> (i32, i32) {
    %c0_i32 = arith.constant 0 : i32
    %c0_i32_0 = arith.constant 0 : i32
    %c0_i32_1 = arith.constant 0 : i32
    return %c0_i32, %c0_i32_0 : i32, i32
  }
  func.func @transform_2(%arg0: i32) -> (i32, i32) {
    %c0_i32 = arith.constant 0 : i32
    %c0_i32_0 = arith.constant 0 : i32
    %c0_i32_1 = arith.constant 0 : i32
    return %c0_i32, %c0_i32_0 : i32, i32
  }
  func.func @transform_3(%arg0: i32) -> (i32, i32) {
    %c0_i32 = arith.constant 0 : i32
    %c0_i32_0 = arith.constant 0 : i32
    %c0_i32_1 = arith.constant 0 : i32
    return %c0_i32, %c0_i32_0 : i32, i32
  }
  func.func @transform_4(%arg0: i32) -> (i32, i32) {
    %c0_i32 = arith.constant 0 : i32
    %c0_i32_0 = arith.constant 0 : i32
    %c0_i32_1 = arith.constant 0 : i32
    return %c0_i32, %c0_i32_0 : i32, i32
  }
  func.func @transform_5(%arg0: i32) -> i32 {
    %c0_i32 = arith.constant 0 : i32
    %c0_i32_0 = arith.constant 0 : i32
    return %c0_i32 : i32
  }
  func.func @transform_6(%arg0: i32) -> (i32, i32) {
    %c0_i32 = arith.constant 0 : i32
    %c0_i32_0 = arith.constant 0 : i32
    %c0_i32_1 = arith.constant 0 : i32
    return %c0_i32, %c0_i32_0 : i32, i32
  }
}

</mosaic_0001>

<llo_original>
// kernel: consrec_group_forward.8
$region0: #{consrec_group_forward.8}
  #allocation0 [shape = 'u32[]', space=smem, size = 0x4, offset = 0x4, fixed_abs, tag = 'smem constant byte address 0x4 - core index']
  #allocation1 [shape = 'u32[144,128]{1,0:T(1,128)}', space=vmem, size = 0x12000, scoped, tag = 'internal scratch']
  %s0 = inlined_call_operand.hbm [shape: bf16[32,32], index: 0, kind: input, shape index: {}]
  %s1 = inlined_call_operand.vmem [shape: bf16[32,128], index: 1, kind: input, shape index: {}]
  %s2 = inlined_call_operand.vmem [shape: f32[32,128], index: 2, kind: input, shape index: {}]
  %s3 = inlined_call_operand.vmem [shape: bf16[32,128], index: 3, kind: output, shape index: {0}]
  %s4 = inlined_call_operand.vmem [shape: f32[32,128], index: 4, kind: output, shape index: {1}]
  %5 = xla_tuple %s3, %s4
  %s6 = sld [smem:[#allocation0]]
  $region34: #{consrec_group_forward.8} parent=0
    _
  %s8 = ssub.s32 1, %s6
  %s9 = scalar_select 0, %s8, %s6
  $region1: #{consrec_group_forward.8} parent=0
    #allocation2 [shape = 'u8[8192]{0}', space=vmem, size = 0x2000, scoped, tag = 'input window, operand 0, single buffered']
    #allocation3 [shape = 's32[1]{0}', space=sflag, size = 0x4, scoped, tag = 'scoped memory for consrec_group_forward.8']
    %10 = vsyncpa [#allocation3], 0
    // Predicated region
    $region2: #{consrec_group_forward.8} parent=1 // pred_check
      _
    $region3: #{consrec_group_forward.8} parent=1 // pred_check_branch
      %12 = sbr.rel (0) target = $region5
    $region4: #{consrec_group_forward.8} parent=1 // pred_region
      %s14 = ssub.s32 256, 256
      %15 = vsyncadd [#allocation3], %s14
      %s16 = sshll.u32 [#allocation2], 4
      %s17 = int_to_ptr.vmem [resolvable:$true] %s16
      %22 = dma.hbm_to_vmem [thread:$0]  %s0, 256, %s17, [#allocation3], 64, 64, 4
    $region5: #{consrec_group_forward.8} parent=1 // pred_fallthru
      _
    // Predicated region
    $region6: #{consrec_group_forward.8} parent=1 // pred_check
      _
    $region7: #{consrec_group_forward.8} parent=1 // pred_check_branch
      %24 = sbr.rel (0) target = $region9
    $region8: #{consrec_group_forward.8} parent=1 // pred_region
      _
    $region9: #{consrec_group_forward.8} parent=1 // pred_fallthru
      _
    // Predicated region
    $region10: #{consrec_group_forward.8} parent=1 // pred_check
      _
    $region11: #{consrec_group_forward.8} parent=1 // pred_check_branch
      %26 = sbr.rel (0) target = $region13
    $region12: #{consrec_group_forward.8} parent=1 // pred_region
      _
    $region13: #{consrec_group_forward.8} parent=1 // pred_fallthru
      _
    // Predicated region
    $region14: #{consrec_group_forward.8} parent=1 // pred_check
      _
    $region15: #{consrec_group_forward.8} parent=1 // pred_check_branch
      %28 = sbr.rel (0) target = $region17
    $region16: #{consrec_group_forward.8} parent=1 // pred_region
      %29 = dma.done [#allocation3], 256
    $region17: #{consrec_group_forward.8} parent=1 // pred_fallthru
      _
    %v31 = vld [vmem:[#allocation2] sm:$0xf]
    %v32 = vld [vmem:[#allocation2 + $0x4] sm:$0xf]
    %v33 = vld [vmem:[#allocation2 + $0x8] sm:$0xf]
    %v34 = vld [vmem:[#allocation2 + $0xc] sm:$0xf]
    %v35 = vld [vmem:[%s1] sm:$0xf]
    %v36 = vld [vmem:[%s1 + $0x4] sm:$0xf]
    %v37 = vld [vmem:[%s1 + $0x8] sm:$0xf]
    %v38 = vld [vmem:[%s1 + $0xc] sm:$0xf]
    %v43 = vunpack.c.l.b16 %v31
    %v44 = vunpack.c.l.b16 %v32
    %v45 = vunpack.c.l.b16 %v33
    %v46 = vunpack.c.l.b16 %v34
    %v47 = vpack.c.b16 %v44, %v43
    %v48 = vpack.c.b16 %v46, %v45
    %v53 = vunpack.c.l.b16 %v35
    %v54 = vunpack.c.l.b16 %v36
    %v55 = vunpack.c.l.b16 %v37
    %v56 = vunpack.c.l.b16 %v38
    %v57 = vpack.c.b16 %v54, %v53
    %v58 = vpack.c.b16 %v56, %v55
    %vm61 = vcmask 261120
    %v63 = vsel %vm61, %v47, 0
    %v66 = vsel %vm61, %v48, 0
    %68 = vmatprep.subr.bf16.mxu0 0
    %69 = vmatpush1.bf16.msra.mxu0 0
    %70 = vmatprep.subr.bf16.mxu0 0
    %71 = vmatpush1.bf16.msra.mxu0 0
    %72 = vmatprep.subr.bf16.mxu0 0
    %73 = vmatpush1.bf16.msra.mxu0 0
    %74 = vmatprep.subr.bf16.mxu0 0
    %75 = vmatpush1.bf16.msra.mxu0 0
    %76 = vmatprep.subr.bf16.mxu0 0
    %77 = vmatpush1.bf16.msra.mxu0 0
    %78 = vmatprep.subr.bf16.mxu0 0
    %79 = vmatpush1.bf16.msra.mxu0 0
    %80 = vmatprep.subr.bf16.mxu0 0
    %81 = vmatpush1.bf16.msra.mxu0 %v58
    %82 = vmatprep.subr.bf16.mxu0 0
    %83 = vmatpush1.bf16.msra.mxu0 %v57
    %84 = vmatprep.subr.bf16.mxu0 0
    %85 = vmatpush2.bf16.msra.mxu0 0
    %86 = vmatprep.subr.bf16.mxu0 0
    %87 = vmatpush2.bf16.msra.mxu0 0
    %88 = vmatprep.subr.bf16.mxu0 0
    %89 = vmatpush2.bf16.msra.mxu0 0
    %90 = vmatprep.subr.bf16.mxu0 0
    %91 = vmatpush2.bf16.msra.mxu0 0
    %92 = vmatprep.subr.bf16.mxu0 0
    %93 = vmatpush2.bf16.msra.mxu0 0
    %94 = vmatprep.subr.bf16.mxu0 0
    %95 = vmatpush2.bf16.msra.mxu0 0
    %96 = vmatprep.subr.bf16.mxu0 0
    %97 = vmatpush2.bf16.msra.mxu0 0
    %98 = vmatprep.subr.bf16.mxu0 0
    %99 = vmatpush2.bf16.msra.mxu0 0
    %100 = vmatprep.mubr.bf16.mxu0 0
    %101 = vmatmul.mubr.bf16.gmra.mxu0 %v63
    %v102 = vpop.f32.mrf.mxu0
    %v103 = vadd.f32 0.0, %v102
    %v104 = vpop.f32.mrf.mxu0
    %v105 = vpop.f32.mrf.mxu0
    %v106 = vadd.f32 0.0, %v105
    %v107 = vpop.f32.mrf.mxu0
    %108 = vmatprep.mubr.bf16.mxu0 0
    %109 = vmatmul.mubr.bf16.gmra.mxu0 %v66
    %v110 = vpop.f32.mrf.mxu0
    %v111 = vadd.f32 0.0, %v110
    %v112 = vpop.f32.mrf.mxu0
    %v113 = vpop.f32.mrf.mxu0
    %v114 = vadd.f32 0.0, %v113
    %v115 = vpop.f32.mrf.mxu0
    %116 = vdwg.mxu0
    %v117 = vpack.c.bf16 %v106, %v103
    %v118 = vpack.c.bf16 %v114, %v111
    %v121 = vunpack.c.l.b16 %v117
    %v122 = vunpack.c.h.b16 %v117
    %v123 = vunpack.c.l.b16 %v118
    %v124 = vunpack.c.h.b16 %v118
    %v125 = vpack.c.b16 %v121, %v121
    %v126 = vpack.c.b16 %v122, %v122
    %v127 = vpack.c.b16 %v123, %v123
    %v128 = vpack.c.b16 %v124, %v124
    %133 = vst [vmem:[%s3] sm:$0xf] %v125
    %134 = vst [vmem:[%s3 + $0x4] sm:$0xf] %v126
    %135 = vst [vmem:[%s3 + $0x8] sm:$0xf] %v127
    %136 = vst [vmem:[%s3 + $0xc] sm:$0xf] %v128
    %v137 = vld [vmem:[%s2] sm:$0xff]
    %v138 = vld [vmem:[%s2 + $0x8] sm:$0xff]
    %v139 = vld [vmem:[%s2 + $0x10] sm:$0xff]
    %v140 = vld [vmem:[%s2 + $0x18] sm:$0xff]
    %v141 = vadd.f32 %v137, %v103
    %v142 = vadd.f32 %v138, %v106
    %v143 = vadd.f32 %v139, %v111
    %v144 = vadd.f32 %v140, %v114
    %145 = vst [vmem:[%s4] sm:$0xff] %v141
    %146 = vst [vmem:[%s4 + $0x8] sm:$0xff] %v142
    %147 = vst [vmem:[%s4 + $0x10] sm:$0xff] %v143
    %148 = vst [vmem:[%s4 + $0x18] sm:$0xff] %v144
    // Predicated region
    $region18: #{consrec_group_forward.8} parent=1 // pred_check
      _
    $region19: #{consrec_group_forward.8} parent=1 // pred_check_branch
      %150 = sbr.rel (0) target = $region21
    $region20: #{consrec_group_forward.8} parent=1 // pred_region
      _
    $region21: #{consrec_group_forward.8} parent=1 // pred_fallthru
      _
    // Predicated region
    $region22: #{consrec_group_forward.8} parent=1 // pred_check
      _
    $region23: #{consrec_group_forward.8} parent=1 // pred_check_branch
      %152 = sbr.rel (0) target = $region25
    $region24: #{consrec_group_forward.8} parent=1 // pred_region
      _
    $region25: #{consrec_group_forward.8} parent=1 // pred_fallthru
      _
    // Predicated region
    $region26: #{consrec_group_forward.8} parent=1 // pred_check
      _
    $region27: #{consrec_group_forward.8} parent=1 // pred_check_branch
      %154 = sbr.rel (0) target = $region29
    $region28: #{consrec_group_forward.8} parent=1 // pred_region
      _
    $region29: #{consrec_group_forward.8} parent=1 // pred_fallthru
      _
    // Predicated region
    $region30: #{consrec_group_forward.8} parent=1 // pred_check
      _
    $region31: #{consrec_group_forward.8} parent=1 // pred_check_branch
      %156 = sbr.rel (0) target = $region33
    $region32: #{consrec_group_forward.8} parent=1 // pred_region
      _
    $region33: #{consrec_group_forward.8} parent=1 // pred_fallthru
      _
    %157 = vsyncpa [#allocation3], 1

// kernel: consrec_group_forward.9
$region0: #{consrec_group_forward.9}
  #allocation0 [shape = 'u32[]', space=smem, size = 0x4, offset = 0x4, fixed_abs, tag = 'smem constant byte address 0x4 - core index']
  #allocation1 [shape = 'u32[144,128]{1,0:T(1,128)}', space=vmem, size = 0x12000, scoped, tag = 'internal scratch']
  %s0 = inlined_call_operand.hbm [shape: bf16[32,32], index: 0, kind: input, shape index: {}]
  %s1 = inlined_call_operand.vmem [shape: bf16[32,128], index: 1, kind: input, shape index: {}]
  %s2 = inlined_call_operand.vmem [shape: f32[32,128], index: 2, kind: input, shape index: {}]
  %s3 = inlined_call_operand.vmem [shape: f32[32,128], index: 3, kind: output, shape index: {}]
  %s4 = sld [smem:[#allocation0]]
  $region26: #{consrec_group_forward.9} parent=0
    _
  %s6 = ssub.s32 1, %s4
  %s7 = scalar_select 0, %s6, %s4
  $region1: #{consrec_group_forward.9} parent=0
    #allocation2 [shape = 'u8[8192]{0}', space=vmem, size = 0x2000, scoped, tag = 'input window, operand 0, single buffered']
    #allocation3 [shape = 's32[1]{0}', space=sflag, size = 0x4, scoped, tag = 'scoped memory for consrec_group_forward.9']
    %8 = vsyncpa [#allocation3], 0
    // Predicated region
    $region2: #{consrec_group_forward.9} parent=1 // pred_check
      _
    $region3: #{consrec_group_forward.9} parent=1 // pred_check_branch
      %10 = sbr.rel (0) target = $region5
    $region4: #{consrec_group_forward.9} parent=1 // pred_region
      %s12 = ssub.s32 256, 256
      %13 = vsyncadd [#allocation3], %s12
      %s14 = sshll.u32 [#allocation2], 4
      %s15 = int_to_ptr.vmem [resolvable:$true] %s14
      %20 = dma.hbm_to_vmem [thread:$0]  %s0, 256, %s15, [#allocation3], 64, 64, 4
    $region5: #{consrec_group_forward.9} parent=1 // pred_fallthru
      _
    // Predicated region
    $region6: #{consrec_group_forward.9} parent=1 // pred_check
      _
    $region7: #{consrec_group_forward.9} parent=1 // pred_check_branch
      %22 = sbr.rel (0) target = $region9
    $region8: #{consrec_group_forward.9} parent=1 // pred_region
      _
    $region9: #{consrec_group_forward.9} parent=1 // pred_fallthru
      _
    // Predicated region
    $region10: #{consrec_group_forward.9} parent=1 // pred_check
      _
    $region11: #{consrec_group_forward.9} parent=1 // pred_check_branch
      %24 = sbr.rel (0) target = $region13
    $region12: #{consrec_group_forward.9} parent=1 // pred_region
      _
    $region13: #{consrec_group_forward.9} parent=1 // pred_fallthru
      _
    // Predicated region
    $region14: #{consrec_group_forward.9} parent=1 // pred_check
      _
    $region15: #{consrec_group_forward.9} parent=1 // pred_check_branch
      %26 = sbr.rel (0) target = $region17
    $region16: #{consrec_group_forward.9} parent=1 // pred_region
      %27 = dma.done [#allocation3], 256
    $region17: #{consrec_group_forward.9} parent=1 // pred_fallthru
      _
    %v29 = vld [vmem:[#allocation2] sm:$0xf]
    %v30 = vld [vmem:[#allocation2 + $0x4] sm:$0xf]
    %v31 = vld [vmem:[#allocation2 + $0x8] sm:$0xf]
    %v32 = vld [vmem:[#allocation2 + $0xc] sm:$0xf]
    %v33 = vld [vmem:[%s1] sm:$0xf]
    %v34 = vld [vmem:[%s1 + $0x4] sm:$0xf]
    %v35 = vld [vmem:[%s1 + $0x8] sm:$0xf]
    %v36 = vld [vmem:[%s1 + $0xc] sm:$0xf]
    %v41 = vunpack.c.l.b16 %v29
    %v42 = vunpack.c.l.b16 %v30
    %v43 = vunpack.c.l.b16 %v31
    %v44 = vunpack.c.l.b16 %v32
    %v45 = vpack.c.b16 %v42, %v41
    %v46 = vpack.c.b16 %v44, %v43
    %v51 = vunpack.c.l.b16 %v33
    %v52 = vunpack.c.l.b16 %v34
    %v53 = vunpack.c.l.b16 %v35
    %v54 = vunpack.c.l.b16 %v36
    %v55 = vpack.c.b16 %v52, %v51
    %v56 = vpack.c.b16 %v54, %v53
    %vm59 = vcmask 261120
    %v61 = vsel %vm59, %v45, 0
    %v64 = vsel %vm59, %v46, 0
    %66 = vmatprep.subr.bf16.mxu0 0
    %67 = vmatpush1.bf16.msra.mxu0 0
    %68 = vmatprep.subr.bf16.mxu0 0
    %69 = vmatpush1.bf16.msra.mxu0 0
    %70 = vmatprep.subr.bf16.mxu0 0
    %71 = vmatpush1.bf16.msra.mxu0 0
    %72 = vmatprep.subr.bf16.mxu0 0
    %73 = vmatpush1.bf16.msra.mxu0 0
    %74 = vmatprep.subr.bf16.mxu0 0
    %75 = vmatpush1.bf16.msra.mxu0 0
    %76 = vmatprep.subr.bf16.mxu0 0
    %77 = vmatpush1.bf16.msra.mxu0 0
    %78 = vmatprep.subr.bf16.mxu0 0
    %79 = vmatpush1.bf16.msra.mxu0 %v56
    %80 = vmatprep.subr.bf16.mxu0 0
    %81 = vmatpush1.bf16.msra.mxu0 %v55
    %82 = vmatprep.subr.bf16.mxu0 0
    %83 = vmatpush2.bf16.msra.mxu0 0
    %84 = vmatprep.subr.bf16.mxu0 0
    %85 = vmatpush2.bf16.msra.mxu0 0
    %86 = vmatprep.subr.bf16.mxu0 0
    %87 = vmatpush2.bf16.msra.mxu0 0
    %88 = vmatprep.subr.bf16.mxu0 0
    %89 = vmatpush2.bf16.msra.mxu0 0
    %90 = vmatprep.subr.bf16.mxu0 0
    %91 = vmatpush2.bf16.msra.mxu0 0
    %92 = vmatprep.subr.bf16.mxu0 0
    %93 = vmatpush2.bf16.msra.mxu0 0
    %94 = vmatprep.subr.bf16.mxu0 0
    %95 = vmatpush2.bf16.msra.mxu0 0
    %96 = vmatprep.subr.bf16.mxu0 0
    %97 = vmatpush2.bf16.msra.mxu0 0
    %98 = vmatprep.mubr.bf16.mxu0 0
    %99 = vmatmul.mubr.bf16.gmra.mxu0 %v61
    %v100 = vpop.f32.mrf.mxu0
    %v101 = vadd.f32 0.0, %v100
    %v102 = vpop.f32.mrf.mxu0
    %v103 = vpop.f32.mrf.mxu0
    %v104 = vadd.f32 0.0, %v103
    %v105 = vpop.f32.mrf.mxu0
    %106 = vmatprep.mubr.bf16.mxu0 0
    %107 = vmatmul.mubr.bf16.gmra.mxu0 %v64
    %v108 = vpop.f32.mrf.mxu0
    %v109 = vadd.f32 0.0, %v108
    %v110 = vpop.f32.mrf.mxu0
    %v111 = vpop.f32.mrf.mxu0
    %v112 = vadd.f32 0.0, %v111
    %v113 = vpop.f32.mrf.mxu0
    %114 = vdwg.mxu0
    %v115 = vld [vmem:[%s2] sm:$0xff]
    %v116 = vld [vmem:[%s2 + $0x8] sm:$0xff]
    %v117 = vld [vmem:[%s2 + $0x10] sm:$0xff]
    %v118 = vld [vmem:[%s2 + $0x18] sm:$0xff]
    %v119 = vadd.f32 %v115, %v101
    %v120 = vadd.f32 %v116, %v104
    %v121 = vadd.f32 %v117, %v109
    %v122 = vadd.f32 %v118, %v112
    %v123 = vmul.f32 %v119, 0.33333334
    %v124 = vmul.f32 %v120, 0.33333334
    %v125 = vmul.f32 %v121, 0.33333334
    %v126 = vmul.f32 %v122, 0.33333334
    %127 = vst [vmem:[%s3] sm:$0xff] %v123
    %128 = vst [vmem:[%s3 + $0x8] sm:$0xff] %v124
    %129 = vst [vmem:[%s3 + $0x10] sm:$0xff] %v125
    %130 = vst [vmem:[%s3 + $0x18] sm:$0xff] %v126
    // Predicated region
    $region18: #{consrec_group_forward.9} parent=1 // pred_check
      _
    $region19: #{consrec_group_forward.9} parent=1 // pred_check_branch
      %132 = sbr.rel (0) target = $region21
    $region20: #{consrec_group_forward.9} parent=1 // pred_region
      _
    $region21: #{consrec_group_forward.9} parent=1 // pred_fallthru
      _
    // Predicated region
    $region22: #{consrec_group_forward.9} parent=1 // pred_check
      _
    $region23: #{consrec_group_forward.9} parent=1 // pred_check_branch
      %134 = sbr.rel (0) target = $region25
    $region24: #{consrec_group_forward.9} parent=1 // pred_region
      _
    $region25: #{consrec_group_forward.9} parent=1 // pred_fallthru
      _
    %135 = vsyncpa [#allocation3], 1

// kernel: consrec_group_forward.6
$region0: #{consrec_group_forward.6}
  #allocation0 [shape = 'u32[]', space=smem, size = 0x4, offset = 0x4, fixed_abs, tag = 'smem constant byte address 0x4 - core index']
  #allocation1 [shape = 'u32[144,128]{1,0:T(1,128)}', space=vmem, size = 0x12000, scoped, tag = 'internal scratch']
  %s0 = inlined_call_operand.hbm [shape: bf16[16,16], index: 0, kind: input, shape index: {}]
  %s1 = inlined_call_operand.hbm [shape: bf16[16,128], index: 1, kind: input, shape index: {}]
  %s2 = inlined_call_operand.vmem [shape: f32[16,128], index: 2, kind: input, shape index: {}]
  %s3 = inlined_call_operand.vmem [shape: bf16[16,128], index: 3, kind: output, shape index: {0}]
  %s4 = inlined_call_operand.vmem [shape: f32[16,128], index: 4, kind: output, shape index: {1}]
  %5 = xla_tuple %s3, %s4
  %s6 = sld [smem:[#allocation0]]
  $region38: #{consrec_group_forward.6} parent=0
    _
  %s8 = ssub.s32 1, %s6
  %s9 = scalar_select 0, %s8, %s6
  $region1: #{consrec_group_forward.6} parent=0
    #allocation2 [shape = 'u8[4096]{0}', space=vmem, size = 0x1000, scoped, tag = 'input window, operand 0, single buffered']
    #allocation3 [shape = 's32[1]{0}', space=sflag, size = 0x4, scoped, tag = 'scoped memory for consrec_group_forward.6']
    #allocation4 [shape = 'u8[4096]{0}', space=vmem, size = 0x1000, scoped, tag = 'input window, operand 1, single buffered']
    #allocation5 [shape = 's32[1]{0}', space=sflag, size = 0x4, scoped, tag = 'scoped memory for consrec_group_forward.6']
    %10 = vsyncpa [#allocation3], 0
    %11 = vsyncpa [#allocation5], 0
    // Predicated region
    $region2: #{consrec_group_forward.6} parent=1 // pred_check
      _
    $region3: #{consrec_group_forward.6} parent=1 // pred_check_branch
      %13 = sbr.rel (0) target = $region5
    $region4: #{consrec_group_forward.6} parent=1 // pred_region
      %s15 = ssub.s32 128, 128
      %16 = vsyncadd [#allocation3], %s15
      %s17 = sshll.u32 [#allocation2], 4
      %s18 = int_to_ptr.vmem [resolvable:$true] %s17
      %23 = dma.hbm_to_vmem [thread:$0]  %s0, 128, %s18, [#allocation3], 64, 64, 4
    $region5: #{consrec_group_forward.6} parent=1 // pred_fallthru
      _
    // Predicated region
    $region6: #{consrec_group_forward.6} parent=1 // pred_check
      _
    $region7: #{consrec_group_forward.6} parent=1 // pred_check_branch
      %25 = sbr.rel (0) target = $region9
    $region8: #{consrec_group_forward.6} parent=1 // pred_region
      %s27 = ssub.s32 128, 128
      %28 = vsyncadd [#allocation5], %s27
      %s29 = sshll.u32 [#allocation4], 4
      %s30 = int_to_ptr.vmem [resolvable:$true] %s29
      %35 = dma.hbm_to_vmem [thread:$0]  %s1, 128, %s30, [#allocation5], 64, 64, 4
    $region9: #{consrec_group_forward.6} parent=1 // pred_fallthru
      _
    // Predicated region
    $region10: #{consrec_group_forward.6} parent=1 // pred_check
      _
    $region11: #{consrec_group_forward.6} parent=1 // pred_check_branch
      %37 = sbr.rel (0) target = $region13
    $region12: #{consrec_group_forward.6} parent=1 // pred_region
      _
    $region13: #{consrec_group_forward.6} parent=1 // pred_fallthru
      _
    // Predicated region
    $region14: #{consrec_group_forward.6} parent=1 // pred_check
      _
    $region15: #{consrec_group_forward.6} parent=1 // pred_check_branch
      %39 = sbr.rel (0) target = $region17
    $region16: #{consrec_group_forward.6} parent=1 // pred_region
      %40 = dma.done [#allocation3], 128
    $region17: #{consrec_group_forward.6} parent=1 // pred_fallthru
      _
    // Predicated region
    $region18: #{consrec_group_forward.6} parent=1 // pred_check
      _
    $region19: #{consrec_group_forward.6} parent=1 // pred_check_branch
      %42 = sbr.rel (0) target = $region21
    $region20: #{consrec_group_forward.6} parent=1 // pred_region
      %43 = dma.done [#allocation5], 128
    $region21: #{consrec_group_forward.6} parent=1 // pred_fallthru
      _
    %v45 = vld [vmem:[#allocation2] sm:$0xf]
    %v46 = vld [vmem:[#allocation2 + $0x4] sm:$0xf]
    %v47 = vld [vmem:[#allocation4] sm:$0xf]
    %v48 = vld [vmem:[#allocation4 + $0x4] sm:$0xf]
    %v51 = vunpack.c.l.b16 %v45
    %v52 = vunpack.c.l.b16 %v46
    %v53 = vpack.c.b16 %v52, %v51
    %v56 = vunpack.c.l.b16 %v47
    %v57 = vunpack.c.l.b16 %v48
    %v58 = vpack.c.b16 %v57, %v56
    %vm60 = vcmask 130048
    %v62 = vsel %vm60, %v53, 0
    %64 = vmatprep.subr.bf16.mxu0 0
    %65 = vmatpush1.bf16.msra.mxu0 0
    %66 = vmatprep.subr.bf16.mxu0 0
    %67 = vmatpush1.bf16.msra.mxu0 0
    %68 = vmatprep.subr.bf16.mxu0 0
    %69 = vmatpush1.bf16.msra.mxu0 0
    %70 = vmatprep.subr.bf16.mxu0 0
    %71 = vmatpush1.bf16.msra.mxu0 0
    %72 = vmatprep.subr.bf16.mxu0 0
    %73 = vmatpush1.bf16.msra.mxu0 0
    %74 = vmatprep.subr.bf16.mxu0 0
    %75 = vmatpush1.bf16.msra.mxu0 0
    %76 = vmatprep.subr.bf16.mxu0 0
    %77 = vmatpush1.bf16.msra.mxu0 0
    %78 = vmatprep.subr.bf16.mxu0 0
    %79 = vmatpush1.bf16.msra.mxu0 %v58
    %80 = vmatprep.subr.bf16.mxu0 0
    %81 = vmatpush2.bf16.msra.mxu0 0
    %82 = vmatprep.subr.bf16.mxu0 0
    %83 = vmatpush2.bf16.msra.mxu0 0
    %84 = vmatprep.subr.bf16.mxu0 0
    %85 = vmatpush2.bf16.msra.mxu0 0
    %86 = vmatprep.subr.bf16.mxu0 0
    %87 = vmatpush2.bf16.msra.mxu0 0
    %88 = vmatprep.subr.bf16.mxu0 0
    %89 = vmatpush2.bf16.msra.mxu0 0
    %90 = vmatprep.subr.bf16.mxu0 0
    %91 = vmatpush2.bf16.msra.mxu0 0
    %92 = vmatprep.subr.bf16.mxu0 0
    %93 = vmatpush2.bf16.msra.mxu0 0
    %94 = vmatprep.subr.bf16.mxu0 0
    %95 = vmatpush2.bf16.msra.mxu0 0
    %96 = vmatprep.mubr.bf16.mxu0 0
    %97 = vmatmul.mubr.bf16.gmra.mxu0 %v62
    %v98 = vpop.f32.mrf.mxu0
    %v99 = vadd.f32 0.0, %v98
    %v100 = vpop.f32.mrf.mxu0
    %v101 = vpop.f32.mrf.mxu0
    %v102 = vadd.f32 0.0, %v101
    %v103 = vpop.f32.mrf.mxu0
    %104 = vdwg.mxu0
    %v105 = vpack.c.bf16 %v102, %v99
    %v107 = vunpack.c.l.b16 %v105
    %v108 = vunpack.c.h.b16 %v105
    %v109 = vpack.c.b16 %v107, %v107
    %v110 = vpack.c.b16 %v108, %v108
    %113 = vst [vmem:[%s3] sm:$0xf] %v109
    %114 = vst [vmem:[%s3 + $0x4] sm:$0xf] %v110
    %v115 = vld [vmem:[%s2] sm:$0xff]
    %v116 = vld [vmem:[%s2 + $0x8] sm:$0xff]
    %v117 = vadd.f32 %v115, %v99
    %v118 = vadd.f32 %v116, %v102
    %119 = vst [vmem:[%s4] sm:$0xff] %v117
    %120 = vst [vmem:[%s4 + $0x8] sm:$0xff] %v118
    // Predicated region
    $region22: #{consrec_group_forward.6} parent=1 // pred_check
      _
    $region23: #{consrec_group_forward.6} parent=1 // pred_check_branch
      %122 = sbr.rel (0) target = $region25
    $region24: #{consrec_group_forward.6} parent=1 // pred_region
      _
    $region25: #{consrec_group_forward.6} parent=1 // pred_fallthru
      _
    // Predicated region
    $region26: #{consrec_group_forward.6} parent=1 // pred_check
      _
    $region27: #{consrec_group_forward.6} parent=1 // pred_check_branch
      %124 = sbr.rel (0) target = $region29
    $region28: #{consrec_group_forward.6} parent=1 // pred_region
      _
    $region29: #{consrec_group_forward.6} parent=1 // pred_fallthru
      _
    // Predicated region
    $region30: #{consrec_group_forward.6} parent=1 // pred_check
      _
    $region31: #{consrec_group_forward.6} parent=1 // pred_check_branch
      %126 = sbr.rel (0) target = $region33
    $region32: #{consrec_group_forward.6} parent=1 // pred_region
      _
    $region33: #{consrec_group_forward.6} parent=1 // pred_fallthru
      _
    // Predicated region
    $region34: #{consrec_group_forward.6} parent=1 // pred_check
      _
    $region35: #{consrec_group_forward.6} parent=1 // pred_check_branch
      %128 = sbr.rel (0) target = $region37
    $region36: #{consrec_group_forward.6} parent=1 // pred_region
      _
    $region37: #{consrec_group_forward.6} parent=1 // pred_fallthru
      _
    %129 = vsyncpa [#allocation3], 1
    %130 = vsyncpa [#allocation5], 1

// kernel: consrec_group_forward.7
$region0: #{consrec_group_forward.7}
  #allocation0 [shape = 'u32[]', space=smem, size = 0x4, offset = 0x4, fixed_abs, tag = 'smem constant byte address 0x4 - core index']
  #allocation1 [shape = 'u32[144,128]{1,0:T(1,128)}', space=vmem, size = 0x12000, scoped, tag = 'internal scratch']
  %s0 = inlined_call_operand.hbm [shape: bf16[16,16], index: 0, kind: input, shape index: {}]
  %s1 = inlined_call_operand.vmem [shape: bf16[16,128], index: 1, kind: input, shape index: {}]
  %s2 = inlined_call_operand.vmem [shape: f32[16,128], index: 2, kind: input, shape index: {}]
  %s3 = inlined_call_operand.vmem [shape: f32[16,128], index: 3, kind: output, shape index: {}]
  %s4 = sld [smem:[#allocation0]]
  $region26: #{consrec_group_forward.7} parent=0
    _
  %s6 = ssub.s32 1, %s4
  %s7 = scalar_select 0, %s6, %s4
  $region1: #{consrec_group_forward.7} parent=0
    #allocation2 [shape = 'u8[4096]{0}', space=vmem, size = 0x1000, scoped, tag = 'input window, operand 0, single buffered']
    #allocation3 [shape = 's32[1]{0}', space=sflag, size = 0x4, scoped, tag = 'scoped memory for consrec_group_forward.7']
    %8 = vsyncpa [#allocation3], 0
    // Predicated region
    $region2: #{consrec_group_forward.7} parent=1 // pred_check
      _
    $region3: #{consrec_group_forward.7} parent=1 // pred_check_branch
      %10 = sbr.rel (0) target = $region5
    $region4: #{consrec_group_forward.7} parent=1 // pred_region
      %s12 = ssub.s32 128, 128
      %13 = vsyncadd [#allocation3], %s12
      %s14 = sshll.u32 [#allocation2], 4
      %s15 = int_to_ptr.vmem [resolvable:$true] %s14
      %20 = dma.hbm_to_vmem [thread:$0]  %s0, 128, %s15, [#allocation3], 64, 64, 4
    $region5: #{consrec_group_forward.7} parent=1 // pred_fallthru
      _
    // Predicated region
    $region6: #{consrec_group_forward.7} parent=1 // pred_check
      _
    $region7: #{consrec_group_forward.7} parent=1 // pred_check_branch
      %22 = sbr.rel (0) target = $region9
    $region8: #{consrec_group_forward.7} parent=1 // pred_region
      _
    $region9: #{consrec_group_forward.7} parent=1 // pred_fallthru
      _
    // Predicated region
    $region10: #{consrec_group_forward.7} parent=1 // pred_check
      _
    $region11: #{consrec_group_forward.7} parent=1 // pred_check_branch
      %24 = sbr.rel (0) target = $region13
    $region12: #{consrec_group_forward.7} parent=1 // pred_region
      _
    $region13: #{consrec_group_forward.7} parent=1 // pred_fallthru
      _
    // Predicated region
    $region14: #{consrec_group_forward.7} parent=1 // pred_check
      _
    $region15: #{consrec_group_forward.7} parent=1 // pred_check_branch
      %26 = sbr.rel (0) target = $region17
    $region16: #{consrec_group_forward.7} parent=1 // pred_region
      %27 = dma.done [#allocation3], 128
    $region17: #{consrec_group_forward.7} parent=1 // pred_fallthru
      _
    %v29 = vld [vmem:[#allocation2] sm:$0xf]
    %v30 = vld [vmem:[#allocation2 + $0x4] sm:$0xf]
    %v31 = vld [vmem:[%s1] sm:$0xf]
    %v32 = vld [vmem:[%s1 + $0x4] sm:$0xf]
    %v35 = vunpack.c.l.b16 %v29
    %v36 = vunpack.c.l.b16 %v30
    %v37 = vpack.c.b16 %v36, %v35
    %v40 = vunpack.c.l.b16 %v31
    %v41 = vunpack.c.l.b16 %v32
    %v42 = vpack.c.b16 %v41, %v40
    %vm44 = vcmask 130048
    %v46 = vsel %vm44, %v37, 0
    %48 = vmatprep.subr.bf16.mxu0 0
    %49 = vmatpush1.bf16.msra.mxu0 0
    %50 = vmatprep.subr.bf16.mxu0 0
    %51 = vmatpush1.bf16.msra.mxu0 0
    %52 = vmatprep.subr.bf16.mxu0 0
    %53 = vmatpush1.bf16.msra.mxu0 0
    %54 = vmatprep.subr.bf16.mxu0 0
    %55 = vmatpush1.bf16.msra.mxu0 0
    %56 = vmatprep.subr.bf16.mxu0 0
    %57 = vmatpush1.bf16.msra.mxu0 0
    %58 = vmatprep.subr.bf16.mxu0 0
    %59 = vmatpush1.bf16.msra.mxu0 0
    %60 = vmatprep.subr.bf16.mxu0 0
    %61 = vmatpush1.bf16.msra.mxu0 0
    %62 = vmatprep.subr.bf16.mxu0 0
    %63 = vmatpush1.bf16.msra.mxu0 %v42
    %64 = vmatprep.subr.bf16.mxu0 0
    %65 = vmatpush2.bf16.msra.mxu0 0
    %66 = vmatprep.subr.bf16.mxu0 0
    %67 = vmatpush2.bf16.msra.mxu0 0
    %68 = vmatprep.subr.bf16.mxu0 0
    %69 = vmatpush2.bf16.msra.mxu0 0
    %70 = vmatprep.subr.bf16.mxu0 0
    %71 = vmatpush2.bf16.msra.mxu0 0
    %72 = vmatprep.subr.bf16.mxu0 0
    %73 = vmatpush2.bf16.msra.mxu0 0
    %74 = vmatprep.subr.bf16.mxu0 0
    %75 = vmatpush2.bf16.msra.mxu0 0
    %76 = vmatprep.subr.bf16.mxu0 0
    %77 = vmatpush2.bf16.msra.mxu0 0
    %78 = vmatprep.subr.bf16.mxu0 0
    %79 = vmatpush2.bf16.msra.mxu0 0
    %80 = vmatprep.mubr.bf16.mxu0 0
    %81 = vmatmul.mubr.bf16.gmra.mxu0 %v46
    %v82 = vpop.f32.mrf.mxu0
    %v83 = vadd.f32 0.0, %v82
    %v84 = vpop.f32.mrf.mxu0
    %v85 = vpop.f32.mrf.mxu0
    %v86 = vadd.f32 0.0, %v85
    %v87 = vpop.f32.mrf.mxu0
    %88 = vdwg.mxu0
    %v89 = vld [vmem:[%s2] sm:$0xff]
    %v90 = vld [vmem:[%s2 + $0x8] sm:$0xff]
    %v91 = vadd.f32 %v89, %v83
    %v92 = vadd.f32 %v90, %v86
    %93 = vst [vmem:[%s3] sm:$0xff] %v91
    %94 = vst [vmem:[%s3 + $0x8] sm:$0xff] %v92
    // Predicated region
    $region18: #{consrec_group_forward.7} parent=1 // pred_check
      _
    $region19: #{consrec_group_forward.7} parent=1 // pred_check_branch
      %96 = sbr.rel (0) target = $region21
    $region20: #{consrec_group_forward.7} parent=1 // pred_region
      _
    $region21: #{consrec_group_forward.7} parent=1 // pred_fallthru
      _
    // Predicated region
    $region22: #{consrec_group_forward.7} parent=1 // pred_check
      _
    $region23: #{consrec_group_forward.7} parent=1 // pred_check_branch
      %98 = sbr.rel (0) target = $region25
    $region24: #{consrec_group_forward.7} parent=1 // pred_region
      _
    $region25: #{consrec_group_forward.7} parent=1 // pred_fallthru
      _
    %99 = vsyncpa [#allocation3], 1

// kernel: consrec_group_forward.11
$region0: #{consrec_group_forward.11}
  #allocation0 [shape = 'u32[]', space=smem, size = 0x4, offset = 0x4, fixed_abs, tag = 'smem constant byte address 0x4 - core index']
  #allocation1 [shape = 'u32[144,128]{1,0:T(1,128)}', space=vmem, size = 0x12000, scoped, tag = 'internal scratch']
  #allocation2 [shape = 'f32[1]{0:T(128)S(6)}', space=smem, size = 0x200, scoped, tag = 'scoped memory for consrec_group_forward.11']
  %s0 = inlined_call_operand.vmem [shape: f32[128,128], index: 0, kind: input, shape index: {}]
  %s1 = inlined_call_operand.vmem [shape: f32[128,128], index: 1, kind: input, shape index: {}]
  %s2 = inlined_call_operand.vmem [shape: f32[8,128], index: 2, kind: input, shape index: {}]
  %s3 = inlined_call_operand.vmem [shape: f32[8,1], index: 3, kind: input, shape index: {}]
  %s4 = inlined_call_operand.vmem [shape: f32[8,1], index: 4, kind: input, shape index: {}]
  %s5 = inlined_call_operand.<no memory space> [shape: f32[1], index: 5, kind: input, shape index: {}]
  %s6 = inlined_call_operand.vmem [shape: f32[1,128], index: 6, kind: output, shape index: {}]
  %s7 = sld [smem:[#allocation0]]
  $region34: #{consrec_group_forward.11} parent=0
    _
  %s9 = ssub.s32 1, %s7
  %s10 = scalar_select 0, %s9, %s7
  %11 = sst [smem:[#allocation2]] %s5
  // Predicated region
  $region2: #{consrec_group_forward.11} parent=0 // pred_check
    _
  $region3: #{consrec_group_forward.11} parent=0 // pred_check_branch
    %13 = sbr.rel (0) target = $region5
  $region4: #{consrec_group_forward.11} parent=0 // pred_region
    _
  $region5: #{consrec_group_forward.11} parent=0 // pred_fallthru
    _
  // Predicated region
  $region6: #{consrec_group_forward.11} parent=0 // pred_check
    _
  $region7: #{consrec_group_forward.11} parent=0 // pred_check_branch
    %15 = sbr.rel (0) target = $region9
  $region8: #{consrec_group_forward.11} parent=0 // pred_region
    _
  $region9: #{consrec_group_forward.11} parent=0 // pred_fallthru
    _
  // Predicated region
  $region10: #{consrec_group_forward.11} parent=0 // pred_check
    _
  $region11: #{consrec_group_forward.11} parent=0 // pred_check_branch
    %17 = sbr.rel (0) target = $region13
  $region12: #{consrec_group_forward.11} parent=0 // pred_region
    _
  $region13: #{consrec_group_forward.11} parent=0 // pred_fallthru
    _
  // Predicated region
  $region14: #{consrec_group_forward.11} parent=0 // pred_check
    _
  $region15: #{consrec_group_forward.11} parent=0 // pred_check_branch
    %19 = sbr.rel (0) target = $region17
  $region16: #{consrec_group_forward.11} parent=0 // pred_region
    _
  $region17: #{consrec_group_forward.11} parent=0 // pred_fallthru
    _
  // Predicated region
  $region18: #{consrec_group_forward.11} parent=0 // pred_check
    _
  $region19: #{consrec_group_forward.11} parent=0 // pred_check_branch
    %21 = sbr.rel (0) target = $region21
  $region20: #{consrec_group_forward.11} parent=0 // pred_region
    _
  $region21: #{consrec_group_forward.11} parent=0 // pred_fallthru
    _
  // Predicated region
  $region22: #{consrec_group_forward.11} parent=0 // pred_check
    _
  $region23: #{consrec_group_forward.11} parent=0 // pred_check_branch
    %23 = sbr.rel (0) target = $region25
  $region24: #{consrec_group_forward.11} parent=0 // pred_region
    _
  $region25: #{consrec_group_forward.11} parent=0 // pred_fallthru
    _
  %v24 = vld [vmem:[%s0] sm:$0xff]
  %v25 = vld [vmem:[%s0 + $0x8] sm:$0xff]
  %v26 = vld [vmem:[%s0 + $0x10] sm:$0xff]
  %v27 = vld [vmem:[%s0 + $0x18] sm:$0xff]
  %v28 = vld [vmem:[%s0 + $0x20] sm:$0xff]
  %v29 = vld [vmem:[%s0 + $0x28] sm:$0xff]
  %v30 = vld [vmem:[%s0 + $0x30] sm:$0xff]
  %v31 = vld [vmem:[%s0 + $0x38] sm:$0xff]
  %v32 = vld [vmem:[%s0 + $0x40] sm:$0xff]
  %v33 = vld [vmem:[%s0 + $0x48] sm:$0xff]
  %v34 = vld [vmem:[%s0 + $0x50] sm:$0xff]
  %v35 = vld [vmem:[%s0 + $0x58] sm:$0xff]
  %v36 = vld [vmem:[%s0 + $0x60] sm:$0xff]
  %v37 = vld [vmem:[%s0 + $0x68] sm:$0xff]
  %v38 = vld [vmem:[%s0 + $0x70] sm:$0xff]
  %v39 = vld [vmem:[%s0 + $0x78] sm:$0xff]
  %v40 = vld [vmem:[%s1] sm:$0xff]
  %v41 = vld [vmem:[%s1 + $0x8] sm:$0xff]
  %v42 = vld [vmem:[%s1 + $0x10] sm:$0xff]
  %v43 = vld [vmem:[%s1 + $0x18] sm:$0xff]
  %v44 = vld [vmem:[%s1 + $0x20] sm:$0xff]
  %v45 = vld [vmem:[%s1 + $0x28] sm:$0xff]
  %v46 = vld [vmem:[%s1 + $0x30] sm:$0xff]
  %v47 = vld [vmem:[%s1 + $0x38] sm:$0xff]
  %v48 = vld [vmem:[%s1 + $0x40] sm:$0xff]
  %v49 = vld [vmem:[%s1 + $0x48] sm:$0xff]
  %v50 = vld [vmem:[%s1 + $0x50] sm:$0xff]
  %v51 = vld [vmem:[%s1 + $0x58] sm:$0xff]
  %v52 = vld [vmem:[%s1 + $0x60] sm:$0xff]
  %v53 = vld [vmem:[%s1 + $0x68] sm:$0xff]
  %v54 = vld [vmem:[%s1 + $0x70] sm:$0xff]
  %v55 = vld [vmem:[%s1 + $0x78] sm:$0xff]
  %v56 = vmul.f32 %v24, %v40
  %v57 = vmul.f32 %v25, %v41
  %v58 = vmul.f32 %v26, %v42
  %v59 = vmul.f32 %v27, %v43
  %v60 = vmul.f32 %v28, %v44
  %v61 = vmul.f32 %v29, %v45
  %v62 = vmul.f32 %v30, %v46
  %v63 = vmul.f32 %v31, %v47
  %v64 = vmul.f32 %v32, %v48
  %v65 = vmul.f32 %v33, %v49
  %v66 = vmul.f32 %v34, %v50
  %v67 = vmul.f32 %v35, %v51
  %v68 = vmul.f32 %v36, %v52
  %v69 = vmul.f32 %v37, %v53
  %v70 = vmul.f32 %v38, %v54
  %v71 = vmul.f32 %v39, %v55
  %v72 = vld [vmem:[%s2] sm:$0xff]
  %v73 = vld [vmem:[%s3] sm:$0xff]
  %75 = vset.pattern.permute.xlu0 0
  %76 = vperm.xlu0 %75, %v73
  %v77 = vpop.permute.xlu0 %76
  %79 = vmatprep.subr.mxu0 0.0
  %80 = vmatpush1.msra.mxu0 %v71
  %81 = vmatprep.subr.mxu0 0.0
  %82 = vmatpush1.msra.mxu0 %v70
  %83 = vmatprep.subr.mxu0 0.0
  %84 = vmatpush1.msra.mxu0 %v69
  %85 = vmatprep.subr.mxu0 0.0
  %86 = vmatpush1.msra.mxu0 %v68
  %87 = vmatprep.subr.mxu0 0.0
  %88 = vmatpush1.msra.mxu0 %v67
  %89 = vmatprep.subr.mxu0 0.0
  %90 = vmatpush1.msra.mxu0 %v66
  %91 = vmatprep.subr.mxu0 0.0
  %92 = vmatpush1.msra.mxu0 %v65
  %93 = vmatprep.subr.mxu0 0.0
  %94 = vmatpush1.msra.mxu0 %v64
  %95 = vmatprep.subr.mxu0 0.0
  %96 = vmatpush1.msra.mxu0 %v63
  %97 = vmatprep.subr.mxu0 0.0
  %98 = vmatpush1.msra.mxu0 %v62
  %99 = vmatprep.subr.mxu0 0.0
  %100 = vmatpush1.msra.mxu0 %v61
  %101 = vmatprep.subr.mxu0 0.0
  %102 = vmatpush1.msra.mxu0 %v60
  %103 = vmatprep.subr.mxu0 0.0
  %104 = vmatpush1.msra.mxu0 %v59
  %105 = vmatprep.subr.mxu0 0.0
  %106 = vmatpush1.msra.mxu0 %v58
  %107 = vmatprep.subr.mxu0 0.0
  %108 = vmatpush1.msra.mxu0 %v57
  %109 = vmatprep.subr.mxu0 0.0
  %110 = vmatpush1.msra.mxu0 %v56
  %111 = vmatprep.subr.mxu0 0.0
  %112 = vmatpush2.msra.mxu0 0.0
  %113 = vmatprep.subr.mxu0 0.0
  %114 = vmatpush2.msra.mxu0 0.0
  %115 = vmatprep.subr.mxu0 0.0
  %116 = vmatpush2.msra.mxu0 0.0
  %117 = vmatprep.subr.mxu0 0.0
  %118 = vmatpush2.msra.mxu0 0.0
  %119 = vmatprep.subr.mxu0 0.0
  %120 = vmatpush2.msra.mxu0 0.0
  %121 = vmatprep.subr.mxu0 0.0
  %122 = vmatpush2.msra.mxu0 0.0
  %123 = vmatprep.subr.mxu0 0.0
  %124 = vmatpush2.msra.mxu0 0.0
  %125 = vmatprep.subr.mxu0 0.0
  %126 = vmatpush2.msra.mxu0 0.0
  %127 = vmatprep.subr.mxu0 0.0
  %128 = vmatpush2.msra.mxu0 0.0
  %129 = vmatprep.subr.mxu0 0.0
  %130 = vmatpush2.msra.mxu0 0.0
  %131 = vmatprep.subr.mxu0 0.0
  %132 = vmatpush2.msra.mxu0 0.0
  %133 = vmatprep.subr.mxu0 0.0
  %134 = vmatpush2.msra.mxu0 0.0
  %135 = vmatprep.subr.mxu0 0.0
  %136 = vmatpush2.msra.mxu0 0.0
  %137 = vmatprep.subr.mxu0 0.0
  %138 = vmatpush2.msra.mxu0 0.0
  %139 = vmatprep.subr.mxu0 0.0
  %140 = vmatpush2.msra.mxu0 0.0
  %141 = vmatprep.subr.mxu0 0.0
  %142 = vmatpush2.msra.mxu0 0.0
  %143 = vmatprep.mubr.f32.mxu0 0.0
  %144 = vmatmul.mubr.f32.gmra.mxu0 %v72
  %v145 = vpop.f32.mrf.mxu0
  %v146 = vadd.f32 %v77, %v145
  %v147 = vpop.f32.mrf.mxu0
  %148 = vdwg.mxu0
  %v149 = vmax.f32 %v146, 0.0
  %v150 = vld [vmem:[%s4] sm:$0xff]
  %152 = vset.pattern.permute.xlu0 0
  %153 = vperm.xlu0 %152, %v150
  %v154 = vpop.permute.xlu0 %153
  %v156 = vmul.f32 %v154, %v149
  %v157 = vrot.slane %v156, 4
  %v158 = vadd.f32 %v156, %v157
  %v159 = vrot.slane %v158, 2
  %v160 = vadd.f32 %v158, %v159
  %v161 = vrot.slane %v160, 1
  %v162 = vadd.f32 %v160, %v161
  %s163 = sld [smem:[#allocation2]]
  %v164 = vstv %s163
  %v165 = vadd.f32 %v162, %v164
  %v166 = vxor.u32 %v165, 2147483648
  %v167 = vmul.f32 %v166, 1.442695
  %v168 = vpow.pop %v167
  %v169 = vadd.f32 %v168, 1.0
  %v170 = vrcp.pop %v169
  %v171 = vmul.f32 1.0, %v170
  %172 = vst [vmem:[%s6] sm:$0x1] %v171
  // Predicated region
  $region26: #{consrec_group_forward.11} parent=0 // pred_check
    _
  $region27: #{consrec_group_forward.11} parent=0 // pred_check_branch
    %174 = sbr.rel (0) target = $region29
  $region28: #{consrec_group_forward.11} parent=0 // pred_region
    _
  $region29: #{consrec_group_forward.11} parent=0 // pred_fallthru
    _
  // Predicated region
  $region30: #{consrec_group_forward.11} parent=0 // pred_check
    _
  $region31: #{consrec_group_forward.11} parent=0 // pred_check_branch
    %176 = sbr.rel (0) target = $region33
  $region32: #{consrec_group_forward.11} parent=0 // pred_region
    _
  $region33: #{consrec_group_forward.11} parent=0 // pred_fallthru
    _

// kernel: consrec_group_forward.10
$region0: #{consrec_group_forward.10}
  #allocation0 [shape = 'u32[]', space=smem, size = 0x4, offset = 0x4, fixed_abs, tag = 'smem constant byte address 0x4 - core index']
  #allocation1 [shape = 'u32[144,128]{1,0:T(1,128)}', space=vmem, size = 0x12000, scoped, tag = 'internal scratch']
  %s0 = inlined_call_operand.hbm [shape: bf16[16,16], index: 0, kind: input, shape index: {}]
  %s1 = inlined_call_operand.hbm [shape: bf16[16,32], index: 1, kind: input, shape index: {}]
  %s2 = inlined_call_operand.vmem [shape: bf16[48,16], index: 2, kind: input, shape index: {}]
  %s3 = inlined_call_operand.hbm [shape: bf16[16,128], index: 3, kind: input, shape index: {}]
  %s4 = inlined_call_operand.hbm [shape: bf16[32,128], index: 4, kind: input, shape index: {}]
  %s5 = inlined_call_operand.vmem [shape: f32[16,128], index: 5, kind: input, shape index: {}]
  %s6 = inlined_call_operand.vmem [shape: f32[16,128], index: 6, kind: input, shape index: {}]
  %s7 = inlined_call_operand.vmem [shape: bf16[2,3,128,128], index: 7, kind: input, shape index: {}]
  %s8 = inlined_call_operand.hbm [shape: f32[2,1,128], index: 8, kind: input, shape index: {}]
  %s9 = inlined_call_operand.hbm [shape: f32[3,128], index: 9, kind: input, shape index: {}]
  %s10 = inlined_call_operand.hbm [shape: f32[3], index: 10, kind: input, shape index: {}]
  %s11 = inlined_call_operand.vmem [shape: f32[48,128], index: 11, kind: output, shape index: {0}]
  %s12 = inlined_call_operand.vmem [shape: f32[16,128], index: 12, kind: output, shape index: {1}]
  %13 = xla_tuple %s11, %s12
  %s14 = sld [smem:[#allocation0]]
  $region90: #{consrec_group_forward.10} parent=0
    _
  %s16 = ssub.s32 1, %s14
  %s17 = scalar_select 0, %s16, %s14
  $region1: #{consrec_group_forward.10} parent=0
    #allocation2 [shape = 'u8[4096]{0}', space=vmem, size = 0x1000, scoped, tag = 'input window, operand 0, single buffered']
    #allocation3 [shape = 's32[1]{0}', space=sflag, size = 0x4, scoped, tag = 'scoped memory for consrec_group_forward.10']
    #allocation4 [shape = 's32[1]{0}', space=sflag, size = 0x4, scoped, tag = 'scoped memory for consrec_group_forward.10']
    #allocation5 [shape = 'u8[4096]{0}', space=vmem, size = 0x1000, scoped, tag = 'input window, operand 1, single buffered']
    #allocation6 [shape = 's32[1]{0}', space=sflag, size = 0x4, scoped, tag = 'scoped memory for consrec_group_forward.10']
    #allocation7 [shape = 'u8[4096]{0}', space=vmem, size = 0x1000, scoped, tag = 'input window, operand 3, single buffered']
    #allocation8 [shape = 'u8[8192]{0}', space=vmem, size = 0x2000, scoped, tag = 'input window, operand 4, single buffered']
    #allocation9 [shape = 's32[1]{0}', space=sflag, size = 0x4, scoped, tag = 'scoped memory for consrec_group_forward.10']
    #allocation10 [shape = 'u8[1024]{0}', space=vmem, size = 0x400, scoped, tag = 'input window, operand 8, single buffered']
    #allocation11 [shape = 'u8[2048]{0}', space=vmem, size = 0x800, scoped, tag = 'input window, operand 9, single buffered']
    #allocation12 [shape = 's32[1]{0}', space=sflag, size = 0x4, scoped, tag = 'scoped memory for consrec_group_forward.10']
    #allocation13 [shape = 'u8[512]{0}', space=smem, size = 0x200, scoped, tag = 'input window, operand 10, single buffered']
    %18 = vsyncpa [#allocation3], 0
    %19 = vsyncpa [#allocation6], 0
    %20 = vsyncpa [#allocation9], 0
    %21 = vsyncpa [#allocation12], 0
    %22 = vsyncpa [#allocation4], 0
    // Predicated region
    $region2: #{consrec_group_forward.10} parent=1 // pred_check
      _
    $region3: #{consrec_group_forward.10} parent=1 // pred_check_branch
      %24 = sbr.rel (0) target = $region5
    $region4: #{consrec_group_forward.10} parent=1 // pred_region
      %s26 = ssub.s32 128, 128
      %27 = vsyncadd [#allocation3], %s26
      %s28 = sshll.u32 [#allocation2], 4
      %s29 = int_to_ptr.vmem [resolvable:$true] %s28
      %34 = dma.hbm_to_vmem [thread:$0]  %s0, 128, %s29, [#allocation3], 64, 64, 4
    $region5: #{consrec_group_forward.10} parent=1 // pred_fallthru
      _
    // Predicated region
    $region6: #{consrec_group_forward.10} parent=1 // pred_check
      _
    $region7: #{consrec_group_forward.10} parent=1 // pred_check_branch
      %36 = sbr.rel (0) target = $region9
    $region8: #{consrec_group_forward.10} parent=1 // pred_region
      %s38 = ssub.s32 128, 128
      %39 = vsyncadd [#allocation6], %s38
      %s40 = sshll.u32 [#allocation5], 4
      %s41 = int_to_ptr.vmem [resolvable:$true] %s40
      %46 = dma.hbm_to_vmem [thread:$0]  %s1, 128, %s41, [#allocation6], 64, 64, 4
    $region9: #{consrec_group_forward.10} parent=1 // pred_fallthru
      _
    // Predicated region
    $region10: #{consrec_group_forward.10} parent=1 // pred_check
      _
    $region11: #{consrec_group_forward.10} parent=1 // pred_check_branch
      %48 = sbr.rel (0) target = $region13
    $region12: #{consrec_group_forward.10} parent=1 // pred_region
      _
    $region13: #{consrec_group_forward.10} parent=1 // pred_fallthru
      _
    // Predicated region
    $region14: #{consrec_group_forward.10} parent=1 // pred_check
      _
    $region15: #{consrec_group_forward.10} parent=1 // pred_check_branch
      %50 = sbr.rel (0) target = $region17
    $region16: #{consrec_group_forward.10} parent=1 // pred_region
      %s52 = ssub.s32 128, 128
      %53 = vsyncadd [#allocation6], %s52
      %s54 = sshll.u32 [#allocation7], 4
      %s55 = int_to_ptr.vmem [resolvable:$true] %s54
      %60 = dma.hbm_to_vmem [thread:$0]  %s3, 128, %s55, [#allocation6], 64, 64, 4
    $region17: #{consrec_group_forward.10} parent=1 // pred_fallthru
      _
    // Predicated region
    $region18: #{consrec_group_forward.10} parent=1 // pred_check
      _
    $region19: #{consrec_group_forward.10} parent=1 // pred_check_branch
      %62 = sbr.rel (0) target = $region21
    $region20: #{consrec_group_forward.10} parent=1 // pred_region
      %s64 = ssub.s32 256, 256
      %65 = vsyncadd [#allocation9], %s64
      %s66 = sshll.u32 [#allocation8], 4
      %s67 = int_to_ptr.vmem [resolvable:$true] %s66
      %72 = dma.hbm_to_vmem [thread:$0]  %s4, 256, %s67, [#allocation9], 64, 64, 4
    $region21: #{consrec_group_forward.10} parent=1 // pred_fallthru
      _
    // Predicated region
    $region22: #{consrec_group_forward.10} parent=1 // pred_check
      _
    $region23: #{consrec_group_forward.10} parent=1 // pred_check_branch
      %74 = sbr.rel (0) target = $region25
    $region24: #{consrec_group_forward.10} parent=1 // pred_region
      _
    $region25: #{consrec_group_forward.10} parent=1 // pred_fallthru
      _
    // Predicated region
    $region26: #{consrec_group_forward.10} parent=1 // pred_check
      _
    $region27: #{consrec_group_forward.10} parent=1 // pred_check_branch
      %76 = sbr.rel (0) target = $region29
    $region28: #{consrec_group_forward.10} parent=1 // pred_region
      _
    $region29: #{consrec_group_forward.10} parent=1 // pred_fallthru
      _
    // Predicated region
    $region30: #{consrec_group_forward.10} parent=1 // pred_check
      _
    $region31: #{consrec_group_forward.10} parent=1 // pred_check_branch
      %78 = sbr.rel (0) target = $region33
    $region32: #{consrec_group_forward.10} parent=1 // pred_region
      _
    $region33: #{consrec_group_forward.10} parent=1 // pred_fallthru
      _
    // Predicated region
    $region34: #{consrec_group_forward.10} parent=1 // pred_check
      _
    $region35: #{consrec_group_forward.10} parent=1 // pred_check_branch
      %80 = sbr.rel (0) target = $region37
    $region36: #{consrec_group_forward.10} parent=1 // pred_region
      %s82 = ssub.s32 32, 32
      %83 = vsyncadd [#allocation9], %s82
      %s84 = sshll.u32 [#allocation10], 4
      %s85 = int_to_ptr.vmem [resolvable:$true] %s84
      %90 = dma.hbm_to_vmem [thread:$0]  %s8, 32, %s85, [#allocation9], 16, 16, 1
    $region37: #{consrec_group_forward.10} parent=1 // pred_fallthru
      _
    // Predicated region
    $region38: #{consrec_group_forward.10} parent=1 // pred_check
      _
    $region39: #{consrec_group_forward.10} parent=1 // pred_check_branch
      %92 = sbr.rel (0) target = $region41
    $region40: #{consrec_group_forward.10} parent=1 // pred_region
      %s94 = ssub.s32 64, 64
      %95 = vsyncadd [#allocation12], %s94
      %s97 = sshll.u32 [#allocation11], 4
      %s98 = int_to_ptr.vmem [resolvable:$true] %s97
      %100 = dma.hbm_to_vmem [thread:$0]  %s9, 64, %s98, [#allocation12]
    $region41: #{consrec_group_forward.10} parent=1 // pred_fallthru
      _
    // Predicated region
    $region42: #{consrec_group_forward.10} parent=1 // pred_check
      _
    $region43: #{consrec_group_forward.10} parent=1 // pred_check_branch
      %102 = sbr.rel (0) target = $region45
    $region44: #{consrec_group_forward.10} parent=1 // pred_region
      %s104 = ssub.s32 16, 16
      %105 = vsyncadd [#allocation4], %s104
      %108 = dma.hbm_to_smem %s10, 16, [#allocation13], [#allocation4]
    $region45: #{consrec_group_forward.10} parent=1 // pred_fallthru
      _
    // Predicated region
    $region46: #{consrec_group_forward.10} parent=1 // pred_check
      _
    $region47: #{consrec_group_forward.10} parent=1 // pred_check_branch
      %110 = sbr.rel (0) target = $region49
    $region48: #{consrec_group_forward.10} parent=1 // pred_region
      %111 = dma.done [#allocation3], 128
    $region49: #{consrec_group_forward.10} parent=1 // pred_fallthru
      _
    // Predicated region
    $region50: #{consrec_group_forward.10} parent=1 // pred_check
      _
    $region51: #{consrec_group_forward.10} parent=1 // pred_check_branch
      %113 = sbr.rel (0) target = $region53
    $region52: #{consrec_group_forward.10} parent=1 // pred_region
      %114 = dma.done [#allocation6], 128
    $region53: #{consrec_group_forward.10} parent=1 // pred_fallthru
      _
    // Predicated region
    $region54: #{consrec_group_forward.10} parent=1 // pred_check
      _
    $region55: #{consrec_group_forward.10} parent=1 // pred_check_branch
      %116 = sbr.rel (0) target = $region57
    $region56: #{consrec_group_forward.10} parent=1 // pred_region
      %117 = dma.done [#allocation6], 128
    $region57: #{consrec_group_forward.10} parent=1 // pred_fallthru
      _
    // Predicated region
    $region58: #{consrec_group_forward.10} parent=1 // pred_check
      _
    $region59: #{consrec_group_forward.10} parent=1 // pred_check_branch
      %119 = sbr.rel (0) target = $region61
    $region60: #{consrec_group_forward.10} parent=1 // pred_region
      %120 = dma.done [#allocation9], 256
    $region61: #{consrec_group_forward.10} parent=1 // pred_fallthru
      _
    // Predicated region
    $region62: #{consrec_group_forward.10} parent=1 // pred_check
      _
    $region63: #{consrec_group_forward.10} parent=1 // pred_check_branch
      %122 = sbr.rel (0) target = $region65
    $region64: #{consrec_group_forward.10} parent=1 // pred_region
      %123 = dma.done [#allocation9], 32
    $region65: #{consrec_group_forward.10} parent=1 // pred_fallthru
      _
    // Predicated region
    $region66: #{consrec_group_forward.10} parent=1 // pred_check
      _
    $region67: #{consrec_group_forward.10} parent=1 // pred_check_branch
      %125 = sbr.rel (0) target = $region69
    $region68: #{consrec_group_forward.10} parent=1 // pred_region
      %126 = dma.done [#allocation12], 64
    $region69: #{consrec_group_forward.10} parent=1 // pred_fallthru
      _
    // Predicated region
    $region70: #{consrec_group_forward.10} parent=1 // pred_check
      _
    $region71: #{consrec_group_forward.10} parent=1 // pred_check_branch
      %128 = sbr.rel (0) target = $region73
    $region72: #{consrec_group_forward.10} parent=1 // pred_region
      %129 = dma.done [#allocation4], 16
    $region73: #{consrec_group_forward.10} parent=1 // pred_fallthru
      _
    %130 = sfence
    %v132 = vld [vmem:[#allocation2] sm:$0xf]
    %v133 = vld [vmem:[#allocation2 + $0x4] sm:$0xf]
    %v134 = vld [vmem:[#allocation5] sm:$0xf]
    %v135 = vld [vmem:[#allocation5 + $0x4] sm:$0xf]
    %v136 = vld [vmem:[%s2] sm:$0xf]
    %v137 = vld [vmem:[%s2 + $0x4] sm:$0xf]
    %v138 = vld [vmem:[%s2 + $0x8] sm:$0xf]
    %v139 = vld [vmem:[%s2 + $0xc] sm:$0xf]
    %v140 = vld [vmem:[%s2 + $0x10] sm:$0xf]
    %v141 = vld [vmem:[%s2 + $0x14] sm:$0xf]
    %v142 = vld [vmem:[#allocation7] sm:$0xf]
    %v143 = vld [vmem:[#allocation7 + $0x4] sm:$0xf]
    %v144 = vld [vmem:[#allocation8] sm:$0xf]
    %v145 = vld [vmem:[#allocation8 + $0x4] sm:$0xf]
    %v146 = vld [vmem:[#allocation8 + $0x8] sm:$0xf]
    %v147 = vld [vmem:[#allocation8 + $0xc] sm:$0xf]
    %v148 = vld [vmem:[%s5] sm:$0xff]
    %v149 = vld [vmem:[%s5 + $0x8] sm:$0xff]
    %v150 = vld [vmem:[#allocation11] sm:$0x7]
    %v151 = vunpack.c.l.bf16 %v142
    %v152 = vunpack.c.l.bf16 %v143
    %153 = vst [vmem:[%s11] sm:$0xff] %v151
    %154 = vst [vmem:[%s11 + $0x8] sm:$0xff] %v152
    %v155 = vunpack.c.l.bf16 %v144
    %v156 = vunpack.c.l.bf16 %v145
    %v157 = vunpack.c.l.bf16 %v146
    %v158 = vunpack.c.l.bf16 %v147
    %159 = vst [vmem:[%s11 + $0x10] sm:$0xff] %v155
    %160 = vst [vmem:[%s11 + $0x18] sm:$0xff] %v156
    %161 = vst [vmem:[%s11 + $0x20] sm:$0xff] %v157
    %162 = vst [vmem:[%s11 + $0x28] sm:$0xff] %v158
    %v165 = vunpack.c.l.b16 %v132
    %v166 = vunpack.c.l.b16 %v133
    %v167 = vpack.c.b16 %v166, %v165
    %v170 = vunpack.c.l.b16 %v142
    %v171 = vunpack.c.l.b16 %v143
    %v172 = vpack.c.b16 %v171, %v170
    %vm174 = vcmask 130048
    %v176 = vsel %vm174, %v167, 0
    %178 = vmatprep.subr.bf16.mxu0 0
    %179 = vmatpush1.bf16.msra.mxu0 0
    %180 = vmatprep.subr.bf16.mxu0 0
    %181 = vmatpush1.bf16.msra.mxu0 0
    %182 = vmatprep.subr.bf16.mxu0 0
    %183 = vmatpush1.bf16.msra.mxu0 0
    %184 = vmatprep.subr.bf16.mxu0 0
    %185 = vmatpush1.bf16.msra.mxu0 0
    %186 = vmatprep.subr.bf16.mxu0 0
    %187 = vmatpush1.bf16.msra.mxu0 0
    %188 = vmatprep.subr.bf16.mxu0 0
    %189 = vmatpush1.bf16.msra.mxu0 0
    %190 = vmatprep.subr.bf16.mxu0 0
    %191 = vmatpush1.bf16.msra.mxu0 0
    %192 = vmatprep.subr.bf16.mxu0 0
    %193 = vmatpush1.bf16.msra.mxu0 %v172
    %194 = vmatprep.subr.bf16.mxu0 0
    %195 = vmatpush2.bf16.msra.mxu0 0
    %196 = vmatprep.subr.bf16.mxu0 0
    %197 = vmatpush2.bf16.msra.mxu0 0
    %198 = vmatprep.subr.bf16.mxu0 0
    %199 = vmatpush2.bf16.msra.mxu0 0
    %200 = vmatprep.subr.bf16.mxu0 0
    %201 = vmatpush2.bf16.msra.mxu0 0
    %202 = vmatprep.subr.bf16.mxu0 0
    %203 = vmatpush2.bf16.msra.mxu0 0
    %204 = vmatprep.subr.bf16.mxu0 0
    %205 = vmatpush2.bf16.msra.mxu0 0
    %206 = vmatprep.subr.bf16.mxu0 0
    %207 = vmatpush2.bf16.msra.mxu0 0
    %208 = vmatprep.subr.bf16.mxu0 0
    %209 = vmatpush2.bf16.msra.mxu0 0
    %210 = vmatprep.mubr.bf16.mxu0 0
    %211 = vmatmul.mubr.bf16.gmra.mxu0 %v176
    %v212 = vpop.f32.mrf.mxu0
    %v213 = vadd.f32 0.0, %v212
    %v214 = vpop.f32.mrf.mxu0
    %v215 = vpop.f32.mrf.mxu0
    %v216 = vadd.f32 0.0, %v215
    %v217 = vpop.f32.mrf.mxu0
    %218 = vdwg.mxu0
    %v221 = vunpack.c.l.b16 %v134
    %v222 = vunpack.c.l.b16 %v135
    %v223 = vpack.c.b16 %v222, %v221
    %v228 = vunpack.c.l.b16 %v144
    %v229 = vunpack.c.l.b16 %v145
    %v230 = vunpack.c.l.b16 %v146
    %v231 = vunpack.c.l.b16 %v147
    %v232 = vpack.c.b16 %v229, %v228
    %v233 = vpack.c.b16 %v231, %v230
    %vm236 = vcmask 261120
    %v238 = vsel %vm236, %v223, 0
    %240 = vmatprep.subr.bf16.mxu0 0
    %241 = vmatpush1.bf16.msra.mxu0 0
    %242 = vmatprep.subr.bf16.mxu0 0
    %243 = vmatpush1.bf16.msra.mxu0 0
    %244 = vmatprep.subr.bf16.mxu0 0
    %245 = vmatpush1.bf16.msra.mxu0 0
    %246 = vmatprep.subr.bf16.mxu0 0
    %247 = vmatpush1.bf16.msra.mxu0 0
    %248 = vmatprep.subr.bf16.mxu0 0
    %249 = vmatpush1.bf16.msra.mxu0 0
    %250 = vmatprep.subr.bf16.mxu0 0
    %251 = vmatpush1.bf16.msra.mxu0 0
    %252 = vmatprep.subr.bf16.mxu0 0
    %253 = vmatpush1.bf16.msra.mxu0 %v233
    %254 = vmatprep.subr.bf16.mxu0 0
    %255 = vmatpush1.bf16.msra.mxu0 %v232
    %256 = vmatprep.subr.bf16.mxu0 0
    %257 = vmatpush2.bf16.msra.mxu0 0
    %258 = vmatprep.subr.bf16.mxu0 0
    %259 = vmatpush2.bf16.msra.mxu0 0
    %260 = vmatprep.subr.bf16.mxu0 0
    %261 = vmatpush2.bf16.msra.mxu0 0
    %262 = vmatprep.subr.bf16.mxu0 0
    %263 = vmatpush2.bf16.msra.mxu0 0
    %264 = vmatprep.subr.bf16.mxu0 0
    %265 = vmatpush2.bf16.msra.mxu0 0
    %266 = vmatprep.subr.bf16.mxu0 0
    %267 = vmatpush2.bf16.msra.mxu0 0
    %268 = vmatprep.subr.bf16.mxu0 0
    %269 = vmatpush2.bf16.msra.mxu0 0
    %270 = vmatprep.subr.bf16.mxu0 0
    %271 = vmatpush2.bf16.msra.mxu0 0
    %272 = vmatprep.mubr.bf16.mxu0 0
    %273 = vmatmul.mubr.bf16.gmra.mxu0 %v238
    %v274 = vpop.f32.mrf.mxu0
    %v275 = vadd.f32 0.0, %v274
    %v276 = vpop.f32.mrf.mxu0
    %v277 = vpop.f32.mrf.mxu0
    %v278 = vadd.f32 0.0, %v277
    %v279 = vpop.f32.mrf.mxu0
    %280 = vdwg.mxu0
    %v281 = vmul.f32 %v275, %v148
    %v282 = vmul.f32 %v278, %v149
    %v283 = vpack.c.bf16 %v216, %v213
    %v284 = vld [vmem:[%s7] sm:$0xf]
    %v285 = vld [vmem:[%s7 + $0x4] sm:$0xf]
    %v286 = vld [vmem:[%s7 + $0x8] sm:$0xf]
    %v287 = vld [vmem:[%s7 + $0xc] sm:$0xf]
    %v288 = vld [vmem:[%s7 + $0x10] sm:$0xf]
    %v289 = vld [vmem:[%s7 + $0x14] sm:$0xf]
    %v290 = vld [vmem:[%s7 + $0x18] sm:$0xf]
    %v291 = vld [vmem:[%s7 + $0x1c] sm:$0xf]
    %v292 = vld [vmem:[%s7 + $0x20] sm:$0xf]
    %v293 = vld [vmem:[%s7 + $0x24] sm:$0xf]
    %v294 = vld [vmem:[%s7 + $0x28] sm:$0xf]
    %v295 = vld [vmem:[%s7 + $0x2c] sm:$0xf]
    %v296 = vld [vmem:[%s7 + $0x30] sm:$0xf]
    %v297 = vld [vmem:[%s7 + $0x34] sm:$0xf]
    %v298 = vld [vmem:[%s7 + $0x38] sm:$0xf]
    %v299 = vld [vmem:[%s7 + $0x3c] sm:$0xf]
    %v300 = vpack.c.bf16 %v278, %v275
    %s301 = scalar_lea.vmem %s7, 64
    %v302 = vld [vmem:[%s301] sm:$0xf]
    %v303 = vld [vmem:[%s301 + $0x4] sm:$0xf]
    %v304 = vld [vmem:[%s301 + $0x8] sm:$0xf]
    %v305 = vld [vmem:[%s301 + $0xc] sm:$0xf]
    %v306 = vld [vmem:[%s301 + $0x10] sm:$0xf]
    %v307 = vld [vmem:[%s301 + $0x14] sm:$0xf]
    %v308 = vld [vmem:[%s301 + $0x18] sm:$0xf]
    %v309 = vld [vmem:[%s301 + $0x1c] sm:$0xf]
    %v310 = vld [vmem:[%s301 + $0x20] sm:$0xf]
    %v311 = vld [vmem:[%s301 + $0x24] sm:$0xf]
    %v312 = vld [vmem:[%s301 + $0x28] sm:$0xf]
    %v313 = vld [vmem:[%s301 + $0x2c] sm:$0xf]
    %v314 = vld [vmem:[%s301 + $0x30] sm:$0xf]
    %v315 = vld [vmem:[%s301 + $0x34] sm:$0xf]
    %v316 = vld [vmem:[%s301 + $0x38] sm:$0xf]
    %v317 = vld [vmem:[%s301 + $0x3c] sm:$0xf]
    %v334 = vunpack.c.l.b16 %v302
    %v335 = vunpack.c.l.b16 %v303
    %v336 = vunpack.c.l.b16 %v304
    %v337 = vunpack.c.l.b16 %v305
    %v338 = vunpack.c.l.b16 %v306
    %v339 = vunpack.c.l.b16 %v307
    %v340 = vunpack.c.l.b16 %v308
    %v341 = vunpack.c.l.b16 %v309
    %v342 = vunpack.c.l.b16 %v310
    %v343 = vunpack.c.l.b16 %v311
    %v344 = vunpack.c.l.b16 %v312
    %v345 = vunpack.c.l.b16 %v313
    %v346 = vunpack.c.l.b16 %v314
    %v347 = vunpack.c.l.b16 %v315
    %v348 = vunpack.c.l.b16 %v316
    %v349 = vunpack.c.l.b16 %v317
    %v350 = vpack.c.b16 %v335, %v334
    %v351 = vpack.c.b16 %v337, %v336
    %v352 = vpack.c.b16 %v339, %v338
    %v353 = vpack.c.b16 %v341, %v340
    %v354 = vpack.c.b16 %v343, %v342
    %v355 = vpack.c.b16 %v345, %v344
    %v356 = vpack.c.b16 %v347, %v346
    %v357 = vpack.c.b16 %v349, %v348
    %366 = vmatprep.subr.bf16.mxu0 0
    %367 = vmatpush1.bf16.msra.mxu0 %v357
    %368 = vmatprep.subr.bf16.mxu0 0
    %369 = vmatpush1.bf16.msra.mxu0 %v356
    %370 = vmatprep.subr.bf16.mxu0 0
    %371 = vmatpush1.bf16.msra.mxu0 %v355
    %372 = vmatprep.subr.bf16.mxu0 0
    %373 = vmatpush1.bf16.msra.mxu0 %v354
    %374 = vmatprep.subr.bf16.mxu0 0
    %375 = vmatpush1.bf16.msra.mxu0 %v353
    %376 = vmatprep.subr.bf16.mxu0 0
    %377 = vmatpush1.bf16.msra.mxu0 %v352
    %378 = vmatprep.subr.bf16.mxu0 0
    %379 = vmatpush1.bf16.msra.mxu0 %v351
    %380 = vmatprep.subr.bf16.mxu0 0
    %381 = vmatpush1.bf16.msra.mxu0 %v350
    %382 = vmatprep.subr.bf16.mxu0 0
    %383 = vmatpush2.bf16.msra.mxu0 0
    %384 = vmatprep.subr.bf16.mxu0 0
    %385 = vmatpush2.bf16.msra.mxu0 0
    %386 = vmatprep.subr.bf16.mxu0 0
    %387 = vmatpush2.bf16.msra.mxu0 0
    %388 = vmatprep.subr.bf16.mxu0 0
    %389 = vmatpush2.bf16.msra.mxu0 0
    %390 = vmatprep.subr.bf16.mxu0 0
    %391 = vmatpush2.bf16.msra.mxu0 0
    %392 = vmatprep.subr.bf16.mxu0 0
    %393 = vmatpush2.bf16.msra.mxu0 0
    %394 = vmatprep.subr.bf16.mxu0 0
    %395 = vmatpush2.bf16.msra.mxu0 0
    %396 = vmatprep.subr.bf16.mxu0 0
    %397 = vmatpush2.bf16.msra.mxu0 0
    %398 = vmatprep.mubr.bf16.mxu0 0
    %399 = vmatmul.mubr.bf16.gmra.mxu0 %v300
    %v400 = vpop.f32.mrf.mxu0
    %v401 = vadd.f32 0.0, %v400
    %v402 = vpop.f32.mrf.mxu0
    %v403 = vpop.f32.mrf.mxu0
    %v404 = vadd.f32 0.0, %v403
    %v405 = vpop.f32.mrf.mxu0
    %406 = vdwg.mxu0
    %v423 = vunpack.c.l.b16 %v284
    %v424 = vunpack.c.l.b16 %v285
    %v425 = vunpack.c.l.b16 %v286
    %v426 = vunpack.c.l.b16 %v287
    %v427 = vunpack.c.l.b16 %v288
    %v428 = vunpack.c.l.b16 %v289
    %v429 = vunpack.c.l.b16 %v290
    %v430 = vunpack.c.l.b16 %v291
    %v431 = vunpack.c.l.b16 %v292
    %v432 = vunpack.c.l.b16 %v293
    %v433 = vunpack.c.l.b16 %v294
    %v434 = vunpack.c.l.b16 %v295
    %v435 = vunpack.c.l.b16 %v296
    %v436 = vunpack.c.l.b16 %v297
    %v437 = vunpack.c.l.b16 %v298
    %v438 = vunpack.c.l.b16 %v299
    %v439 = vpack.c.b16 %v424, %v423
    %v440 = vpack.c.b16 %v426, %v425
    %v441 = vpack.c.b16 %v428, %v427
    %v442 = vpack.c.b16 %v430, %v429
    %v443 = vpack.c.b16 %v432, %v431
    %v444 = vpack.c.b16 %v434, %v433
    %v445 = vpack.c.b16 %v436, %v435
    %v446 = vpack.c.b16 %v438, %v437
    %455 = vmatprep.subr.bf16.mxu0 0
    %456 = vmatpush1.bf16.msra.mxu0 %v446
    %457 = vmatprep.subr.bf16.mxu0 0
    %458 = vmatpush1.bf16.msra.mxu0 %v445
    %459 = vmatprep.subr.bf16.mxu0 0
    %460 = vmatpush1.bf16.msra.mxu0 %v444
    %461 = vmatprep.subr.bf16.mxu0 0
    %462 = vmatpush1.bf16.msra.mxu0 %v443
    %463 = vmatprep.subr.bf16.mxu0 0
    %464 = vmatpush1.bf16.msra.mxu0 %v442
    %465 = vmatprep.subr.bf16.mxu0 0
    %466 = vmatpush1.bf16.msra.mxu0 %v441
    %467 = vmatprep.subr.bf16.mxu0 0
    %468 = vmatpush1.bf16.msra.mxu0 %v440
    %469 = vmatprep.subr.bf16.mxu0 0
    %470 = vmatpush1.bf16.msra.mxu0 %v439
    %471 = vmatprep.subr.bf16.mxu0 0
    %472 = vmatpush2.bf16.msra.mxu0 0
    %473 = vmatprep.subr.bf16.mxu0 0
    %474 = vmatpush2.bf16.msra.mxu0 0
    %475 = vmatprep.subr.bf16.mxu0 0
    %476 = vmatpush2.bf16.msra.mxu0 0
    %477 = vmatprep.subr.bf16.mxu0 0
    %478 = vmatpush2.bf16.msra.mxu0 0
    %479 = vmatprep.subr.bf16.mxu0 0
    %480 = vmatpush2.bf16.msra.mxu0 0
    %481 = vmatprep.subr.bf16.mxu0 0
    %482 = vmatpush2.bf16.msra.mxu0 0
    %483 = vmatprep.subr.bf16.mxu0 0
    %484 = vmatpush2.bf16.msra.mxu0 0
    %485 = vmatprep.subr.bf16.mxu0 0
    %486 = vmatpush2.bf16.msra.mxu0 0
    %487 = vmatprep.mubr.bf16.mxu0 0
    %488 = vmatmul.mubr.bf16.gmra.mxu0 %v283
    %v489 = vpop.f32.mrf.mxu0
    %v490 = vadd.f32 %v401, %v489
    %v491 = vpop.f32.mrf.mxu0
    %v492 = vpop.f32.mrf.mxu0
    %v493 = vadd.f32 %v404, %v492
    %v494 = vpop.f32.mrf.mxu0
    %495 = vdwg.mxu0
    %v496 = vpack.c.bf16 %v282, %v281
    %s497 = scalar_lea.vmem %s7, 128
    %v498 = vld [vmem:[%s497] sm:$0xf]
    %v499 = vld [vmem:[%s497 + $0x4] sm:$0xf]
    %v500 = vld [vmem:[%s497 + $0x8] sm:$0xf]
    %v501 = vld [vmem:[%s497 + $0xc] sm:$0xf]
    %v502 = vld [vmem:[%s497 + $0x10] sm:$0xf]
    %v503 = vld [vmem:[%s497 + $0x14] sm:$0xf]
    %v504 = vld [vmem:[%s497 + $0x18] sm:$0xf]
    %v505 = vld [vmem:[%s497 + $0x1c] sm:$0xf]
    %v506 = vld [vmem:[%s497 + $0x20] sm:$0xf]
    %v507 = vld [vmem:[%s497 + $0x24] sm:$0xf]
    %v508 = vld [vmem:[%s497 + $0x28] sm:$0xf]
    %v509 = vld [vmem:[%s497 + $0x2c] sm:$0xf]
    %v510 = vld [vmem:[%s497 + $0x30] sm:$0xf]
    %v511 = vld [vmem:[%s497 + $0x34] sm:$0xf]
    %v512 = vld [vmem:[%s497 + $0x38] sm:$0xf]
    %v513 = vld [vmem:[%s497 + $0x3c] sm:$0xf]
    %v530 = vunpack.c.l.b16 %v498
    %v531 = vunpack.c.l.b16 %v499
    %v532 = vunpack.c.l.b16 %v500
    %v533 = vunpack.c.l.b16 %v501
    %v534 = vunpack.c.l.b16 %v502
    %v535 = vunpack.c.l.b16 %v503
    %v536 = vunpack.c.l.b16 %v504
    %v537 = vunpack.c.l.b16 %v505
    %v538 = vunpack.c.l.b16 %v506
    %v539 = vunpack.c.l.b16 %v507
    %v540 = vunpack.c.l.b16 %v508
    %v541 = vunpack.c.l.b16 %v509
    %v542 = vunpack.c.l.b16 %v510
    %v543 = vunpack.c.l.b16 %v511
    %v544 = vunpack.c.l.b16 %v512
    %v545 = vunpack.c.l.b16 %v513
    %v546 = vpack.c.b16 %v531, %v530
    %v547 = vpack.c.b16 %v533, %v532
    %v548 = vpack.c.b16 %v535, %v534
    %v549 = vpack.c.b16 %v537, %v536
    %v550 = vpack.c.b16 %v539, %v538
    %v551 = vpack.c.b16 %v541, %v540
    %v552 = vpack.c.b16 %v543, %v542
    %v553 = vpack.c.b16 %v545, %v544
    %562 = vmatprep.subr.bf16.mxu0 0
    %563 = vmatpush1.bf16.msra.mxu0 %v553
    %564 = vmatprep.subr.bf16.mxu0 0
    %565 = vmatpush1.bf16.msra.mxu0 %v552
    %566 = vmatprep.subr.bf16.mxu0 0
    %567 = vmatpush1.bf16.msra.mxu0 %v551
    %568 = vmatprep.subr.bf16.mxu0 0
    %569 = vmatpush1.bf16.msra.mxu0 %v550
    %570 = vmatprep.subr.bf16.mxu0 0
    %571 = vmatpush1.bf16.msra.mxu0 %v549
    %572 = vmatprep.subr.bf16.mxu0 0
    %573 = vmatpush1.bf16.msra.mxu0 %v548
    %574 = vmatprep.subr.bf16.mxu0 0
    %575 = vmatpush1.bf16.msra.mxu0 %v547
    %576 = vmatprep.subr.bf16.mxu0 0
    %577 = vmatpush1.bf16.msra.mxu0 %v546
    %578 = vmatprep.subr.bf16.mxu0 0
    %579 = vmatpush2.bf16.msra.mxu0 0
    %580 = vmatprep.subr.bf16.mxu0 0
    %581 = vmatpush2.bf16.msra.mxu0 0
    %582 = vmatprep.subr.bf16.mxu0 0
    %583 = vmatpush2.bf16.msra.mxu0 0
    %584 = vmatprep.subr.bf16.mxu0 0
    %585 = vmatpush2.bf16.msra.mxu0 0
    %586 = vmatprep.subr.bf16.mxu0 0
    %587 = vmatpush2.bf16.msra.mxu0 0
    %588 = vmatprep.subr.bf16.mxu0 0
    %589 = vmatpush2.bf16.msra.mxu0 0
    %590 = vmatprep.subr.bf16.mxu0 0
    %591 = vmatpush2.bf16.msra.mxu0 0
    %592 = vmatprep.subr.bf16.mxu0 0
    %593 = vmatpush2.bf16.msra.mxu0 0
    %594 = vmatprep.mubr.bf16.mxu0 0
    %595 = vmatmul.mubr.bf16.gmra.mxu0 %v496
    %v596 = vpop.f32.mrf.mxu0
    %v597 = vadd.f32 0.0, %v596
    %v598 = vpop.f32.mrf.mxu0
    %v599 = vpop.f32.mrf.mxu0
    %v600 = vadd.f32 0.0, %v599
    %v601 = vpop.f32.mrf.mxu0
    %602 = vdwg.mxu0
    %v603 = vadd.f32 %v490, %v597
    %v604 = vadd.f32 %v493, %v600
    %v605 = vld [vmem:[#allocation10] sm:$0x1]
    %v607 = vlaneseq
    %v608 = vshrl.u32 %v607, 7
    %v609 = vsub.s32 0, %v608
    %v610 = vrot.slane %v605, %v609
    %v612 = vadd.f32 %v603, %v610
    %v613 = vadd.f32 %v604, %v610
    %v614 = vpack.c.bf16 %v613, %v612
    %v621 = vunpack.c.l.b16 %v136
    %v622 = vunpack.c.l.b16 %v137
    %v623 = vunpack.c.l.b16 %v138
    %v624 = vunpack.c.l.b16 %v139
    %v625 = vunpack.c.l.b16 %v140
    %v626 = vunpack.c.l.b16 %v141
    %v627 = vpack.c.b16 %v622, %v621
    %v628 = vpack.c.b16 %v624, %v623
    %v629 = vpack.c.b16 %v626, %v625
    %v631 = vsel %vm174, %v627, 0
    %v634 = vsel %vm174, %v628, 0
    %v637 = vsel %vm174, %v629, 0
    %639 = vmatprep.subr.bf16.mxu0 0
    %640 = vmatpush1.bf16.msra.mxu0 0
    %641 = vmatprep.subr.bf16.mxu0 0
    %642 = vmatpush1.bf16.msra.mxu0 0
    %643 = vmatprep.subr.bf16.mxu0 0
    %644 = vmatpush1.bf16.msra.mxu0 0
    %645 = vmatprep.subr.bf16.mxu0 0
    %646 = vmatpush1.bf16.msra.mxu0 0
    %647 = vmatprep.subr.bf16.mxu0 0
    %648 = vmatpush1.bf16.msra.mxu0 0
    %649 = vmatprep.subr.bf16.mxu0 0
    %650 = vmatpush1.bf16.msra.mxu0 0
    %651 = vmatprep.subr.bf16.mxu0 0
    %652 = vmatpush1.bf16.msra.mxu0 0
    %653 = vmatprep.subr.bf16.mxu0 0
    %654 = vmatpush1.bf16.msra.mxu0 %v614
    %655 = vmatprep.subr.bf16.mxu0 0
    %656 = vmatpush2.bf16.msra.mxu0 0
    %657 = vmatprep.subr.bf16.mxu0 0
    %658 = vmatpush2.bf16.msra.mxu0 0
    %659 = vmatprep.subr.bf16.mxu0 0
    %660 = vmatpush2.bf16.msra.mxu0 0
    %661 = vmatprep.subr.bf16.mxu0 0
    %662 = vmatpush2.bf16.msra.mxu0 0
    %663 = vmatprep.subr.bf16.mxu0 0
    %664 = vmatpush2.bf16.msra.mxu0 0
    %665 = vmatprep.subr.bf16.mxu0 0
    %666 = vmatpush2.bf16.msra.mxu0 0
    %667 = vmatprep.subr.bf16.mxu0 0
    %668 = vmatpush2.bf16.msra.mxu0 0
    %669 = vmatprep.subr.bf16.mxu0 0
    %670 = vmatpush2.bf16.msra.mxu0 0
    %671 = vmatprep.mubr.bf16.mxu0 0
    %672 = vmatmul.mubr.bf16.gmra.mxu0 %v631
    %v673 = vpop.f32.mrf.mxu0
    %v674 = vadd.f32 0.0, %v673
    %v675 = vpop.f32.mrf.mxu0
    %v676 = vpop.f32.mrf.mxu0
    %v677 = vadd.f32 0.0, %v676
    %v678 = vpop.f32.mrf.mxu0
    %679 = vmatprep.mubr.bf16.mxu0 0
    %680 = vmatmul.mubr.bf16.gmra.mxu0 %v634
    %v681 = vpop.f32.mrf.mxu0
    %v682 = vadd.f32 0.0, %v681
    %v683 = vpop.f32.mrf.mxu0
    %v684 = vpop.f32.mrf.mxu0
    %v685 = vadd.f32 0.0, %v684
    %v686 = vpop.f32.mrf.mxu0
    %687 = vmatprep.mubr.bf16.mxu0 0
    %688 = vmatmul.mubr.bf16.gmra.mxu0 %v637
    %v689 = vpop.f32.mrf.mxu0
    %v690 = vadd.f32 0.0, %v689
    %v691 = vpop.f32.mrf.mxu0
    %v692 = vpop.f32.mrf.mxu0
    %v693 = vadd.f32 0.0, %v692
    %v694 = vpop.f32.mrf.mxu0
    %695 = vdwg.mxu0
    %v696 = vadd.f32 %v148, %v612
    %v697 = vadd.f32 %v149, %v613
    %v698 = vld [vmem:[%s11] sm:$0xff]
    %v699 = vld [vmem:[%s11 + $0x8] sm:$0xff]
    %v700 = vld [vmem:[%s11 + $0x10] sm:$0xff]
    %v701 = vld [vmem:[%s11 + $0x18] sm:$0xff]
    %v702 = vld [vmem:[%s11 + $0x20] sm:$0xff]
    %v703 = vld [vmem:[%s11 + $0x28] sm:$0xff]
    %v704 = vadd.f32 %v698, %v674
    %v705 = vadd.f32 %v699, %v677
    %v706 = vadd.f32 %v700, %v682
    %v707 = vadd.f32 %v701, %v685
    %v708 = vadd.f32 %v702, %v690
    %v709 = vadd.f32 %v703, %v693
    %710 = vst [vmem:[%s11] sm:$0xff] %v704
    %711 = vst [vmem:[%s11 + $0x8] sm:$0xff] %v705
    %712 = vst [vmem:[%s11 + $0x10] sm:$0xff] %v706
    %713 = vst [vmem:[%s11 + $0x18] sm:$0xff] %v707
    %714 = vst [vmem:[%s11 + $0x20] sm:$0xff] %v708
    %715 = vst [vmem:[%s11 + $0x28] sm:$0xff] %v709
    %v716 = vpack.c.bf16 %v677, %v674
    %v717 = vpack.c.bf16 %v685, %v682
    %v718 = vpack.c.bf16 %v693, %v690
    %719 = vmatprep.subr.bf16.mxu0 0
    %720 = vmatpush1.bf16.msra.mxu0 0
    %721 = vmatprep.subr.bf16.mxu0 0
    %722 = vmatpush1.bf16.msra.mxu0 0
    %723 = vmatprep.subr.bf16.mxu0 0
    %724 = vmatpush1.bf16.msra.mxu0 0
    %725 = vmatprep.subr.bf16.mxu0 0
    %726 = vmatpush1.bf16.msra.mxu0 0
    %727 = vmatprep.subr.bf16.mxu0 0
    %728 = vmatpush1.bf16.msra.mxu0 0
    %729 = vmatprep.subr.bf16.mxu0 0
    %730 = vmatpush1.bf16.msra.mxu0 0
    %731 = vmatprep.subr.bf16.mxu0 0
    %732 = vmatpush1.bf16.msra.mxu0 0
    %733 = vmatprep.subr.bf16.mxu0 0
    %734 = vmatpush1.bf16.msra.mxu0 %v716
    %735 = vmatprep.subr.bf16.mxu0 0
    %736 = vmatpush2.bf16.msra.mxu0 0
    %737 = vmatprep.subr.bf16.mxu0 0
    %738 = vmatpush2.bf16.msra.mxu0 0
    %739 = vmatprep.subr.bf16.mxu0 0
    %740 = vmatpush2.bf16.msra.mxu0 0
    %741 = vmatprep.subr.bf16.mxu0 0
    %742 = vmatpush2.bf16.msra.mxu0 0
    %743 = vmatprep.subr.bf16.mxu0 0
    %744 = vmatpush2.bf16.msra.mxu0 0
    %745 = vmatprep.subr.bf16.mxu0 0
    %746 = vmatpush2.bf16.msra.mxu0 0
    %747 = vmatprep.subr.bf16.mxu0 0
    %748 = vmatpush2.bf16.msra.mxu0 0
    %749 = vmatprep.subr.bf16.mxu0 0
    %750 = vmatpush2.bf16.msra.mxu0 0
    %751 = vmatprep.mubr.bf16.mxu0 0
    %752 = vmatmul.mubr.bf16.gmra.mxu0 %v176
    %v753 = vpop.f32.mrf.mxu0
    %v754 = vadd.f32 0.0, %v753
    %v755 = vpop.f32.mrf.mxu0
    %v756 = vpop.f32.mrf.mxu0
    %v757 = vadd.f32 0.0, %v756
    %v758 = vpop.f32.mrf.mxu0
    %759 = vdwg.mxu0
    %760 = vmatprep.subr.bf16.mxu0 0
    %761 = vmatpush1.bf16.msra.mxu0 0
    %762 = vmatprep.subr.bf16.mxu0 0
    %763 = vmatpush1.bf16.msra.mxu0 0
    %764 = vmatprep.subr.bf16.mxu0 0
    %765 = vmatpush1.bf16.msra.mxu0 0
    %766 = vmatprep.subr.bf16.mxu0 0
    %767 = vmatpush1.bf16.msra.mxu0 0
    %768 = vmatprep.subr.bf16.mxu0 0
    %769 = vmatpush1.bf16.msra.mxu0 0
    %770 = vmatprep.subr.bf16.mxu0 0
    %771 = vmatpush1.bf16.msra.mxu0 0
    %772 = vmatprep.subr.bf16.mxu0 0
    %773 = vmatpush1.bf16.msra.mxu0 %v718
    %774 = vmatprep.subr.bf16.mxu0 0
    %775 = vmatpush1.bf16.msra.mxu0 %v717
    %776 = vmatprep.subr.bf16.mxu0 0
    %777 = vmatpush2.bf16.msra.mxu0 0
    %778 = vmatprep.subr.bf16.mxu0 0
    %779 = vmatpush2.bf16.msra.mxu0 0
    %780 = vmatprep.subr.bf16.mxu0 0
    %781 = vmatpush2.bf16.msra.mxu0 0
    %782 = vmatprep.subr.bf16.mxu0 0
    %783 = vmatpush2.bf16.msra.mxu0 0
    %784 = vmatprep.subr.bf16.mxu0 0
    %785 = vmatpush2.bf16.msra.mxu0 0
    %786 = vmatprep.subr.bf16.mxu0 0
    %787 = vmatpush2.bf16.msra.mxu0 0
    %788 = vmatprep.subr.bf16.mxu0 0
    %789 = vmatpush2.bf16.msra.mxu0 0
    %790 = vmatprep.subr.bf16.mxu0 0
    %791 = vmatpush2.bf16.msra.mxu0 0
    %792 = vmatprep.mubr.bf16.mxu0 0
    %793 = vmatmul.mubr.bf16.gmra.mxu0 %v238
    %v794 = vpop.f32.mrf.mxu0
    %v795 = vadd.f32 0.0, %v794
    %v796 = vpop.f32.mrf.mxu0
    %v797 = vpop.f32.mrf.mxu0
    %v798 = vadd.f32 0.0, %v797
    %v799 = vpop.f32.mrf.mxu0
    %800 = vdwg.mxu0
    %v801 = vmul.f32 %v795, %v148
    %v802 = vmul.f32 %v798, %v149
    %v803 = vpack.c.bf16 %v757, %v754
    %s804 = scalar_lea.vmem %s7, 192
    %v805 = vld [vmem:[%s804] sm:$0xf]
    %v806 = vld [vmem:[%s804 + $0x4] sm:$0xf]
    %v807 = vld [vmem:[%s804 + $0x8] sm:$0xf]
    %v808 = vld [vmem:[%s804 + $0xc] sm:$0xf]
    %v809 = vld [vmem:[%s804 + $0x10] sm:$0xf]
    %v810 = vld [vmem:[%s804 + $0x14] sm:$0xf]
    %v811 = vld [vmem:[%s804 + $0x18] sm:$0xf]
    %v812 = vld [vmem:[%s804 + $0x1c] sm:$0xf]
    %v813 = vld [vmem:[%s804 + $0x20] sm:$0xf]
    %v814 = vld [vmem:[%s804 + $0x24] sm:$0xf]
    %v815 = vld [vmem:[%s804 + $0x28] sm:$0xf]
    %v816 = vld [vmem:[%s804 + $0x2c] sm:$0xf]
    %v817 = vld [vmem:[%s804 + $0x30] sm:$0xf]
    %v818 = vld [vmem:[%s804 + $0x34] sm:$0xf]
    %v819 = vld [vmem:[%s804 + $0x38] sm:$0xf]
    %v820 = vld [vmem:[%s804 + $0x3c] sm:$0xf]
    %v821 = vpack.c.bf16 %v798, %v795
    %s822 = scalar_lea.vmem %s7, 256
    %v823 = vld [vmem:[%s822] sm:$0xf]
    %v824 = vld [vmem:[%s822 + $0x4] sm:$0xf]
    %v825 = vld [vmem:[%s822 + $0x8] sm:$0xf]
    %v826 = vld [vmem:[%s822 + $0xc] sm:$0xf]
    %v827 = vld [vmem:[%s822 + $0x10] sm:$0xf]
    %v828 = vld [vmem:[%s822 + $0x14] sm:$0xf]
    %v829 = vld [vmem:[%s822 + $0x18] sm:$0xf]
    %v830 = vld [vmem:[%s822 + $0x1c] sm:$0xf]
    %v831 = vld [vmem:[%s822 + $0x20] sm:$0xf]
    %v832 = vld [vmem:[%s822 + $0x24] sm:$0xf]
    %v833 = vld [vmem:[%s822 + $0x28] sm:$0xf]
    %v834 = vld [vmem:[%s822 + $0x2c] sm:$0xf]
    %v835 = vld [vmem:[%s822 + $0x30] sm:$0xf]
    %v836 = vld [vmem:[%s822 + $0x34] sm:$0xf]
    %v837 = vld [vmem:[%s822 + $0x38] sm:$0xf]
    %v838 = vld [vmem:[%s822 + $0x3c] sm:$0xf]
    %v855 = vunpack.c.l.b16 %v823
    %v856 = vunpack.c.l.b16 %v824
    %v857 = vunpack.c.l.b16 %v825
    %v858 = vunpack.c.l.b16 %v826
    %v859 = vunpack.c.l.b16 %v827
    %v860 = vunpack.c.l.b16 %v828
    %v861 = vunpack.c.l.b16 %v829
    %v862 = vunpack.c.l.b16 %v830
    %v863 = vunpack.c.l.b16 %v831
    %v864 = vunpack.c.l.b16 %v832
    %v865 = vunpack.c.l.b16 %v833
    %v866 = vunpack.c.l.b16 %v834
    %v867 = vunpack.c.l.b16 %v835
    %v868 = vunpack.c.l.b16 %v836
    %v869 = vunpack.c.l.b16 %v837
    %v870 = vunpack.c.l.b16 %v838
    %v871 = vpack.c.b16 %v856, %v855
    %v872 = vpack.c.b16 %v858, %v857
    %v873 = vpack.c.b16 %v860, %v859
    %v874 = vpack.c.b16 %v862, %v861
    %v875 = vpack.c.b16 %v864, %v863
    %v876 = vpack.c.b16 %v866, %v865
    %v877 = vpack.c.b16 %v868, %v867
    %v878 = vpack.c.b16 %v870, %v869
    %887 = vmatprep.subr.bf16.mxu0 0
    %888 = vmatpush1.bf16.msra.mxu0 %v878
    %889 = vmatprep.subr.bf16.mxu0 0
    %890 = vmatpush1.bf16.msra.mxu0 %v877
    %891 = vmatprep.subr.bf16.mxu0 0
    %892 = vmatpush1.bf16.msra.mxu0 %v876
    %893 = vmatprep.subr.bf16.mxu0 0
    %894 = vmatpush1.bf16.msra.mxu0 %v875
    %895 = vmatprep.subr.bf16.mxu0 0
    %896 = vmatpush1.bf16.msra.mxu0 %v874
    %897 = vmatprep.subr.bf16.mxu0 0
    %898 = vmatpush1.bf16.msra.mxu0 %v873
    %899 = vmatprep.subr.bf16.mxu0 0
    %900 = vmatpush1.bf16.msra.mxu0 %v872
    %901 = vmatprep.subr.bf16.mxu0 0
    %902 = vmatpush1.bf16.msra.mxu0 %v871
    %903 = vmatprep.subr.bf16.mxu0 0
    %904 = vmatpush2.bf16.msra.mxu0 0
    %905 = vmatprep.subr.bf16.mxu0 0
    %906 = vmatpush2.bf16.msra.mxu0 0
    %907 = vmatprep.subr.bf16.mxu0 0
    %908 = vmatpush2.bf16.msra.mxu0 0
    %909 = vmatprep.subr.bf16.mxu0 0
    %910 = vmatpush2.bf16.msra.mxu0 0
    %911 = vmatprep.subr.bf16.mxu0 0
    %912 = vmatpush2.bf16.msra.mxu0 0
    %913 = vmatprep.subr.bf16.mxu0 0
    %914 = vmatpush2.bf16.msra.mxu0 0
    %915 = vmatprep.subr.bf16.mxu0 0
    %916 = vmatpush2.bf16.msra.mxu0 0
    %917 = vmatprep.subr.bf16.mxu0 0
    %918 = vmatpush2.bf16.msra.mxu0 0
    %919 = vmatprep.mubr.bf16.mxu0 0
    %920 = vmatmul.mubr.bf16.gmra.mxu0 %v821
    %v921 = vpop.f32.mrf.mxu0
    %v922 = vadd.f32 0.0, %v921
    %v923 = vpop.f32.mrf.mxu0
    %v924 = vpop.f32.mrf.mxu0
    %v925 = vadd.f32 0.0, %v924
    %v926 = vpop.f32.mrf.mxu0
    %927 = vdwg.mxu0
    %v944 = vunpack.c.l.b16 %v805
    %v945 = vunpack.c.l.b16 %v806
    %v946 = vunpack.c.l.b16 %v807
    %v947 = vunpack.c.l.b16 %v808
    %v948 = vunpack.c.l.b16 %v809
    %v949 = vunpack.c.l.b16 %v810
    %v950 = vunpack.c.l.b16 %v811
    %v951 = vunpack.c.l.b16 %v812
    %v952 = vunpack.c.l.b16 %v813
    %v953 = vunpack.c.l.b16 %v814
    %v954 = vunpack.c.l.b16 %v815
    %v955 = vunpack.c.l.b16 %v816
    %v956 = vunpack.c.l.b16 %v817
    %v957 = vunpack.c.l.b16 %v818
    %v958 = vunpack.c.l.b16 %v819
    %v959 = vunpack.c.l.b16 %v820
    %v960 = vpack.c.b16 %v945, %v944
    %v961 = vpack.c.b16 %v947, %v946
    %v962 = vpack.c.b16 %v949, %v948
    %v963 = vpack.c.b16 %v951, %v950
    %v964 = vpack.c.b16 %v953, %v952
    %v965 = vpack.c.b16 %v955, %v954
    %v966 = vpack.c.b16 %v957, %v956
    %v967 = vpack.c.b16 %v959, %v958
    %976 = vmatprep.subr.bf16.mxu0 0
    %977 = vmatpush1.bf16.msra.mxu0 %v967
    %978 = vmatprep.subr.bf16.mxu0 0
    %979 = vmatpush1.bf16.msra.mxu0 %v966
    %980 = vmatprep.subr.bf16.mxu0 0
    %981 = vmatpush1.bf16.msra.mxu0 %v965
    %982 = vmatprep.subr.bf16.mxu0 0
    %983 = vmatpush1.bf16.msra.mxu0 %v964
    %984 = vmatprep.subr.bf16.mxu0 0
    %985 = vmatpush1.bf16.msra.mxu0 %v963
    %986 = vmatprep.subr.bf16.mxu0 0
    %987 = vmatpush1.bf16.msra.mxu0 %v962
    %988 = vmatprep.subr.bf16.mxu0 0
    %989 = vmatpush1.bf16.msra.mxu0 %v961
    %990 = vmatprep.subr.bf16.mxu0 0
    %991 = vmatpush1.bf16.msra.mxu0 %v960
    %992 = vmatprep.subr.bf16.mxu0 0
    %993 = vmatpush2.bf16.msra.mxu0 0
    %994 = vmatprep.subr.bf16.mxu0 0
    %995 = vmatpush2.bf16.msra.mxu0 0
    %996 = vmatprep.subr.bf16.mxu0 0
    %997 = vmatpush2.bf16.msra.mxu0 0
    %998 = vmatprep.subr.bf16.mxu0 0
    %999 = vmatpush2.bf16.msra.mxu0 0
    %1000 = vmatprep.subr.bf16.mxu0 0
    %1001 = vmatpush2.bf16.msra.mxu0 0
    %1002 = vmatprep.subr.bf16.mxu0 0
    %1003 = vmatpush2.bf16.msra.mxu0 0
    %1004 = vmatprep.subr.bf16.mxu0 0
    %1005 = vmatpush2.bf16.msra.mxu0 0
    %1006 = vmatprep.subr.bf16.mxu0 0
    %1007 = vmatpush2.bf16.msra.mxu0 0
    %1008 = vmatprep.mubr.bf16.mxu0 0
    %1009 = vmatmul.mubr.bf16.gmra.mxu0 %v803
    %v1010 = vpop.f32.mrf.mxu0
    %v1011 = vadd.f32 %v922, %v1010
    %v1012 = vpop.f32.mrf.mxu0
    %v1013 = vpop.f32.mrf.mxu0
    %v1014 = vadd.f32 %v925, %v1013
    %v1015 = vpop.f32.mrf.mxu0
    %1016 = vdwg.mxu0
    %v1017 = vpack.c.bf16 %v802, %v801
    %s1018 = scalar_lea.vmem %s7, 320
    %v1019 = vld [vmem:[%s1018] sm:$0xf]
    %v1020 = vld [vmem:[%s1018 + $0x4] sm:$0xf]
    %v1021 = vld [vmem:[%s1018 + $0x8] sm:$0xf]
    %v1022 = vld [vmem:[%s1018 + $0xc] sm:$0xf]
    %v1023 = vld [vmem:[%s1018 + $0x10] sm:$0xf]
    %v1024 = vld [vmem:[%s1018 + $0x14] sm:$0xf]
    %v1025 = vld [vmem:[%s1018 + $0x18] sm:$0xf]
    %v1026 = vld [vmem:[%s1018 + $0x1c] sm:$0xf]
    %v1027 = vld [vmem:[%s1018 + $0x20] sm:$0xf]
    %v1028 = vld [vmem:[%s1018 + $0x24] sm:$0xf]
    %v1029 = vld [vmem:[%s1018 + $0x28] sm:$0xf]
    %v1030 = vld [vmem:[%s1018 + $0x2c] sm:$0xf]
    %v1031 = vld [vmem:[%s1018 + $0x30] sm:$0xf]
    %v1032 = vld [vmem:[%s1018 + $0x34] sm:$0xf]
    %v1033 = vld [vmem:[%s1018 + $0x38] sm:$0xf]
    %v1034 = vld [vmem:[%s1018 + $0x3c] sm:$0xf]
    %v1051 = vunpack.c.l.b16 %v1019
    %v1052 = vunpack.c.l.b16 %v1020
    %v1053 = vunpack.c.l.b16 %v1021
    %v1054 = vunpack.c.l.b16 %v1022
    %v1055 = vunpack.c.l.b16 %v1023
    %v1056 = vunpack.c.l.b16 %v1024
    %v1057 = vunpack.c.l.b16 %v1025
    %v1058 = vunpack.c.l.b16 %v1026
    %v1059 = vunpack.c.l.b16 %v1027
    %v1060 = vunpack.c.l.b16 %v1028
    %v1061 = vunpack.c.l.b16 %v1029
    %v1062 = vunpack.c.l.b16 %v1030
    %v1063 = vunpack.c.l.b16 %v1031
    %v1064 = vunpack.c.l.b16 %v1032
    %v1065 = vunpack.c.l.b16 %v1033
    %v1066 = vunpack.c.l.b16 %v1034
    %v1067 = vpack.c.b16 %v1052, %v1051
    %v1068 = vpack.c.b16 %v1054, %v1053
    %v1069 = vpack.c.b16 %v1056, %v1055
    %v1070 = vpack.c.b16 %v1058, %v1057
    %v1071 = vpack.c.b16 %v1060, %v1059
    %v1072 = vpack.c.b16 %v1062, %v1061
    %v1073 = vpack.c.b16 %v1064, %v1063
    %v1074 = vpack.c.b16 %v1066, %v1065
    %1083 = vmatprep.subr.bf16.mxu0 0
    %1084 = vmatpush1.bf16.msra.mxu0 %v1074
    %1085 = vmatprep.subr.bf16.mxu0 0
    %1086 = vmatpush1.bf16.msra.mxu0 %v1073
    %1087 = vmatprep.subr.bf16.mxu0 0
    %1088 = vmatpush1.bf16.msra.mxu0 %v1072
    %1089 = vmatprep.subr.bf16.mxu0 0
    %1090 = vmatpush1.bf16.msra.mxu0 %v1071
    %1091 = vmatprep.subr.bf16.mxu0 0
    %1092 = vmatpush1.bf16.msra.mxu0 %v1070
    %1093 = vmatprep.subr.bf16.mxu0 0
    %1094 = vmatpush1.bf16.msra.mxu0 %v1069
    %1095 = vmatprep.subr.bf16.mxu0 0
    %1096 = vmatpush1.bf16.msra.mxu0 %v1068
    %1097 = vmatprep.subr.bf16.mxu0 0
    %1098 = vmatpush1.bf16.msra.mxu0 %v1067
    %1099 = vmatprep.subr.bf16.mxu0 0
    %1100 = vmatpush2.bf16.msra.mxu0 0
    %1101 = vmatprep.subr.bf16.mxu0 0
    %1102 = vmatpush2.bf16.msra.mxu0 0
    %1103 = vmatprep.subr.bf16.mxu0 0
    %1104 = vmatpush2.bf16.msra.mxu0 0
    %1105 = vmatprep.subr.bf16.mxu0 0
    %1106 = vmatpush2.bf16.msra.mxu0 0
    %1107 = vmatprep.subr.bf16.mxu0 0
    %1108 = vmatpush2.bf16.msra.mxu0 0
    %1109 = vmatprep.subr.bf16.mxu0 0
    %1110 = vmatpush2.bf16.msra.mxu0 0
    %1111 = vmatprep.subr.bf16.mxu0 0
    %1112 = vmatpush2.bf16.msra.mxu0 0
    %1113 = vmatprep.subr.bf16.mxu0 0
    %1114 = vmatpush2.bf16.msra.mxu0 0
    %1115 = vmatprep.mubr.bf16.mxu0 0
    %1116 = vmatmul.mubr.bf16.gmra.mxu0 %v1017
    %v1117 = vpop.f32.mrf.mxu0
    %v1118 = vadd.f32 0.0, %v1117
    %v1119 = vpop.f32.mrf.mxu0
    %v1120 = vpop.f32.mrf.mxu0
    %v1121 = vadd.f32 0.0, %v1120
    %v1122 = vpop.f32.mrf.mxu0
    %1123 = vdwg.mxu0
    %v1124 = vadd.f32 %v1011, %v1118
    %v1125 = vadd.f32 %v1014, %v1121
    %s1126 = scalar_lea.vmem [#allocation10], 1
    %v1127 = vld [vmem:[%s1126] sm:$0x1]
    %v1129 = vlaneseq
    %v1130 = vshrl.u32 %v1129, 7
    %v1131 = vsub.s32 0, %v1130
    %v1132 = vrot.slane %v1127, %v1131
    %v1134 = vadd.f32 %v1124, %v1132
    %v1135 = vadd.f32 %v1125, %v1132
    %v1136 = vpack.c.bf16 %v1135, %v1134
    %1137 = vmatprep.subr.bf16.mxu0 0
    %1138 = vmatpush1.bf16.msra.mxu0 0
    %1139 = vmatprep.subr.bf16.mxu0 0
    %1140 = vmatpush1.bf16.msra.mxu0 0
    %1141 = vmatprep.subr.bf16.mxu0 0
    %1142 = vmatpush1.bf16.msra.mxu0 0
    %1143 = vmatprep.subr.bf16.mxu0 0
    %1144 = vmatpush1.bf16.msra.mxu0 0
    %1145 = vmatprep.subr.bf16.mxu0 0
    %1146 = vmatpush1.bf16.msra.mxu0 0
    %1147 = vmatprep.subr.bf16.mxu0 0
    %1148 = vmatpush1.bf16.msra.mxu0 0
    %1149 = vmatprep.subr.bf16.mxu0 0
    %1150 = vmatpush1.bf16.msra.mxu0 0
    %1151 = vmatprep.subr.bf16.mxu0 0
    %1152 = vmatpush1.bf16.msra.mxu0 %v1136
    %1153 = vmatprep.subr.bf16.mxu0 0
    %1154 = vmatpush2.bf16.msra.mxu0 0
    %1155 = vmatprep.subr.bf16.mxu0 0
    %1156 = vmatpush2.bf16.msra.mxu0 0
    %1157 = vmatprep.subr.bf16.mxu0 0
    %1158 = vmatpush2.bf16.msra.mxu0 0
    %1159 = vmatprep.subr.bf16.mxu0 0
    %1160 = vmatpush2.bf16.msra.mxu0 0
    %1161 = vmatprep.subr.bf16.mxu0 0
    %1162 = vmatpush2.bf16.msra.mxu0 0
    %1163 = vmatprep.subr.bf16.mxu0 0
    %1164 = vmatpush2.bf16.msra.mxu0 0
    %1165 = vmatprep.subr.bf16.mxu0 0
    %1166 = vmatpush2.bf16.msra.mxu0 0
    %1167 = vmatprep.subr.bf16.mxu0 0
    %1168 = vmatpush2.bf16.msra.mxu0 0
    %1169 = vmatprep.mubr.bf16.mxu0 0
    %1170 = vmatmul.mubr.bf16.gmra.mxu0 %v631
    %v1171 = vpop.f32.mrf.mxu0
    %v1172 = vadd.f32 0.0, %v1171
    %v1173 = vpop.f32.mrf.mxu0
    %v1174 = vpop.f32.mrf.mxu0
    %v1175 = vadd.f32 0.0, %v1174
    %v1176 = vpop.f32.mrf.mxu0
    %1177 = vmatprep.mubr.bf16.mxu0 0
    %1178 = vmatmul.mubr.bf16.gmra.mxu0 %v634
    %v1179 = vpop.f32.mrf.mxu0
    %v1180 = vadd.f32 0.0, %v1179
    %v1181 = vpop.f32.mrf.mxu0
    %v1182 = vpop.f32.mrf.mxu0
    %v1183 = vadd.f32 0.0, %v1182
    %v1184 = vpop.f32.mrf.mxu0
    %1185 = vmatprep.mubr.bf16.mxu0 0
    %1186 = vmatmul.mubr.bf16.gmra.mxu0 %v637
    %v1187 = vpop.f32.mrf.mxu0
    %v1188 = vadd.f32 0.0, %v1187
    %v1189 = vpop.f32.mrf.mxu0
    %v1190 = vpop.f32.mrf.mxu0
    %v1191 = vadd.f32 0.0, %v1190
    %v1192 = vpop.f32.mrf.mxu0
    %1193 = vdwg.mxu0
    %v1194 = vadd.f32 %v696, %v1134
    %v1195 = vadd.f32 %v697, %v1135
    %v1196 = vld [vmem:[%s11] sm:$0xff]
    %v1197 = vld [vmem:[%s11 + $0x8] sm:$0xff]
    %v1198 = vld [vmem:[%s11 + $0x10] sm:$0xff]
    %v1199 = vld [vmem:[%s11 + $0x18] sm:$0xff]
    %v1200 = vld [vmem:[%s11 + $0x20] sm:$0xff]
    %v1201 = vld [vmem:[%s11 + $0x28] sm:$0xff]
    %v1202 = vadd.f32 %v1196, %v1172
    %v1203 = vadd.f32 %v1197, %v1175
    %v1204 = vadd.f32 %v1198, %v1180
    %v1205 = vadd.f32 %v1199, %v1183
    %v1206 = vadd.f32 %v1200, %v1188
    %v1207 = vadd.f32 %v1201, %v1191
    %1208 = vst [vmem:[%s11] sm:$0xff] %v1202
    %1209 = vst [vmem:[%s11 + $0x8] sm:$0xff] %v1203
    %1210 = vst [vmem:[%s11 + $0x10] sm:$0xff] %v1204
    %1211 = vst [vmem:[%s11 + $0x18] sm:$0xff] %v1205
    %1212 = vst [vmem:[%s11 + $0x20] sm:$0xff] %v1206
    %1213 = vst [vmem:[%s11 + $0x28] sm:$0xff] %v1207
    %v1214 = vld [vmem:[%s6] sm:$0xff]
    %v1215 = vld [vmem:[%s6 + $0x8] sm:$0xff]
    %v1216 = vlaneseq
    %v1217 = vshrl.u32 %v1216, 7
    %v1218 = vsub.s32 0, %v1217
    %v1219 = vrot.slane %v150, %v1218
    %v1220 = vmul.f32 %v148, %v1219
    %v1221 = vmul.f32 %v149, %v1219
    %1222 = vadd.xlane.f32.xlu0 %v1220
    %v1223 = vpop.xlane.xlu0 %1222
    %1224 = vadd.xlane.f32.xlu0 %v1221
    %v1225 = vpop.xlane.xlu0 %1224
    %s1226 = sld [smem:[#allocation13]]
    %v1227 = vstv %s1226
    %v1228 = vadd.f32 %v1223, %v1227
    %v1229 = vadd.f32 %v1225, %v1227
    %v1230 = vxor.u32 %v1228, 2147483648
    %v1231 = vxor.u32 %v1229, 2147483648
    %v1232 = vmul.f32 %v1230, 1.442695
    %v1233 = vpow.pop %v1232
    %v1234 = vmul.f32 %v1231, 1.442695
    %v1235 = vpow.pop %v1234
    %v1236 = vadd.f32 %v1233, 1.0
    %v1237 = vadd.f32 %v1235, 1.0
    %v1238 = vrcp.pop %v1236
    %v1239 = vmul.f32 1.0, %v1238
    %v1240 = vrcp.pop %v1237
    %v1241 = vmul.f32 1.0, %v1240
    %v1242 = vmul.f32 %v1239, %v148
    %v1243 = vmul.f32 %v1241, %v149
    %v1244 = vlaneseq
    %v1245 = vshrl.u32 %v1244, 7
    %v1246 = vsub.s32 1, %v1245
    %v1247 = vrot.slane %v150, %v1246
    %v1248 = vmul.f32 %v1194, %v1247
    %v1249 = vmul.f32 %v1195, %v1247
    %1250 = vadd.xlane.f32.xlu0 %v1248
    %v1251 = vpop.xlane.xlu0 %1250
    %1252 = vadd.xlane.f32.xlu0 %v1249
    %v1253 = vpop.xlane.xlu0 %1252
    %s1254 = sld [smem:[#allocation13 + $0x1]]
    %v1255 = vstv %s1254
    %v1256 = vadd.f32 %v1251, %v1255
    %v1257 = vadd.f32 %v1253, %v1255
    %v1258 = vxor.u32 %v1256, 2147483648
    %v1259 = vxor.u32 %v1257, 2147483648
    %v1260 = vmul.f32 %v1258, 1.442695
    %v1261 = vpow.pop %v1260
    %v1262 = vmul.f32 %v1259, 1.442695
    %v1263 = vpow.pop %v1262
    %v1264 = vadd.f32 %v1261, 1.0
    %v1265 = vadd.f32 %v1263, 1.0
    %v1266 = vrcp.pop %v1264
    %v1267 = vmul.f32 1.0, %v1266
    %v1268 = vrcp.pop %v1265
    %v1269 = vmul.f32 1.0, %v1268
    %v1270 = vmul.f32 %v1267, %v1194
    %v1271 = vmul.f32 %v1269, %v1195
    %v1272 = vadd.f32 %v1242, %v1270
    %v1273 = vadd.f32 %v1243, %v1271
    %v1274 = vlaneseq
    %v1275 = vshrl.u32 %v1274, 7
    %v1276 = vsub.s32 2, %v1275
    %v1277 = vrot.slane %v150, %v1276
    %v1278 = vmul.f32 %v1214, %v1277
    %v1279 = vmul.f32 %v1215, %v1277
    %1280 = vadd.xlane.f32.xlu0 %v1278
    %v1281 = vpop.xlane.xlu0 %1280
    %1282 = vadd.xlane.f32.xlu0 %v1279
    %v1283 = vpop.xlane.xlu0 %1282
    %s1284 = sld [smem:[#allocation13 + $0x2]]
    %v1285 = vstv %s1284
    %v1286 = vadd.f32 %v1281, %v1285
    %v1287 = vadd.f32 %v1283, %v1285
    %v1288 = vxor.u32 %v1286, 2147483648
    %v1289 = vxor.u32 %v1287, 2147483648
    %v1290 = vmul.f32 %v1288, 1.442695
    %v1291 = vpow.pop %v1290
    %v1292 = vmul.f32 %v1289, 1.442695
    %v1293 = vpow.pop %v1292
    %v1294 = vadd.f32 %v1291, 1.0
    %v1295 = vadd.f32 %v1293, 1.0
    %v1296 = vrcp.pop %v1294
    %v1297 = vmul.f32 1.0, %v1296
    %v1298 = vrcp.pop %v1295
    %v1299 = vmul.f32 1.0, %v1298
    %v1300 = vmul.f32 %v1297, %v1214
    %v1301 = vmul.f32 %v1299, %v1215
    %v1302 = vadd.f32 %v1272, %v1300
    %v1303 = vadd.f32 %v1273, %v1301
    %1304 = vst [vmem:[%s12] sm:$0xff] %v1302
    %1305 = vst [vmem:[%s12 + $0x8] sm:$0xff] %v1303
    // Predicated region
    $region74: #{consrec_group_forward.10} parent=1 // pred_check
      _
    $region75: #{consrec_group_forward.10} parent=1 // pred_check_branch
      %1307 = sbr.rel (0) target = $region77
    $region76: #{consrec_group_forward.10} parent=1 // pred_region
      _
    $region77: #{consrec_group_forward.10} parent=1 // pred_fallthru
      _
    // Predicated region
    $region78: #{consrec_group_forward.10} parent=1 // pred_check
      _
    $region79: #{consrec_group_forward.10} parent=1 // pred_check_branch
      %1309 = sbr.rel (0) target = $region81
    $region80: #{consrec_group_forward.10} parent=1 // pred_region
      _
    $region81: #{consrec_group_forward.10} parent=1 // pred_fallthru
      _
    // Predicated region
    $region82: #{consrec_group_forward.10} parent=1 // pred_check
      _
    $region83: #{consrec_group_forward.10} parent=1 // pred_check_branch
      %1311 = sbr.rel (0) target = $region85
    $region84: #{consrec_group_forward.10} parent=1 // pred_region
      _
    $region85: #{consrec_group_forward.10} parent=1 // pred_fallthru
      _
    // Predicated region
    $region86: #{consrec_group_forward.10} parent=1 // pred_check
      _
    $region87: #{consrec_group_forward.10} parent=1 // pred_check_branch
      %1313 = sbr.rel (0) target = $region89
    $region88: #{consrec_group_forward.10} parent=1 // pred_region
      _
    $region89: #{consrec_group_forward.10} parent=1 // pred_fallthru
      _
    %1314 = vsyncpa [#allocation3], 1
    %1315 = vsyncpa [#allocation6], 1
    %1316 = vsyncpa [#allocation9], 1
    %1317 = vsyncpa [#allocation12], 1
    %1318 = vsyncpa [#allocation4], 1

</llo_original>
